<compile_context>
chip_gen: v7x
topology: tpu7x:2x2x1
jax: 0.10.0
libtpu: 0.0.40
codegen_flags: <defaults>
</compile_context>

<pallas_src>
import functools

import jax
import jax.numpy as jnp
from jax.experimental import pallas as pl
from jax.experimental.pallas import tpu as pltpu

LANE = 128


# ------------------------------- small helpers ------------------------------
def _round_up(x, m):
    return (x + m - 1) // m * m


@functools.lru_cache(maxsize=None)
def _vmem_limit_bytes():
    # v5e/v6e have 128 MiB VMEM, v7x only 64 MiB: budget adaptively and leave
    # headroom for the compiler's own scratch.
    phys = 64 * 1024 * 1024                     # conservative (v7x) fallback
    try:
        info = pltpu.get_tpu_info()
        phys = int(getattr(info, "vmem_capacity_bytes", phys))
    except Exception:
        pass
    return int(max(min(phys - (16 << 20), 100 << 20), 32 << 20))


def _compiler_params():
    return pltpu.CompilerParams(
        dimension_semantics=("parallel", "parallel"),
        vmem_limit_bytes=_vmem_limit_bytes())


def _pick_th(n_images, ho, wo, cp):
    """Output-row tile height: largest divisor of Ho with a modest f32
    accumulator tile, preferring >= 4 total grid steps (>= 2 per TensorCore on
    v7x) so software pipelining / megacore balance stays healthy."""
    divs = [d for d in range(1, ho + 1) if ho % d == 0]
    fit = [d for d in divs if d * wo <= 1024 and d * wo * cp * 8 <= (4 << 20)]
    if not fit:
        fit = [1]
    pref = [d for d in fit if n_images * (ho // d) >= 4]
    return max(pref) if pref else max(fit)


def _phase_split(x, stride, pad):
    """Zero-pad spatially and split into stride*stride phases so the conv
    kernels only need contiguous (un-strided) shifted reads.

    x: (N, H, W, C) -> (N, s*s, Hq, Wq, C), plus the conv output size (Ho, Wo).
    Tap (kh, kw) of the stride-s conv lives in phase (kh%s)*s + (kw%s) at the
    static offset (kh//s, kw//s)."""
    n, h, w, c = x.shape
    s = stride
    ho = (h + 2 * pad - 3) // s + 1
    wo = (w + 2 * pad - 3) // s + 1
    hq = ho + 2 // s
    wq = wo + 2 // s
    hp, wp = s * hq, s * wq
    xp = jnp.pad(x, ((0, 0),
                     (pad, max(hp - h - pad, 0)),
                     (pad, max(wp - w - pad, 0)),
                     (0, 0)))[:, :hp, :wp, :]
    if s == 1:
        phases = xp[:, None]
    else:
        phases = jnp.stack(
            [xp[:, a::s, b::s, :] for a in range(s) for b in range(s)], axis=1)
    return phases, ho, wo


def _bn_fold(bn, eps=1e-5):
    gamma, beta, mean, var = bn
    scale = gamma * jax.lax.rsqrt(var + eps)
    shift = beta - mean * scale
    return scale, shift


def _fold_conv3x3(w_oihw, bn, k_pad, cp):
    """(Cout,Cin,3,3) -> (9, k_pad, cp) bf16 taps with BN scale folded in,
    plus the (1, cp) f32 shift.  K (input channels) and Cout are zero-padded
    so padded activation channels / output lanes stay exactly zero."""
    scale, shift = _bn_fold(bn)
    cout, cin = w_oihw.shape[:2]
    w = w_oihw * scale[:, None, None, None]
    w = jnp.transpose(w, (2, 3, 1, 0)).reshape(9, cin, cout)
    w = jnp.pad(w, ((0, 0), (0, k_pad - cin), (0, cp - cout)))
    shift = jnp.pad(shift, (0, cp - cout)).reshape(1, cp)
    return w.astype(jnp.bfloat16), shift.astype(jnp.float32)


def _fold_conv1x1(w_oihw, bn, cp):
    scale, shift = _bn_fold(bn)
    cout, cin = w_oihw.shape[:2]
    w = (w_oihw[:, :, 0, 0] * scale[:, None]).T          # (Cin, Cout)
    w = jnp.pad(w, ((0, 0), (0, cp - cout)))
    shift = jnp.pad(shift, (0, cp - cout)).reshape(1, cp)
    return w.astype(jnp.bfloat16), shift.astype(jnp.float32)


# ------------------------------- Pallas kernels -----------------------------
def _conv_taps(x_ref, w_ref, *, stride, th, wo, row_base):
    """Accumulate the 9 (kh, kw) taps of a 3x3 conv as MXU dots.

    x_ref: (stride*stride, Hq, Wq, C) phase-split, zero-padded activation
           (VMEM-resident for the whole image; only contiguous reads here).
    w_ref: (9, C, Cp) bf16 weight taps (BN scale folded in).
    Returns a (th*wo, Cp) f32 accumulator.
    """
    s = stride
    cp = w_ref.shape[-1]
    acc = jnp.zeros((th * wo, cp), jnp.float32)
    for kh in range(3):
        for kw in range(3):
            phase = (kh % s) * s + (kw % s)
            slab = x_ref[phase,
                         pl.ds(row_base + kh // s, th),
                         pl.ds(kw // s, wo), :]
            acc = acc + jnp.dot(slab.reshape(th * wo, slab.shape[-1]),
                                w_ref[kh * 3 + kw],
                                preferred_element_type=jnp.float32)
    return acc


def _conv3x3_bn_kernel(x_ref, w_ref, shift_ref, o_ref, *, stride, relu, th, wo):
    # out = [relu]( conv3x3(x) * bn_scale + bn_shift )
    row_base = pl.multiple_of(pl.program_id(1) * th, th)
    y = _conv_taps(x_ref, w_ref, stride=stride, th=th, wo=wo, row_base=row_base)
    y = y + shift_ref[...]
    if relu:
        y = jnp.maximum(y, 0.0)
    o_ref[...] = y.reshape(th, wo, -1).astype(o_ref.dtype)


def _conv3x3_bn_identity_kernel(x_ref, w_ref, shift_ref, sc_ref, o_ref, *, th, wo):
    # out = relu( conv3x3(h) + shift + x )  -- bf16 identity shortcut, VPU add.
    row_base = pl.multiple_of(pl.program_id(1) * th, th)
    y = _conv_taps(x_ref, w_ref, stride=1, th=th, wo=wo, row_base=row_base)
    y = (y + shift_ref[...]).reshape(th, wo, -1)
    y = y + sc_ref[...].astype(jnp.float32)
    o_ref[...] = jnp.maximum(y, 0.0).astype(o_ref.dtype)


def _conv3x3_bn_proj_kernel(x_ref, w_ref, shift_ref, xs_ref, ws_ref, o_ref,
                            *, stride, th, wo):
    # out = relu( conv3x3(h) + conv1x1(x) + (shift2 + shift_s) )
    row_base = pl.multiple_of(pl.program_id(1) * th, th)
    y = _conv_taps(x_ref, w_ref, stride=stride, th=th, wo=wo, row_base=row_base)
    cin = xs_ref.shape[-1]
    sc = jnp.dot(xs_ref[...].reshape(th * wo, cin), ws_ref[...],
                 preferred_element_type=jnp.float32)
    y = y + sc + shift_ref[...]
    o_ref[...] = jnp.maximum(y, 0.0).reshape(th, wo, -1).astype(o_ref.dtype)


# --------------------------- pallas_call wrappers ----------------------------
def conv3x3_bn(x_nhwc, w_oihw, bn, *, stride=1, relu=True, out_dtype=jnp.bfloat16):
    """Fused 3x3 conv (pad=1) + BN (+ ReLU).  Returns (N, Ho, Wo, Cp) with the
    channel dim zero-padded up to a lane (128) multiple."""
    n = x_nhwc.shape[0]
    kin = x_nhwc.shape[-1]
    cout = w_oihw.shape[0]
    cp = _round_up(cout, LANE)
    phases, ho, wo = _phase_split(x_nhwc.astype(jnp.bfloat16), stride, 1)
    wt, shift = _fold_conv3x3(w_oihw, bn, kin, cp)
    th = _pick_th(n, ho, wo, cp)
    assert ho % th == 0
    ss, hq, wq = phases.shape[1:4]

    kern = functools.partial(_conv3x3_bn_kernel, stride=stride, relu=relu,
                             th=th, wo=wo)
    return pl.pallas_call(
        kern,
        out_shape=jax.ShapeDtypeStruct((n, ho, wo, cp), out_dtype),
        grid=(n, ho // th),
        in_specs=[
            pl.BlockSpec((None, ss, hq, wq, kin), lambda i, t: (i, 0, 0, 0, 0)),
            pl.BlockSpec((9, kin, cp), lambda i, t: (0, 0, 0)),
            pl.BlockSpec((1, cp), lambda i, t: (0, 0)),
        ],
        out_specs=pl.BlockSpec((None, th, wo, cp), lambda i, t: (i, t, 0, 0)),
        compiler_params=_compiler_params(),
    )(phases, wt, shift)


def conv3x3_bn_add_relu(h_nhwc, w_oihw, bn, x_sc_nhwc, *, out_dtype=jnp.bfloat16):
    """relu( conv3x3(h; stride 1) + BN + x ) -- identity shortcut kept bf16
    and upcast inside the kernel (implicit contract: stride==1, Cin==Cout)."""
    n = h_nhwc.shape[0]
    kin = h_nhwc.shape[-1]
    cout = w_oihw.shape[0]
    cp = _round_up(cout, LANE)
    phases, ho, wo = _phase_split(h_nhwc, 1, 1)
    wt, shift = _fold_conv3x3(w_oihw, bn, kin, cp)
    th = _pick_th(n, ho, wo, cp)
    assert ho % th == 0
    ss, hq, wq = phases.shape[1:4]

    xs = x_sc_nhwc.astype(jnp.bfloat16)
    if xs.shape[-1] != cp:                        # lane-pad bf16 shortcut tile
        xs = jnp.pad(xs, ((0, 0), (0, 0), (0, 0), (0, cp - xs.shape[-1])))

    kern = functools.partial(_conv3x3_bn_identity_kernel, th=th, wo=wo)
    return pl.pallas_call(
        kern,
        out_shape=jax.ShapeDtypeStruct((n, ho, wo, cp), out_dtype),
        grid=(n, ho // th),
        in_specs=[
            pl.BlockSpec((None, ss, hq, wq, kin), lambda i, t: (i, 0, 0, 0, 0)),
            pl.BlockSpec((9, kin, cp), lambda i, t: (0, 0, 0)),
            pl.BlockSpec((1, cp), lambda i, t: (0, 0)),
            pl.BlockSpec((None, th, wo, cp), lambda i, t: (i, t, 0, 0)),
        ],
        out_specs=pl.BlockSpec((None, th, wo, cp), lambda i, t: (i, t, 0, 0)),
        compiler_params=_compiler_params(),
    )(phases, wt, shift, xs)


def conv3x3_bn_proj_add_relu(h_nhwc, w_oihw, bn, x_nhwc, ws_oihw, bns,
                             *, stride, out_dtype=jnp.bfloat16):
    """relu( conv3x3(h; stride) + BN2 + conv1x1(x; stride) + BNs ) with the
    two per-channel shifts pre-summed into one accumulator add."""
    n = h_nhwc.shape[0]
    kin = h_nhwc.shape[-1]
    cin = x_nhwc.shape[-1]
    cout = w_oihw.shape[0]
    cp = _round_up(cout, LANE)
    phases, ho, wo = _phase_split(h_nhwc, stride, 1)
    wt, shift2 = _fold_conv3x3(w_oihw, bn, kin, cp)
    wsm, shift_s = _fold_conv1x1(ws_oihw, bns, cp)
    shift = shift2 + shift_s                      # single pre-summed shift
    th = _pick_th(n, ho, wo, cp)
    assert ho % th == 0
    ss, hq, wq = phases.shape[1:4]

    # 1x1 / stride-s shortcut operand: exactly the pixels it needs, in bf16.
    xs = x_nhwc[:, 0:ho * stride:stride, 0:wo * stride:stride, :].astype(jnp.bfloat16)

    kern = functools.partial(_conv3x3_bn_proj_kernel, stride=stride, th=th, wo=wo)
    return pl.pallas_call(
        kern,
        out_shape=jax.ShapeDtypeStruct((n, ho, wo, cp), out_dtype),
        grid=(n, ho // th),
        in_specs=[
            pl.BlockSpec((None, ss, hq, wq, kin), lambda i, t: (i, 0, 0, 0, 0)),
            pl.BlockSpec((9, kin, cp), lambda i, t: (0, 0, 0)),
            pl.BlockSpec((1, cp), lambda i, t: (0, 0)),
            pl.BlockSpec((None, th, wo, cin), lambda i, t: (i, t, 0, 0)),
            pl.BlockSpec((cin, cp), lambda i, t: (0, 0)),
        ],
        out_specs=pl.BlockSpec((None, th, wo, cp), lambda i, t: (i, t, 0, 0)),
        compiler_params=_compiler_params(),
    )(phases, wt, shift, xs, wsm)


# --------------------------------- forward ----------------------------------
def res_block_forward_nhwc(x_nhwc, params, stride):
    """Block forward in NHWC bf16 with channel dims zero-padded to a lane
    multiple (what a chained block would consume directly)."""
    x = x_nhwc.astype(jnp.bfloat16)
    # left: conv3x3(s=1) + BN1 + ReLU (BN scale folded into the weights).
    h = conv3x3_bn(x, params['w1'], params['bn1'], stride=1, relu=True)
    if 'ws' in params:
        # left conv3x3(stride)+BN2 fused with projection shortcut + add + relu
        return conv3x3_bn_proj_add_relu(h, params['w2'], params['bn2'],
                                        x, params['ws'], params['bns'],
                                        stride=stride)
    # identity shortcut (stride == 1, Cin == Cout): plain in-kernel VPU add.
    return conv3x3_bn_add_relu(h, params['w2'], params['bn2'], x)


def res_block_forward(x_nchw, params, stride):
    """NCHW / fp32 model-boundary wrapper: layout + dtype conversion and the
    channel un-padding happen exactly once, here."""
    cout = params['w2'].shape[0]
    x = jnp.transpose(x_nchw, (0, 2, 3, 1))                  # NCHW -> NHWC
    out = res_block_forward_nhwc(x, params, stride)
    out = out[..., :cout].astype(jnp.float32)
    return jnp.transpose(out, (0, 3, 1, 2))                  # NHWC -> NCHW


# ------------------------------ parameter init -------------------------------
def init_params(key, in_channels, out_channels, stride):
    ks = jax.random.split(key, 6)

    def conv_w(k, cout, cin, kh, kw):
        fan_in = cin * kh * kw
        return jax.random.normal(k, (cout, cin, kh, kw), jnp.float32) / jnp.sqrt(fan_in)

    def bn(k, c):
        k1, k2, k3, k4 = jax.random.split(k, 4)
        gamma = 1.0 + 0.1 * jax.random.normal(k1, (c,), jnp.float32)
        beta = 0.1 * jax.random.normal(k2, (c,), jnp.float32)
        mean = 0.1 * jax.random.normal(k3, (c,), jnp.float32)
        var = 0.5 + jnp.abs(jax.random.normal(k4, (c,), jnp.float32))
        return (gamma, beta, mean, var)

    p = {
        'w1': conv_w(ks[0], in_channels, in_channels, 3, 3),
        'bn1': bn(ks[1], in_channels),
        'w2': conv_w(ks[2], out_channels, in_channels, 3, 3),
        'bn2': bn(ks[3], out_channels),
    }
    if stride != 1 or in_channels != out_channels:
        p['ws'] = conv_w(ks[4], out_channels, in_channels, 1, 1)
        p['bns'] = bn(ks[5], out_channels)
    return p


# ----------------------------- pure-JAX reference ----------------------------
def res_block_ref(x_nchw, params, stride):
    x = x_nchw.astype(jnp.float32)

    def conv(z, w, s, pad):
        return jax.lax.conv_general_dilated(
            z, w, (s, s), [(pad, pad), (pad, pad)],
            dimension_numbers=('NCHW', 'OIHW', 'NCHW'))

    def bn(z, p, eps=1e-5):
        g, b, m, v = (t.reshape(1, -1, 1, 1) for t in p)
        return (z - m) / jnp.sqrt(v + eps) * g + b

    h = jax.nn.relu(bn(conv(x, params['w1'], 1, 1), params['bn1']))
    left = bn(conv(h, params['w2'], stride, 1), params['bn2'])
    if 'ws' in params:
        sc = bn(conv(x, params['ws'], stride, 0), params['bns'])
    else:
        sc = x
    return jax.nn.relu(left + sc)


if __name__ == "__main__":
    key = jax.random.PRNGKey(0)
    k1, k2, k3, k4 = jax.random.split(key, 4)
    run = jax.jit(res_block_forward, static_argnums=2)

    # Case 1: projection shortcut (stride=2, channel expansion 4 -> 8)
    x1 = jax.random.normal(k1, (2, 4, 16, 16), jnp.float32)   # NCHW
    params1 = init_params(k2, 4, 8, 2)
    out1 = jax.block_until_ready(run(x1, params1, 2))
    assert out1.shape == (2, 8, 8, 8), out1.shape
    ref1 = res_block_ref(x1, params1, 2)
    assert jnp.allclose(out1, ref1, atol=3e-2, rtol=3e-2), float(
        jnp.max(jnp.abs(out1 - ref1)))

    # Case 2: identity shortcut (stride=1, channels 8 -> 8) -> VPU-add path
    x2 = jax.random.normal(k3, (2, 8, 16, 16), jnp.float32)
    params2 = init_params(k4, 8, 8, 1)
    out2 = jax.block_until_ready(run(x2, params2, 1))
    assert out2.shape == (2, 8, 16, 16), out2.shape
    ref2 = res_block_ref(x2, params2, 1)
    assert jnp.allclose(out2, ref2, atol=3e-2, rtol=3e-2), float(
        jnp.max(jnp.abs(out2 - ref2)))

    print("KERNEL_OK")
</pallas_src>

<mosaic_0001>
module attributes {stable_mosaic.version = 11 : i64} {
  func.func @_conv3x3_bn_kernel(%arg0: i32, %arg1: i32, %arg2: memref<1x1x18x18x4xbf16, #tpu.memory_space<vmem>>, %arg3: memref<9x4x128xbf16, #tpu.memory_space<vmem>>, %arg4: memref<1x128xf32, #tpu.memory_space<vmem>>, %arg5: memref<1x8x16x128xbf16, #tpu.memory_space<vmem>>) attributes {dimension_semantics = [#tpu.dimension_semantics<parallel>, #tpu.dimension_semantics<parallel>], iteration_bounds = array<i64: 2, 2>, scalar_prefetch = 0 : i64, scratch_operands = 0 : i64, tpu.core_type = #tpu.core_type<tc>, window_params = [{transform_indices = @transform_0, window_bounds = array<i64: 1, 1, 18, 18, 4>}, {pipeline_mode = #tpu.pipeline_mode<synchronous>, transform_indices = @transform_1, window_bounds = array<i64: 9, 4, 128>}, {pipeline_mode = #tpu.pipeline_mode<synchronous>, transform_indices = @transform_2, window_bounds = array<i64: 1, 128>}, {transform_indices = @transform_3, window_bounds = array<i64: 1, 8, 16, 128>}]} {
    %c8_i32 = arith.constant 8 : i32
    %0 = arith.muli %arg1, %c8_i32 : i32
    %1 = tpu.assume_multiple %0, 8 : i32
    %cst = arith.constant 0.000000e+00 : f32
    %2 = vector.broadcast %cst : f32 to vector<128x128xf32>
    %c0_i32 = arith.constant 0 : i32
    %3 = arith.addi %1, %c0_i32 : i32
    %c0 = arith.constant 0 : index
    %c0_0 = arith.constant 0 : index
    %4 = arith.index_cast %3 : i32 to index
    %c0_1 = arith.constant 0 : index
    %c0_2 = arith.constant 0 : index
    %5 = vector.load %arg2[%c0, %c0_0, %4, %c0_1, %c0_2] : memref<1x1x18x18x4xbf16, #tpu.memory_space<vmem>>, vector<1x1x8x16x4xbf16>
    %6 = vector.shape_cast %5 : vector<1x1x8x16x4xbf16> to vector<8x16x4xbf16>
    %7 = vector.shape_cast %6 : vector<8x16x4xbf16> to vector<128x4xbf16>
    %c0_3 = arith.constant 0 : index
    %c0_4 = arith.constant 0 : index
    %c0_5 = arith.constant 0 : index
    %8 = vector.load %arg3[%c0_3, %c0_4, %c0_5] : memref<9x4x128xbf16, #tpu.memory_space<vmem>>, vector<1x4x128xbf16>
    %9 = vector.shape_cast %8 : vector<1x4x128xbf16> to vector<4x128xbf16>
    %cst_6 = arith.constant dense<0.000000e+00> : vector<128x128xf32>
    %10 = tpu.matmul %7, %9, %cst_6 {dimension_numbers = #tpu.dot_dimension_numbers<[1], [0], [0], [1], [0, 0, 1, 1], [], []>} : vector<128x4xbf16>, vector<4x128xbf16>, vector<128x128xf32> -> vector<128x128xf32>
    %11 = arith.addf %2, %10 : vector<128x128xf32>
    %c0_i32_7 = arith.constant 0 : i32
    %12 = arith.addi %1, %c0_i32_7 : i32
    %c0_8 = arith.constant 0 : index
    %c0_9 = arith.constant 0 : index
    %13 = arith.index_cast %12 : i32 to index
    %c1 = arith.constant 1 : index
    %c0_10 = arith.constant 0 : index
    %14 = vector.load %arg2[%c0_8, %c0_9, %13, %c1, %c0_10] : memref<1x1x18x18x4xbf16, #tpu.memory_space<vmem>>, vector<1x1x8x16x4xbf16>
    %15 = vector.shape_cast %14 : vector<1x1x8x16x4xbf16> to vector<8x16x4xbf16>
    %16 = vector.shape_cast %15 : vector<8x16x4xbf16> to vector<128x4xbf16>
    %c1_11 = arith.constant 1 : index
    %c0_12 = arith.constant 0 : index
    %c0_13 = arith.constant 0 : index
    %17 = vector.load %arg3[%c1_11, %c0_12, %c0_13] : memref<9x4x128xbf16, #tpu.memory_space<vmem>>, vector<1x4x128xbf16>
    %18 = vector.shape_cast %17 : vector<1x4x128xbf16> to vector<4x128xbf16>
    %cst_14 = arith.constant dense<0.000000e+00> : vector<128x128xf32>
    %19 = tpu.matmul %16, %18, %cst_14 {dimension_numbers = #tpu.dot_dimension_numbers<[1], [0], [0], [1], [0, 0, 1, 1], [], []>} : vector<128x4xbf16>, vector<4x128xbf16>, vector<128x128xf32> -> vector<128x128xf32>
    %20 = arith.addf %11, %19 : vector<128x128xf32>
    %c0_i32_15 = arith.constant 0 : i32
    %21 = arith.addi %1, %c0_i32_15 : i32
    %c0_16 = arith.constant 0 : index
    %c0_17 = arith.constant 0 : index
    %22 = arith.index_cast %21 : i32 to index
    %c2 = arith.constant 2 : index
    %c0_18 = arith.constant 0 : index
    %23 = vector.load %arg2[%c0_16, %c0_17, %22, %c2, %c0_18] : memref<1x1x18x18x4xbf16, #tpu.memory_space<vmem>>, vector<1x1x8x16x4xbf16>
    %24 = vector.shape_cast %23 : vector<1x1x8x16x4xbf16> to vector<8x16x4xbf16>
    %25 = vector.shape_cast %24 : vector<8x16x4xbf16> to vector<128x4xbf16>
    %c2_19 = arith.constant 2 : index
    %c0_20 = arith.constant 0 : index
    %c0_21 = arith.constant 0 : index
    %26 = vector.load %arg3[%c2_19, %c0_20, %c0_21] : memref<9x4x128xbf16, #tpu.memory_space<vmem>>, vector<1x4x128xbf16>
    %27 = vector.shape_cast %26 : vector<1x4x128xbf16> to vector<4x128xbf16>
    %cst_22 = arith.constant dense<0.000000e+00> : vector<128x128xf32>
    %28 = tpu.matmul %25, %27, %cst_22 {dimension_numbers = #tpu.dot_dimension_numbers<[1], [0], [0], [1], [0, 0, 1, 1], [], []>} : vector<128x4xbf16>, vector<4x128xbf16>, vector<128x128xf32> -> vector<128x128xf32>
    %29 = arith.addf %20, %28 : vector<128x128xf32>
    %c1_i32 = arith.constant 1 : i32
    %30 = arith.addi %1, %c1_i32 : i32
    %c0_23 = arith.constant 0 : index
    %c0_24 = arith.constant 0 : index
    %31 = arith.index_cast %30 : i32 to index
    %c0_25 = arith.constant 0 : index
    %c0_26 = arith.constant 0 : index
    %32 = vector.load %arg2[%c0_23, %c0_24, %31, %c0_25, %c0_26] : memref<1x1x18x18x4xbf16, #tpu.memory_space<vmem>>, vector<1x1x8x16x4xbf16>
    %33 = vector.shape_cast %32 : vector<1x1x8x16x4xbf16> to vector<8x16x4xbf16>
    %34 = vector.shape_cast %33 : vector<8x16x4xbf16> to vector<128x4xbf16>
    %c3 = arith.constant 3 : index
    %c0_27 = arith.constant 0 : index
    %c0_28 = arith.constant 0 : index
    %35 = vector.load %arg3[%c3, %c0_27, %c0_28] : memref<9x4x128xbf16, #tpu.memory_space<vmem>>, vector<1x4x128xbf16>
    %36 = vector.shape_cast %35 : vector<1x4x128xbf16> to vector<4x128xbf16>
    %cst_29 = arith.constant dense<0.000000e+00> : vector<128x128xf32>
    %37 = tpu.matmul %34, %36, %cst_29 {dimension_numbers = #tpu.dot_dimension_numbers<[1], [0], [0], [1], [0, 0, 1, 1], [], []>} : vector<128x4xbf16>, vector<4x128xbf16>, vector<128x128xf32> -> vector<128x128xf32>
    %38 = arith.addf %29, %37 : vector<128x128xf32>
    %c1_i32_30 = arith.constant 1 : i32
    %39 = arith.addi %1, %c1_i32_30 : i32
    %c0_31 = arith.constant 0 : index
    %c0_32 = arith.constant 0 : index
    %40 = arith.index_cast %39 : i32 to index
    %c1_33 = arith.constant 1 : index
    %c0_34 = arith.constant 0 : index
    %41 = vector.load %arg2[%c0_31, %c0_32, %40, %c1_33, %c0_34] : memref<1x1x18x18x4xbf16, #tpu.memory_space<vmem>>, vector<1x1x8x16x4xbf16>
    %42 = vector.shape_cast %41 : vector<1x1x8x16x4xbf16> to vector<8x16x4xbf16>
    %43 = vector.shape_cast %42 : vector<8x16x4xbf16> to vector<128x4xbf16>
    %c4 = arith.constant 4 : index
    %c0_35 = arith.constant 0 : index
    %c0_36 = arith.constant 0 : index
    %44 = vector.load %arg3[%c4, %c0_35, %c0_36] : memref<9x4x128xbf16, #tpu.memory_space<vmem>>, vector<1x4x128xbf16>
    %45 = vector.shape_cast %44 : vector<1x4x128xbf16> to vector<4x128xbf16>
    %cst_37 = arith.constant dense<0.000000e+00> : vector<128x128xf32>
    %46 = tpu.matmul %43, %45, %cst_37 {dimension_numbers = #tpu.dot_dimension_numbers<[1], [0], [0], [1], [0, 0, 1, 1], [], []>} : vector<128x4xbf16>, vector<4x128xbf16>, vector<128x128xf32> -> vector<128x128xf32>
    %47 = arith.addf %38, %46 : vector<128x128xf32>
    %c1_i32_38 = arith.constant 1 : i32
    %48 = arith.addi %1, %c1_i32_38 : i32
    %c0_39 = arith.constant 0 : index
    %c0_40 = arith.constant 0 : index
    %49 = arith.index_cast %48 : i32 to index
    %c2_41 = arith.constant 2 : index
    %c0_42 = arith.constant 0 : index
    %50 = vector.load %arg2[%c0_39, %c0_40, %49, %c2_41, %c0_42] : memref<1x1x18x18x4xbf16, #tpu.memory_space<vmem>>, vector<1x1x8x16x4xbf16>
    %51 = vector.shape_cast %50 : vector<1x1x8x16x4xbf16> to vector<8x16x4xbf16>
    %52 = vector.shape_cast %51 : vector<8x16x4xbf16> to vector<128x4xbf16>
    %c5 = arith.constant 5 : index
    %c0_43 = arith.constant 0 : index
    %c0_44 = arith.constant 0 : index
    %53 = vector.load %arg3[%c5, %c0_43, %c0_44] : memref<9x4x128xbf16, #tpu.memory_space<vmem>>, vector<1x4x128xbf16>
    %54 = vector.shape_cast %53 : vector<1x4x128xbf16> to vector<4x128xbf16>
    %cst_45 = arith.constant dense<0.000000e+00> : vector<128x128xf32>
    %55 = tpu.matmul %52, %54, %cst_45 {dimension_numbers = #tpu.dot_dimension_numbers<[1], [0], [0], [1], [0, 0, 1, 1], [], []>} : vector<128x4xbf16>, vector<4x128xbf16>, vector<128x128xf32> -> vector<128x128xf32>
    %56 = arith.addf %47, %55 : vector<128x128xf32>
    %c2_i32 = arith.constant 2 : i32
    %57 = arith.addi %1, %c2_i32 : i32
    %c0_46 = arith.constant 0 : index
    %c0_47 = arith.constant 0 : index
    %58 = arith.index_cast %57 : i32 to index
    %c0_48 = arith.constant 0 : index
    %c0_49 = arith.constant 0 : index
    %59 = vector.load %arg2[%c0_46, %c0_47, %58, %c0_48, %c0_49] : memref<1x1x18x18x4xbf16, #tpu.memory_space<vmem>>, vector<1x1x8x16x4xbf16>
    %60 = vector.shape_cast %59 : vector<1x1x8x16x4xbf16> to vector<8x16x4xbf16>
    %61 = vector.shape_cast %60 : vector<8x16x4xbf16> to vector<128x4xbf16>
    %c6 = arith.constant 6 : index
    %c0_50 = arith.constant 0 : index
    %c0_51 = arith.constant 0 : index
    %62 = vector.load %arg3[%c6, %c0_50, %c0_51] : memref<9x4x128xbf16, #tpu.memory_space<vmem>>, vector<1x4x128xbf16>
    %63 = vector.shape_cast %62 : vector<1x4x128xbf16> to vector<4x128xbf16>
    %cst_52 = arith.constant dense<0.000000e+00> : vector<128x128xf32>
    %64 = tpu.matmul %61, %63, %cst_52 {dimension_numbers = #tpu.dot_dimension_numbers<[1], [0], [0], [1], [0, 0, 1, 1], [], []>} : vector<128x4xbf16>, vector<4x128xbf16>, vector<128x128xf32> -> vector<128x128xf32>
    %65 = arith.addf %56, %64 : vector<128x128xf32>
    %c2_i32_53 = arith.constant 2 : i32
    %66 = arith.addi %1, %c2_i32_53 : i32
    %c0_54 = arith.constant 0 : index
    %c0_55 = arith.constant 0 : index
    %67 = arith.index_cast %66 : i32 to index
    %c1_56 = arith.constant 1 : index
    %c0_57 = arith.constant 0 : index
    %68 = vector.load %arg2[%c0_54, %c0_55, %67, %c1_56, %c0_57] : memref<1x1x18x18x4xbf16, #tpu.memory_space<vmem>>, vector<1x1x8x16x4xbf16>
    %69 = vector.shape_cast %68 : vector<1x1x8x16x4xbf16> to vector<8x16x4xbf16>
    %70 = vector.shape_cast %69 : vector<8x16x4xbf16> to vector<128x4xbf16>
    %c7 = arith.constant 7 : index
    %c0_58 = arith.constant 0 : index
    %c0_59 = arith.constant 0 : index
    %71 = vector.load %arg3[%c7, %c0_58, %c0_59] : memref<9x4x128xbf16, #tpu.memory_space<vmem>>, vector<1x4x128xbf16>
    %72 = vector.shape_cast %71 : vector<1x4x128xbf16> to vector<4x128xbf16>
    %cst_60 = arith.constant dense<0.000000e+00> : vector<128x128xf32>
    %73 = tpu.matmul %70, %72, %cst_60 {dimension_numbers = #tpu.dot_dimension_numbers<[1], [0], [0], [1], [0, 0, 1, 1], [], []>} : vector<128x4xbf16>, vector<4x128xbf16>, vector<128x128xf32> -> vector<128x128xf32>
    %74 = arith.addf %65, %73 : vector<128x128xf32>
    %c2_i32_61 = arith.constant 2 : i32
    %75 = arith.addi %1, %c2_i32_61 : i32
    %c0_62 = arith.constant 0 : index
    %c0_63 = arith.constant 0 : index
    %76 = arith.index_cast %75 : i32 to index
    %c2_64 = arith.constant 2 : index
    %c0_65 = arith.constant 0 : index
    %77 = vector.load %arg2[%c0_62, %c0_63, %76, %c2_64, %c0_65] : memref<1x1x18x18x4xbf16, #tpu.memory_space<vmem>>, vector<1x1x8x16x4xbf16>
    %78 = vector.shape_cast %77 : vector<1x1x8x16x4xbf16> to vector<8x16x4xbf16>
    %79 = vector.shape_cast %78 : vector<8x16x4xbf16> to vector<128x4xbf16>
    %c8 = arith.constant 8 : index
    %c0_66 = arith.constant 0 : index
    %c0_67 = arith.constant 0 : index
    %80 = vector.load %arg3[%c8, %c0_66, %c0_67] : memref<9x4x128xbf16, #tpu.memory_space<vmem>>, vector<1x4x128xbf16>
    %81 = vector.shape_cast %80 : vector<1x4x128xbf16> to vector<4x128xbf16>
    %cst_68 = arith.constant dense<0.000000e+00> : vector<128x128xf32>
    %82 = tpu.matmul %79, %81, %cst_68 {dimension_numbers = #tpu.dot_dimension_numbers<[1], [0], [0], [1], [0, 0, 1, 1], [], []>} : vector<128x4xbf16>, vector<4x128xbf16>, vector<128x128xf32> -> vector<128x128xf32>
    %83 = arith.addf %74, %82 : vector<128x128xf32>
    %c0_69 = arith.constant 0 : index
    %c0_70 = arith.constant 0 : index
    %84 = vector.load %arg4[%c0_69, %c0_70] : memref<1x128xf32, #tpu.memory_space<vmem>>, vector<1x128xf32>
    %85 = vector.broadcast %84 : vector<1x128xf32> to vector<128x128xf32>
    %86 = arith.addf %83, %85 : vector<128x128xf32>
    %cst_71 = arith.constant 0.000000e+00 : f32
    %87 = vector.broadcast %cst_71 : f32 to vector<128x128xf32>
    %88 = arith.maximumf %86, %87 : vector<128x128xf32>
    %89 = vector.shape_cast %88 : vector<128x128xf32> to vector<8x16x128xf32>
    %90 = arith.truncf %89 : vector<8x16x128xf32> to vector<8x16x128xbf16>
    %c0_72 = arith.constant 0 : index
    %c0_73 = arith.constant 0 : index
    %c0_74 = arith.constant 0 : index
    %c0_75 = arith.constant 0 : index
    %91 = vector.load %arg5[%c0_72, %c0_73, %c0_74, %c0_75] : memref<1x8x16x128xbf16, #tpu.memory_space<vmem>>, vector<1x8x16x128xbf16>
    %92 = vector.shape_cast %91 : vector<1x8x16x128xbf16> to vector<8x16x128xbf16>
    %93 = vector.shape_cast %90 : vector<8x16x128xbf16> to vector<1x8x16x128xbf16>
    tpu.vector_store %arg5[%c0_72, %c0_73, %c0_74, %c0_75], %93 {strides = array<i32>} : memref<1x8x16x128xbf16, #tpu.memory_space<vmem>>, vector<1x8x16x128xbf16>,
    return
  }
  func.func @transform_0(%arg0: i32, %arg1: i32) -> (i32, i32, i32, i32, i32) {
    %c0_i32 = arith.constant 0 : i32
    %c0_i32_0 = arith.constant 0 : i32
    %c0_i32_1 = arith.constant 0 : i32
    %c0_i32_2 = arith.constant 0 : i32
    %c0_i32_3 = arith.constant 0 : i32
    return %arg0, %c0_i32, %c0_i32_0, %c0_i32_1, %c0_i32_2 : i32, i32, i32, i32, i32
  }
  func.func @transform_1(%arg0: i32, %arg1: i32) -> (i32, i32, i32) {
    %c0_i32 = arith.constant 0 : i32
    %c0_i32_0 = arith.constant 0 : i32
    %c0_i32_1 = arith.constant 0 : i32
    %c0_i32_2 = arith.constant 0 : i32
    return %c0_i32, %c0_i32_0, %c0_i32_1 : i32, i32, i32
  }
  func.func @transform_2(%arg0: i32, %arg1: i32) -> (i32, i32) {
    %c0_i32 = arith.constant 0 : i32
    %c0_i32_0 = arith.constant 0 : i32
    %c0_i32_1 = arith.constant 0 : i32
    return %c0_i32, %c0_i32_0 : i32, i32
  }
  func.func @transform_3(%arg0: i32, %arg1: i32) -> (i32, i32, i32, i32) {
    %c0_i32 = arith.constant 0 : i32
    %c0_i32_0 = arith.constant 0 : i32
    %c0_i32_1 = arith.constant 0 : i32
    return %arg0, %arg1, %c0_i32, %c0_i32_0 : i32, i32, i32, i32
  }
}

module attributes {stable_mosaic.version = 11 : i64} {
  func.func @_conv3x3_bn_proj_kernel(%arg0: i32, %arg1: i32, %arg2: memref<1x4x9x9x128xbf16, #tpu.memory_space<vmem>>, %arg3: memref<9x128x128xbf16, #tpu.memory_space<vmem>>, %arg4: memref<1x128xf32, #tpu.memory_space<vmem>>, %arg5: memref<1x4x8x4xbf16, #tpu.memory_space<vmem>>, %arg6: memref<4x128xbf16, #tpu.memory_space<vmem>>, %arg7: memref<1x4x8x128xbf16, #tpu.memory_space<vmem>>) attributes {dimension_semantics = [#tpu.dimension_semantics<parallel>, #tpu.dimension_semantics<parallel>], iteration_bounds = array<i64: 2, 2>, scalar_prefetch = 0 : i64, scratch_operands = 0 : i64, tpu.core_type = #tpu.core_type<tc>, window_params = [{transform_indices = @transform_0, window_bounds = array<i64: 1, 4, 9, 9, 128>}, {pipeline_mode = #tpu.pipeline_mode<synchronous>, transform_indices = @transform_1, window_bounds = array<i64: 9, 128, 128>}, {pipeline_mode = #tpu.pipeline_mode<synchronous>, transform_indices = @transform_2, window_bounds = array<i64: 1, 128>}, {transform_indices = @transform_3, window_bounds = array<i64: 1, 4, 8, 4>}, {pipeline_mode = #tpu.pipeline_mode<synchronous>, transform_indices = @transform_4, window_bounds = array<i64: 4, 128>}, {transform_indices = @transform_5, window_bounds = array<i64: 1, 4, 8, 128>}]} {
    %c4_i32 = arith.constant 4 : i32
    %0 = arith.muli %arg1, %c4_i32 : i32
    %1 = tpu.assume_multiple %0, 4 : i32
    %cst = arith.constant 0.000000e+00 : f32
    %2 = vector.broadcast %cst : f32 to vector<32x128xf32>
    %c0_i32 = arith.constant 0 : i32
    %3 = arith.addi %1, %c0_i32 : i32
    %c0 = arith.constant 0 : index
    %c0_0 = arith.constant 0 : index
    %4 = arith.index_cast %3 : i32 to index
    %c0_1 = arith.constant 0 : index
    %c0_2 = arith.constant 0 : index
    %5 = vector.load %arg2[%c0, %c0_0, %4, %c0_1, %c0_2] : memref<1x4x9x9x128xbf16, #tpu.memory_space<vmem>>, vector<1x1x4x8x128xbf16>
    %6 = vector.shape_cast %5 : vector<1x1x4x8x128xbf16> to vector<4x8x128xbf16>
    %7 = vector.shape_cast %6 : vector<4x8x128xbf16> to vector<32x128xbf16>
    %c0_3 = arith.constant 0 : index
    %c0_4 = arith.constant 0 : index
    %c0_5 = arith.constant 0 : index
    %8 = vector.load %arg3[%c0_3, %c0_4, %c0_5] : memref<9x128x128xbf16, #tpu.memory_space<vmem>>, vector<1x128x128xbf16>
    %9 = vector.shape_cast %8 : vector<1x128x128xbf16> to vector<128x128xbf16>
    %cst_6 = arith.constant dense<0.000000e+00> : vector<32x128xf32>
    %10 = tpu.matmul %7, %9, %cst_6 {dimension_numbers = #tpu.dot_dimension_numbers<[1], [0], [0], [1], [0, 0, 1, 1], [], []>} : vector<32x128xbf16>, vector<128x128xbf16>, vector<32x128xf32> -> vector<32x128xf32>
    %11 = arith.addf %2, %10 : vector<32x128xf32>
    %c0_i32_7 = arith.constant 0 : i32
    %12 = arith.addi %1, %c0_i32_7 : i32
    %c0_8 = arith.constant 0 : index
    %c1 = arith.constant 1 : index
    %13 = arith.index_cast %12 : i32 to index
    %c0_9 = arith.constant 0 : index
    %c0_10 = arith.constant 0 : index
    %14 = vector.load %arg2[%c0_8, %c1, %13, %c0_9, %c0_10] : memref<1x4x9x9x128xbf16, #tpu.memory_space<vmem>>, vector<1x1x4x8x128xbf16>
    %15 = vector.shape_cast %14 : vector<1x1x4x8x128xbf16> to vector<4x8x128xbf16>
    %16 = vector.shape_cast %15 : vector<4x8x128xbf16> to vector<32x128xbf16>
    %c1_11 = arith.constant 1 : index
    %c0_12 = arith.constant 0 : index
    %c0_13 = arith.constant 0 : index
    %17 = vector.load %arg3[%c1_11, %c0_12, %c0_13] : memref<9x128x128xbf16, #tpu.memory_space<vmem>>, vector<1x128x128xbf16>
    %18 = vector.shape_cast %17 : vector<1x128x128xbf16> to vector<128x128xbf16>
    %cst_14 = arith.constant dense<0.000000e+00> : vector<32x128xf32>
    %19 = tpu.matmul %16, %18, %cst_14 {dimension_numbers = #tpu.dot_dimension_numbers<[1], [0], [0], [1], [0, 0, 1, 1], [], []>} : vector<32x128xbf16>, vector<128x128xbf16>, vector<32x128xf32> -> vector<32x128xf32>
    %20 = arith.addf %11, %19 : vector<32x128xf32>
    %c0_i32_15 = arith.constant 0 : i32
    %21 = arith.addi %1, %c0_i32_15 : i32
    %c0_16 = arith.constant 0 : index
    %c0_17 = arith.constant 0 : index
    %22 = arith.index_cast %21 : i32 to index
    %c1_18 = arith.constant 1 : index
    %c0_19 = arith.constant 0 : index
    %23 = vector.load %arg2[%c0_16, %c0_17, %22, %c1_18, %c0_19] : memref<1x4x9x9x128xbf16, #tpu.memory_space<vmem>>, vector<1x1x4x8x128xbf16>
    %24 = vector.shape_cast %23 : vector<1x1x4x8x128xbf16> to vector<4x8x128xbf16>
    %25 = vector.shape_cast %24 : vector<4x8x128xbf16> to vector<32x128xbf16>
    %c2 = arith.constant 2 : index
    %c0_20 = arith.constant 0 : index
    %c0_21 = arith.constant 0 : index
    %26 = vector.load %arg3[%c2, %c0_20, %c0_21] : memref<9x128x128xbf16, #tpu.memory_space<vmem>>, vector<1x128x128xbf16>
    %27 = vector.shape_cast %26 : vector<1x128x128xbf16> to vector<128x128xbf16>
    %cst_22 = arith.constant dense<0.000000e+00> : vector<32x128xf32>
    %28 = tpu.matmul %25, %27, %cst_22 {dimension_numbers = #tpu.dot_dimension_numbers<[1], [0], [0], [1], [0, 0, 1, 1], [], []>} : vector<32x128xbf16>, vector<128x128xbf16>, vector<32x128xf32> -> vector<32x128xf32>
    %29 = arith.addf %20, %28 : vector<32x128xf32>
    %c0_i32_23 = arith.constant 0 : i32
    %30 = arith.addi %1, %c0_i32_23 : i32
    %c0_24 = arith.constant 0 : index
    %c2_25 = arith.constant 2 : index
    %31 = arith.index_cast %30 : i32 to index
    %c0_26 = arith.constant 0 : index
    %c0_27 = arith.constant 0 : index
    %32 = vector.load %arg2[%c0_24, %c2_25, %31, %c0_26, %c0_27] : memref<1x4x9x9x128xbf16, #tpu.memory_space<vmem>>, vector<1x1x4x8x128xbf16>
    %33 = vector.shape_cast %32 : vector<1x1x4x8x128xbf16> to vector<4x8x128xbf16>
    %34 = vector.shape_cast %33 : vector<4x8x128xbf16> to vector<32x128xbf16>
    %c3 = arith.constant 3 : index
    %c0_28 = arith.constant 0 : index
    %c0_29 = arith.constant 0 : index
    %35 = vector.load %arg3[%c3, %c0_28, %c0_29] : memref<9x128x128xbf16, #tpu.memory_space<vmem>>, vector<1x128x128xbf16>
    %36 = vector.shape_cast %35 : vector<1x128x128xbf16> to vector<128x128xbf16>
    %cst_30 = arith.constant dense<0.000000e+00> : vector<32x128xf32>
    %37 = tpu.matmul %34, %36, %cst_30 {dimension_numbers = #tpu.dot_dimension_numbers<[1], [0], [0], [1], [0, 0, 1, 1], [], []>} : vector<32x128xbf16>, vector<128x128xbf16>, vector<32x128xf32> -> vector<32x128xf32>
    %38 = arith.addf %29, %37 : vector<32x128xf32>
    %c0_i32_31 = arith.constant 0 : i32
    %39 = arith.addi %1, %c0_i32_31 : i32
    %c0_32 = arith.constant 0 : index
    %c3_33 = arith.constant 3 : index
    %40 = arith.index_cast %39 : i32 to index
    %c0_34 = arith.constant 0 : index
    %c0_35 = arith.constant 0 : index
    %41 = vector.load %arg2[%c0_32, %c3_33, %40, %c0_34, %c0_35] : memref<1x4x9x9x128xbf16, #tpu.memory_space<vmem>>, vector<1x1x4x8x128xbf16>
    %42 = vector.shape_cast %41 : vector<1x1x4x8x128xbf16> to vector<4x8x128xbf16>
    %43 = vector.shape_cast %42 : vector<4x8x128xbf16> to vector<32x128xbf16>
    %c4 = arith.constant 4 : index
    %c0_36 = arith.constant 0 : index
    %c0_37 = arith.constant 0 : index
    %44 = vector.load %arg3[%c4, %c0_36, %c0_37] : memref<9x128x128xbf16, #tpu.memory_space<vmem>>, vector<1x128x128xbf16>
    %45 = vector.shape_cast %44 : vector<1x128x128xbf16> to vector<128x128xbf16>
    %cst_38 = arith.constant dense<0.000000e+00> : vector<32x128xf32>
    %46 = tpu.matmul %43, %45, %cst_38 {dimension_numbers = #tpu.dot_dimension_numbers<[1], [0], [0], [1], [0, 0, 1, 1], [], []>} : vector<32x128xbf16>, vector<128x128xbf16>, vector<32x128xf32> -> vector<32x128xf32>
    %47 = arith.addf %38, %46 : vector<32x128xf32>
    %c0_i32_39 = arith.constant 0 : i32
    %48 = arith.addi %1, %c0_i32_39 : i32
    %c0_40 = arith.constant 0 : index
    %c2_41 = arith.constant 2 : index
    %49 = arith.index_cast %48 : i32 to index
    %c1_42 = arith.constant 1 : index
    %c0_43 = arith.constant 0 : index
    %50 = vector.load %arg2[%c0_40, %c2_41, %49, %c1_42, %c0_43] : memref<1x4x9x9x128xbf16, #tpu.memory_space<vmem>>, vector<1x1x4x8x128xbf16>
    %51 = vector.shape_cast %50 : vector<1x1x4x8x128xbf16> to vector<4x8x128xbf16>
    %52 = vector.shape_cast %51 : vector<4x8x128xbf16> to vector<32x128xbf16>
    %c5 = arith.constant 5 : index
    %c0_44 = arith.constant 0 : index
    %c0_45 = arith.constant 0 : index
    %53 = vector.load %arg3[%c5, %c0_44, %c0_45] : memref<9x128x128xbf16, #tpu.memory_space<vmem>>, vector<1x128x128xbf16>
    %54 = vector.shape_cast %53 : vector<1x128x128xbf16> to vector<128x128xbf16>
    %cst_46 = arith.constant dense<0.000000e+00> : vector<32x128xf32>
    %55 = tpu.matmul %52, %54, %cst_46 {dimension_numbers = #tpu.dot_dimension_numbers<[1], [0], [0], [1], [0, 0, 1, 1], [], []>} : vector<32x128xbf16>, vector<128x128xbf16>, vector<32x128xf32> -> vector<32x128xf32>
    %56 = arith.addf %47, %55 : vector<32x128xf32>
    %c1_i32 = arith.constant 1 : i32
    %57 = arith.addi %1, %c1_i32 : i32
    %c0_47 = arith.constant 0 : index
    %c0_48 = arith.constant 0 : index
    %58 = arith.index_cast %57 : i32 to index
    %c0_49 = arith.constant 0 : index
    %c0_50 = arith.constant 0 : index
    %59 = vector.load %arg2[%c0_47, %c0_48, %58, %c0_49, %c0_50] : memref<1x4x9x9x128xbf16, #tpu.memory_space<vmem>>, vector<1x1x4x8x128xbf16>
    %60 = vector.shape_cast %59 : vector<1x1x4x8x128xbf16> to vector<4x8x128xbf16>
    %61 = vector.shape_cast %60 : vector<4x8x128xbf16> to vector<32x128xbf16>
    %c6 = arith.constant 6 : index
    %c0_51 = arith.constant 0 : index
    %c0_52 = arith.constant 0 : index
    %62 = vector.load %arg3[%c6, %c0_51, %c0_52] : memref<9x128x128xbf16, #tpu.memory_space<vmem>>, vector<1x128x128xbf16>
    %63 = vector.shape_cast %62 : vector<1x128x128xbf16> to vector<128x128xbf16>
    %cst_53 = arith.constant dense<0.000000e+00> : vector<32x128xf32>
    %64 = tpu.matmul %61, %63, %cst_53 {dimension_numbers = #tpu.dot_dimension_numbers<[1], [0], [0], [1], [0, 0, 1, 1], [], []>} : vector<32x128xbf16>, vector<128x128xbf16>, vector<32x128xf32> -> vector<32x128xf32>
    %65 = arith.addf %56, %64 : vector<32x128xf32>
    %c1_i32_54 = arith.constant 1 : i32
    %66 = arith.addi %1, %c1_i32_54 : i32
    %c0_55 = arith.constant 0 : index
    %c1_56 = arith.constant 1 : index
    %67 = arith.index_cast %66 : i32 to index
    %c0_57 = arith.constant 0 : index
    %c0_58 = arith.constant 0 : index
    %68 = vector.load %arg2[%c0_55, %c1_56, %67, %c0_57, %c0_58] : memref<1x4x9x9x128xbf16, #tpu.memory_space<vmem>>, vector<1x1x4x8x128xbf16>
    %69 = vector.shape_cast %68 : vector<1x1x4x8x128xbf16> to vector<4x8x128xbf16>
    %70 = vector.shape_cast %69 : vector<4x8x128xbf16> to vector<32x128xbf16>
    %c7 = arith.constant 7 : index
    %c0_59 = arith.constant 0 : index
    %c0_60 = arith.constant 0 : index
    %71 = vector.load %arg3[%c7, %c0_59, %c0_60] : memref<9x128x128xbf16, #tpu.memory_space<vmem>>, vector<1x128x128xbf16>
    %72 = vector.shape_cast %71 : vector<1x128x128xbf16> to vector<128x128xbf16>
    %cst_61 = arith.constant dense<0.000000e+00> : vector<32x128xf32>
    %73 = tpu.matmul %70, %72, %cst_61 {dimension_numbers = #tpu.dot_dimension_numbers<[1], [0], [0], [1], [0, 0, 1, 1], [], []>} : vector<32x128xbf16>, vector<128x128xbf16>, vector<32x128xf32> -> vector<32x128xf32>
    %74 = arith.addf %65, %73 : vector<32x128xf32>
    %c1_i32_62 = arith.constant 1 : i32
    %75 = arith.addi %1, %c1_i32_62 : i32
    %c0_63 = arith.constant 0 : index
    %c0_64 = arith.constant 0 : index
    %76 = arith.index_cast %75 : i32 to index
    %c1_65 = arith.constant 1 : index
    %c0_66 = arith.constant 0 : index
    %77 = vector.load %arg2[%c0_63, %c0_64, %76, %c1_65, %c0_66] : memref<1x4x9x9x128xbf16, #tpu.memory_space<vmem>>, vector<1x1x4x8x128xbf16>
    %78 = vector.shape_cast %77 : vector<1x1x4x8x128xbf16> to vector<4x8x128xbf16>
    %79 = vector.shape_cast %78 : vector<4x8x128xbf16> to vector<32x128xbf16>
    %c8 = arith.constant 8 : index
    %c0_67 = arith.constant 0 : index
    %c0_68 = arith.constant 0 : index
    %80 = vector.load %arg3[%c8, %c0_67, %c0_68] : memref<9x128x128xbf16, #tpu.memory_space<vmem>>, vector<1x128x128xbf16>
    %81 = vector.shape_cast %80 : vector<1x128x128xbf16> to vector<128x128xbf16>
    %cst_69 = arith.constant dense<0.000000e+00> : vector<32x128xf32>
    %82 = tpu.matmul %79, %81, %cst_69 {dimension_numbers = #tpu.dot_dimension_numbers<[1], [0], [0], [1], [0, 0, 1, 1], [], []>} : vector<32x128xbf16>, vector<128x128xbf16>, vector<32x128xf32> -> vector<32x128xf32>
    %83 = arith.addf %74, %82 : vector<32x128xf32>
    %c0_70 = arith.constant 0 : index
    %c0_71 = arith.constant 0 : index
    %c0_72 = arith.constant 0 : index
    %c0_73 = arith.constant 0 : index
    %84 = vector.load %arg5[%c0_70, %c0_71, %c0_72, %c0_73] : memref<1x4x8x4xbf16, #tpu.memory_space<vmem>>, vector<1x4x8x4xbf16>
    %85 = vector.shape_cast %84 : vector<1x4x8x4xbf16> to vector<4x8x4xbf16>
    %86 = vector.shape_cast %85 : vector<4x8x4xbf16> to vector<32x4xbf16>
    %c0_74 = arith.constant 0 : index
    %c0_75 = arith.constant 0 : index
    %87 = vector.load %arg6[%c0_74, %c0_75] : memref<4x128xbf16, #tpu.memory_space<vmem>>, vector<4x128xbf16>
    %cst_76 = arith.constant dense<0.000000e+00> : vector<32x128xf32>
    %88 = tpu.matmul %86, %87, %cst_76 {dimension_numbers = #tpu.dot_dimension_numbers<[1], [0], [0], [1], [0, 0, 1, 1], [], []>} : vector<32x4xbf16>, vector<4x128xbf16>, vector<32x128xf32> -> vector<32x128xf32>
    %89 = arith.addf %83, %88 : vector<32x128xf32>
    %c0_77 = arith.constant 0 : index
    %c0_78 = arith.constant 0 : index
    %90 = vector.load %arg4[%c0_77, %c0_78] : memref<1x128xf32, #tpu.memory_space<vmem>>, vector<1x128xf32>
    %91 = vector.broadcast %90 : vector<1x128xf32> to vector<32x128xf32>
    %92 = arith.addf %89, %91 : vector<32x128xf32>
    %cst_79 = arith.constant 0.000000e+00 : f32
    %93 = vector.broadcast %cst_79 : f32 to vector<32x128xf32>
    %94 = arith.maximumf %92, %93 : vector<32x128xf32>
    %95 = vector.shape_cast %94 : vector<32x128xf32> to vector<4x8x128xf32>
    %96 = arith.truncf %95 : vector<4x8x128xf32> to vector<4x8x128xbf16>
    %c0_80 = arith.constant 0 : index
    %c0_81 = arith.constant 0 : index
    %c0_82 = arith.constant 0 : index
    %c0_83 = arith.constant 0 : index
    %97 = vector.load %arg7[%c0_80, %c0_81, %c0_82, %c0_83] : memref<1x4x8x128xbf16, #tpu.memory_space<vmem>>, vector<1x4x8x128xbf16>
    %98 = vector.shape_cast %97 : vector<1x4x8x128xbf16> to vector<4x8x128xbf16>
    %99 = vector.shape_cast %96 : vector<4x8x128xbf16> to vector<1x4x8x128xbf16>
    tpu.vector_store %arg7[%c0_80, %c0_81, %c0_82, %c0_83], %99 {strides = array<i32>} : memref<1x4x8x128xbf16, #tpu.memory_space<vmem>>, vector<1x4x8x128xbf16>,
    return
  }
  func.func @transform_0(%arg0: i32, %arg1: i32) -> (i32, i32, i32, i32, i32) {
    %c0_i32 = arith.constant 0 : i32
    %c0_i32_0 = arith.constant 0 : i32
    %c0_i32_1 = arith.constant 0 : i32
    %c0_i32_2 = arith.constant 0 : i32
    %c0_i32_3 = arith.constant 0 : i32
    return %arg0, %c0_i32, %c0_i32_0, %c0_i32_1, %c0_i32_2 : i32, i32, i32, i32, i32
  }
  func.func @transform_1(%arg0: i32, %arg1: i32) -> (i32, i32, i32) {
    %c0_i32 = arith.constant 0 : i32
    %c0_i32_0 = arith.constant 0 : i32
    %c0_i32_1 = arith.constant 0 : i32
    %c0_i32_2 = arith.constant 0 : i32
    return %c0_i32, %c0_i32_0, %c0_i32_1 : i32, i32, i32
  }
  func.func @transform_2(%arg0: i32, %arg1: i32) -> (i32, i32) {
    %c0_i32 = arith.constant 0 : i32
    %c0_i32_0 = arith.constant 0 : i32
    %c0_i32_1 = arith.constant 0 : i32
    return %c0_i32, %c0_i32_0 : i32, i32
  }
  func.func @transform_3(%arg0: i32, %arg1: i32) -> (i32, i32, i32, i32) {
    %c0_i32 = arith.constant 0 : i32
    %c0_i32_0 = arith.constant 0 : i32
    %c0_i32_1 = arith.constant 0 : i32
    return %arg0, %arg1, %c0_i32, %c0_i32_0 : i32, i32, i32, i32
  }
  func.func @transform_4(%arg0: i32, %arg1: i32) -> (i32, i32) {
    %c0_i32 = arith.constant 0 : i32
    %c0_i32_0 = arith.constant 0 : i32
    %c0_i32_1 = arith.constant 0 : i32
    return %c0_i32, %c0_i32_0 : i32, i32
  }
  func.func @transform_5(%arg0: i32, %arg1: i32) -> (i32, i32, i32, i32) {
    %c0_i32 = arith.constant 0 : i32
    %c0_i32_0 = arith.constant 0 : i32
    %c0_i32_1 = arith.constant 0 : i32
    return %arg0, %arg1, %c0_i32, %c0_i32_0 : i32, i32, i32, i32
  }
}

</mosaic_0001>

<llo_original>
// kernel: res_block_forward.2
$region0: #{res_block_forward.2}
  #allocation0 [shape = 'u32[]', space=smem, size = 0x4, offset = 0x4, fixed_abs, tag = 'smem constant byte address 0x4 - core index']
  #allocation1 [shape = 'u32[144,128]{1,0:T(1,128)}', space=vmem, size = 0x12000, scoped, tag = 'internal scratch']
  %s0 = inlined_call_operand.vmem [shape: bf16[2,1,18,18,4], index: 0, kind: input, shape index: {}]
  %s1 = inlined_call_operand.vmem [shape: bf16[9,4,128], index: 1, kind: input, shape index: {}]
  %s2 = inlined_call_operand.vmem [shape: f32[1,128], index: 2, kind: input, shape index: {}]
  %s3 = inlined_call_operand.vmem [shape: bf16[2,16,16,128], index: 3, kind: output, shape index: {}]
  %s4 = sld [smem:[#allocation0]]
  $region45: #{res_block_forward.2} parent=0
    _
  %s6 = ssub.s32 1, %s4
  %s7 = scalar_select 0, %s6, %s4
  loop: start=0, step=1, limit=6
  $region2: #{res_block_forward.2} parent=0 // loop_pre_header
    _
  $region3: #{res_block_forward.2} parent=0 // loop_header
    %s9 = sphi 0, %s13
    %p10 = scmp.ge.s32.totalorder %s9, 6
    %s16 = sphi 0, %s28
    %s17 = sphi 0, %s24
    %s18 = sphi 0, %s16
    %s19 = sphi 0, %s17
    %s20 = sphi 0, %s18
    %s21 = sphi 0, %s19
    %s31 = sphi 0, %s33
    %s34 = sphi 0, %s31
    %s35 = sphi 0, %s34
    %s51 = sphi 0, %s35
    %s55 = sphi 0, %s55
    %s57 = sphi 0, %s55
    %s58 = sphi 0, %s57
    %s72 = sphi 0, %s58
    %s76 = sphi 0, %s76
    %s78 = sphi 0, %s76
    %s79 = sphi 0, %s78
    %s93 = sphi 0, %s79
    %s101 = sphi 0, %s103
    %s104 = sphi 0, %s101
    %s105 = sphi 0, %s104
    %s121 = sphi 0, %s105
  $region4: #{res_block_forward.2} parent=0 // loop_header_branch
    %12 = sbr.rel (%p10) target = $region8
  $region5: #{res_block_forward.2} parent=0 // loop_body
    %s14 = ssub.s32 %s9, 1
    %s15 = ssub.s32 %s9, 2
    %s22 = sadd.s32 1, %s17
    %p23 = scmp.ge.s32.totalorder %s22, 2
    %s24 = scalar_select %p23, 0, %s22
    %s25 = sadd.s32 1, %s16
    %s26 = scalar_select %p23, %s25, %s16
    %p27 = scmp.ge.s32.totalorder %s26, 2
    %s28 = scalar_select %p27, 0, %s26
    %s29 = ssub.s32 %s16, %s28
    %p30 = scmp.eq.s32.totalorder %s29, 0
    %s32 = sadd.s32 %s31, 1
    %s33 = scalar_select %p30, %s31, %s32
    %p36 = pneg %p30
    %p37 = scmp.eq.s32.totalorder %s9, 3
    %p38 = por %p36, %p37
    %p39 = scmp.ne.s32.totalorder %s31, %s34
    %p40 = scmp.eq.s32.totalorder %s9, 0
    %p41 = por %p39, %p40
    %p42 = scmp.ne.s32.totalorder %s31, %s34
    %p43 = scmp.eq.s32.totalorder %s14, 3
    %p44 = por %p42, %p43
    %p45 = scmp.ne.s32.totalorder %s34, %s35
    %p46 = scmp.eq.s32.totalorder %s14, 0
    %p47 = por %p45, %p46
    %p48 = scmp.ne.s32.totalorder %s34, %s35
    %p49 = scmp.eq.s32.totalorder %s15, 3
    %p50 = por %p48, %p49
    %p52 = scmp.ne.s32.totalorder %s35, %s51
    %p53 = scmp.eq.s32.totalorder %s15, 0
    %p54 = por %p52, %p53
    %s56 = sadd.s32 %s55, 1
    %p59 = scmp.eq.s32.totalorder %s9, 3
    %p60 = scmp.ne.s32.totalorder %s55, %s57
    %p61 = scmp.eq.s32.totalorder %s9, 0
    %p62 = por %p60, %p61
    %p63 = scmp.ne.s32.totalorder %s55, %s57
    %p64 = scmp.eq.s32.totalorder %s14, 3
    %p65 = por %p63, %p64
    %p66 = scmp.ne.s32.totalorder %s57, %s58
    %p67 = scmp.eq.s32.totalorder %s14, 0
    %p68 = por %p66, %p67
    %p69 = scmp.ne.s32.totalorder %s57, %s58
    %p70 = scmp.eq.s32.totalorder %s15, 3
    %p71 = por %p69, %p70
    %p73 = scmp.ne.s32.totalorder %s58, %s72
    %p74 = scmp.eq.s32.totalorder %s15, 0
    %p75 = por %p73, %p74
    %s77 = sadd.s32 %s76, 1
    %p80 = scmp.eq.s32.totalorder %s9, 3
    %p81 = scmp.ne.s32.totalorder %s76, %s78
    %p82 = scmp.eq.s32.totalorder %s9, 0
    %p83 = por %p81, %p82
    %p84 = scmp.ne.s32.totalorder %s76, %s78
    %p85 = scmp.eq.s32.totalorder %s14, 3
    %p86 = por %p84, %p85
    %p87 = scmp.ne.s32.totalorder %s78, %s79
    %p88 = scmp.eq.s32.totalorder %s14, 0
    %p89 = por %p87, %p88
    %p90 = scmp.ne.s32.totalorder %s78, %s79
    %p91 = scmp.eq.s32.totalorder %s15, 3
    %p92 = por %p90, %p91
    %p94 = scmp.ne.s32.totalorder %s79, %s93
    %p95 = scmp.eq.s32.totalorder %s15, 0
    %p96 = por %p94, %p95
    %s97 = ssub.s32 %s16, %s28
    %s98 = ssub.s32 %s17, %s24
    %s99 = sor.u32 %s97, %s98
    %p100 = scmp.eq.s32.totalorder %s99, 0
    %s102 = sadd.s32 %s101, 1
    %s103 = scalar_select %p100, %s101, %s102
    %p106 = pneg %p100
    %p107 = scmp.eq.s32.totalorder %s9, 3
    %p108 = por %p106, %p107
    %p109 = scmp.ne.s32.totalorder %s101, %s104
    %p110 = scmp.eq.s32.totalorder %s9, 0
    %p111 = por %p109, %p110
    %p112 = scmp.ne.s32.totalorder %s101, %s104
    %p113 = scmp.eq.s32.totalorder %s14, 3
    %p114 = por %p112, %p113
    %p115 = scmp.ne.s32.totalorder %s104, %s105
    %p116 = scmp.eq.s32.totalorder %s14, 0
    %p117 = por %p115, %p116
    %p118 = scmp.ne.s32.totalorder %s104, %s105
    %p119 = scmp.eq.s32.totalorder %s15, 3
    %p120 = por %p118, %p119
    %p122 = scmp.ne.s32.totalorder %s105, %s121
    %p123 = scmp.eq.s32.totalorder %s15, 0
    %p124 = por %p122, %p123
    %p125 = scmp.le.s32.totalorder 1, %s9
    %p126 = scmp.lt.s32.totalorder %s9, 5
    %p127 = pnand %p125, %p126
    %p128 = pneg %p127
    // Predicated region
    $region9: #{res_block_forward.2} parent=5 // pred_check
      _
    $region10: #{res_block_forward.2} parent=5 // pred_check_branch
      %130 = sbr.rel (%p127) target = $region12
    $region11: #{res_block_forward.2} parent=5 // pred_region
      %s131 = ssub.s32 %s9, 1
      // Predicated region
      $region13: #{res_block_forward.2} parent=11 // pred_check
        %p132 = pneg %p68
      $region14: #{res_block_forward.2} parent=11 // pred_check_branch
        %134 = sbr.rel (%p132) target = $region16
      $region15: #{res_block_forward.2} parent=11 // pred_region
        _
      $region16: #{res_block_forward.2} parent=11 // pred_fallthru
        _
      // Predicated region
      $region17: #{res_block_forward.2} parent=11 // pred_check
        %p135 = pneg %p89
      $region18: #{res_block_forward.2} parent=11 // pred_check_branch
        %137 = sbr.rel (%p135) target = $region20
      $region19: #{res_block_forward.2} parent=11 // pred_region
        _
      $region20: #{res_block_forward.2} parent=11 // pred_fallthru
        _
    $region12: #{res_block_forward.2} parent=5 // pred_fallthru
      _
    %p138 = scmp.lt.s32.totalorder %s9, 4
    // Predicated region
    $region21: #{res_block_forward.2} parent=5 // pred_check
      %p139 = pneg %p138
    $region22: #{res_block_forward.2} parent=5 // pred_check_branch
      %141 = sbr.rel (%p139) target = $region24
    $region23: #{res_block_forward.2} parent=5 // pred_region
      // Predicated region
      $region25: #{res_block_forward.2} parent=23 // pred_check
        %p142 = pneg %p41
      $region26: #{res_block_forward.2} parent=23 // pred_check_branch
        %144 = sbr.rel (%p142) target = $region28
      $region27: #{res_block_forward.2} parent=23 // pred_region
        %p145 = scmp.lt.s32.totalorder %s16, 1
        %s146 = scalar_select %p145, %s16, 1
        %s147 = smul.addr %s146, 54
        %s148 = smul.addr %s147, 4
        %s149 = scalar_lea.vmem %s0, %s148
      $region28: #{res_block_forward.2} parent=23 // pred_fallthru
        _
    $region24: #{res_block_forward.2} parent=5 // pred_fallthru
      _
    %p150 = scmp.le.s32.totalorder 1, %s9
    %p151 = scmp.lt.s32.totalorder %s9, 5
    %p152 = pnand %p150, %p151
    %p153 = pneg %p152
    // Predicated region
    $region29: #{res_block_forward.2} parent=5 // pred_check
      _
    $region30: #{res_block_forward.2} parent=5 // pred_check_branch
      %155 = sbr.rel (%p152) target = $region32
    $region31: #{res_block_forward.2} parent=5 // pred_region
      %s156 = ssub.s32 %s9, 1
      %p157 = scmp.lt.s32.totalorder %s18, 1
      %s158 = scalar_select %p157, %s18, 1
      %s159 = smul.addr %s158, 54
      %s160 = smul.addr %s159, 4
      %s161 = scalar_lea.vmem %s0, %s160
      %p162 = pneg %p47
      %p163 = pneg %p44
      %p164 = pneg %p68
      %p165 = pneg %p65
      %p166 = pneg %p89
      %p167 = pneg %p86
      %p168 = pneg %p117
      %p169 = pneg %p114
      %s170 = smul.u32 8, %s19
      %p171 = scmp.lt.s32.totalorder %s18, 1
      %s172 = scalar_select %p171, %s18, 1
      %p173 = scmp.lt.s32.totalorder %s170, 15
      %s174 = scalar_select %p173, %s170, 15
      %s175 = smul.addr %s174, 2
      %s176 = smul.addr %s172, 32
      %s177 = sadd.s32 %s175, %s176
      %s178 = smul.addr %s177, 4
      %s179 = scalar_lea.vmem %s3, %s178
      %p180 = scmp.lt.s32.totalorder %s18, 1
      %s181 = scalar_select %p180, %s18, 1
      %s182 = smul.addr %s181, 54
      %s183 = smul.addr %s182, 4
      %s184 = scalar_lea.vmem %s0, %s183
      %s185 = smul.u32 8, %s19
      %p186 = scmp.lt.s32.totalorder %s18, 1
      %s187 = scalar_select %p186, %s18, 1
      %p188 = scmp.lt.s32.totalorder %s185, 15
      %s189 = scalar_select %p188, %s185, 15
      %s190 = smul.addr %s189, 2
      %s191 = smul.addr %s187, 32
      %s192 = sadd.s32 %s190, %s191
      %s193 = smul.addr %s192, 4
      %s194 = scalar_lea.vmem %s3, %s193
      %s195 = smul.u32 8, %s19
      %s197 = smul.u32 %s19, 8
      %s198 = smul.u32 %s197, 3
      %s199 = smul.addr %s198, 4
      %s200 = scalar_lea.vmem %s184, %s199
      %v201 = vld [vmem:[%s200] sm:$0xf]
      %v202 = vld [vmem:[%s200 + $0x4] sm:$0xf]
      %v203 = vld [vmem:[%s200 + $0xc] sm:$0xf]
      %v204 = vld [vmem:[%s200 + $0x10] sm:$0xf]
      %v205 = vld [vmem:[%s200 + $0x18] sm:$0xf]
      %v206 = vld [vmem:[%s200 + $0x1c] sm:$0xf]
      %v207 = vld [vmem:[%s200 + $0x24] sm:$0xf]
      %v208 = vld [vmem:[%s200 + $0x28] sm:$0xf]
      %v209 = vld [vmem:[%s200 + $0x30] sm:$0xf]
      %v210 = vld [vmem:[%s200 + $0x34] sm:$0xf]
      %v211 = vld [vmem:[%s200 + $0x3c] sm:$0xf]
      %v212 = vld [vmem:[%s200 + $0x40] sm:$0xf]
      %v213 = vld [vmem:[%s200 + $0x48] sm:$0xf]
      %v214 = vld [vmem:[%s200 + $0x4c] sm:$0xf]
      %v215 = vld [vmem:[%s200 + $0x54] sm:$0xf]
      %v216 = vld [vmem:[%s200 + $0x58] sm:$0xf]
      %v217 = vld [vmem:[%s1] sm:$0x3]
      %v218 = vld [vmem:[%s200 + $0x8] sm:$0x1]
      %v219 = vld [vmem:[%s200 + $0x14] sm:$0x1]
      %v220 = vld [vmem:[%s200 + $0x20] sm:$0x1]
      %v221 = vld [vmem:[%s200 + $0x2c] sm:$0x1]
      %v222 = vld [vmem:[%s200 + $0x38] sm:$0x1]
      %v223 = vld [vmem:[%s200 + $0x44] sm:$0x1]
      %v224 = vld [vmem:[%s200 + $0x50] sm:$0x1]
      %v225 = vld [vmem:[%s200 + $0x5c] sm:$0x1]
      %vm226 = vsmask.f32 3328
      %vm227 = vsmask.f32 7440
      %vm228 = vmor %vm226, %vm227
      %v230 = vshrl.u32 %v201, 16
      %v232 = vrot.slane %v230, 4
      %v233 = vshll.u32 %v201, 16
      %v235 = vrot.slane %v233, 5
      %v236 = vor.u32 %v232, %v235
      %v237 = vrot.slane %v236, 4
      %v239 = vshll.u32 %v202, 16
      %v241 = vrot.slane %v239, 5
      %v242 = vsel %vm228, %v237, %v241
      %v243 = vshrl.u32 %v202, 16
      %v245 = vrot.slane %v243, 4
      %v246 = vor.u32 %v245, %v241
      %v247 = vrot.slane %v246, 4
      %v249 = vshll.u32 %v218, 16
      %v251 = vrot.slane %v249, 5
      %v252 = vsel %vm228, %v247, %v251
      %v254 = vshrl.u32 %v203, 16
      %v256 = vrot.slane %v254, 4
      %v257 = vshll.u32 %v203, 16
      %v259 = vrot.slane %v257, 5
      %v260 = vor.u32 %v256, %v259
      %v261 = vrot.slane %v260, 4
      %v263 = vshll.u32 %v204, 16
      %v265 = vrot.slane %v263, 5
      %v266 = vsel %vm228, %v261, %v265
      %v267 = vshrl.u32 %v204, 16
      %v269 = vrot.slane %v267, 4
      %v270 = vor.u32 %v269, %v265
      %v271 = vrot.slane %v270, 4
      %v273 = vshll.u32 %v219, 16
      %v275 = vrot.slane %v273, 5
      %v276 = vsel %vm228, %v271, %v275
      %v278 = vshrl.u32 %v205, 16
      %v280 = vrot.slane %v278, 4
      %v281 = vshll.u32 %v205, 16
      %v283 = vrot.slane %v281, 5
      %v284 = vor.u32 %v280, %v283
      %v285 = vrot.slane %v284, 4
      %v287 = vshll.u32 %v206, 16
      %v289 = vrot.slane %v287, 5
      %v290 = vsel %vm228, %v285, %v289
      %v291 = vshrl.u32 %v206, 16
      %v293 = vrot.slane %v291, 4
      %v294 = vor.u32 %v293, %v289
      %v295 = vrot.slane %v294, 4
      %v297 = vshll.u32 %v220, 16
      %v299 = vrot.slane %v297, 5
      %v300 = vsel %vm228, %v295, %v299
      %v302 = vshrl.u32 %v207, 16
      %v304 = vrot.slane %v302, 4
      %v305 = vshll.u32 %v207, 16
      %v307 = vrot.slane %v305, 5
      %v308 = vor.u32 %v304, %v307
      %v309 = vrot.slane %v308, 4
      %v311 = vshll.u32 %v208, 16
      %v313 = vrot.slane %v311, 5
      %v314 = vsel %vm228, %v309, %v313
      %v315 = vshrl.u32 %v208, 16
      %v317 = vrot.slane %v315, 4
      %v318 = vor.u32 %v317, %v313
      %v319 = vrot.slane %v318, 4
      %v321 = vshll.u32 %v221, 16
      %v323 = vrot.slane %v321, 5
      %v324 = vsel %vm228, %v319, %v323
      %v326 = vshrl.u32 %v209, 16
      %v328 = vrot.slane %v326, 4
      %v329 = vshll.u32 %v209, 16
      %v331 = vrot.slane %v329, 5
      %v332 = vor.u32 %v328, %v331
      %v333 = vrot.slane %v332, 4
      %v335 = vshll.u32 %v210, 16
      %v337 = vrot.slane %v335, 5
      %v338 = vsel %vm228, %v333, %v337
      %v339 = vshrl.u32 %v210, 16
      %v341 = vrot.slane %v339, 4
      %v342 = vor.u32 %v341, %v337
      %v343 = vrot.slane %v342, 4
      %v345 = vshll.u32 %v222, 16
      %v347 = vrot.slane %v345, 5
      %v348 = vsel %vm228, %v343, %v347
      %v350 = vshrl.u32 %v211, 16
      %v352 = vrot.slane %v350, 4
      %v353 = vshll.u32 %v211, 16
      %v355 = vrot.slane %v353, 5
      %v356 = vor.u32 %v352, %v355
      %v357 = vrot.slane %v356, 4
      %v359 = vshll.u32 %v212, 16
      %v361 = vrot.slane %v359, 5
      %v362 = vsel %vm228, %v357, %v361
      %v363 = vshrl.u32 %v212, 16
      %v365 = vrot.slane %v363, 4
      %v366 = vor.u32 %v365, %v361
      %v367 = vrot.slane %v366, 4
      %v369 = vshll.u32 %v223, 16
      %v371 = vrot.slane %v369, 5
      %v372 = vsel %vm228, %v367, %v371
      %v374 = vshrl.u32 %v213, 16
      %v376 = vrot.slane %v374, 4
      %v377 = vshll.u32 %v213, 16
      %v379 = vrot.slane %v377, 5
      %v380 = vor.u32 %v376, %v379
      %v381 = vrot.slane %v380, 4
      %v383 = vshll.u32 %v214, 16
      %v385 = vrot.slane %v383, 5
      %v386 = vsel %vm228, %v381, %v385
      %v387 = vshrl.u32 %v214, 16
      %v389 = vrot.slane %v387, 4
      %v390 = vor.u32 %v389, %v385
      %v391 = vrot.slane %v390, 4
      %v393 = vshll.u32 %v224, 16
      %v395 = vrot.slane %v393, 5
      %v396 = vsel %vm228, %v391, %v395
      %v398 = vshrl.u32 %v215, 16
      %v400 = vrot.slane %v398, 4
      %v401 = vshll.u32 %v215, 16
      %v403 = vrot.slane %v401, 5
      %v404 = vor.u32 %v400, %v403
      %v405 = vrot.slane %v404, 4
      %v407 = vshll.u32 %v216, 16
      %v409 = vrot.slane %v407, 5
      %v410 = vsel %vm228, %v405, %v409
      %v411 = vshrl.u32 %v216, 16
      %v413 = vrot.slane %v411, 4
      %v414 = vor.u32 %v413, %v409
      %v415 = vrot.slane %v414, 4
      %v417 = vshll.u32 %v225, 16
      %v419 = vrot.slane %v417, 5
      %v420 = vsel %vm228, %v415, %v419
      %s421 = scalar_lea.vmem %s1, 2
      %v422 = vld [vmem:[%s421] sm:$0x3]
      %v423 = vunpack.c.l.b16 %v242
      %v424 = vunpack.c.l.b16 %v252
      %v425 = vunpack.c.l.b16 %v266
      %v426 = vunpack.c.l.b16 %v276
      %v427 = vunpack.c.l.b16 %v290
      %v428 = vunpack.c.l.b16 %v300
      %v429 = vunpack.c.l.b16 %v314
      %v430 = vunpack.c.l.b16 %v324
      %v431 = vunpack.c.l.b16 %v338
      %v432 = vunpack.c.l.b16 %v348
      %v433 = vunpack.c.l.b16 %v362
      %v434 = vunpack.c.l.b16 %v372
      %v435 = vunpack.c.l.b16 %v386
      %v436 = vunpack.c.l.b16 %v396
      %v437 = vunpack.c.l.b16 %v410
      %v438 = vunpack.c.l.b16 %v420
      %v439 = vpack.c.b16 %v424, %v423
      %v440 = vpack.c.b16 %v426, %v425
      %v441 = vpack.c.b16 %v428, %v427
      %v442 = vpack.c.b16 %v430, %v429
      %v443 = vpack.c.b16 %v432, %v431
      %v444 = vpack.c.b16 %v434, %v433
      %v445 = vpack.c.b16 %v436, %v435
      %v446 = vpack.c.b16 %v438, %v437
      %vm447 = vcmask 31744
      %v449 = vsel %vm447, %v439, 0
      %v452 = vsel %vm447, %v440, 0
      %v455 = vsel %vm447, %v441, 0
      %v458 = vsel %vm447, %v442, 0
      %v461 = vsel %vm447, %v443, 0
      %v464 = vsel %vm447, %v444, 0
      %v467 = vsel %vm447, %v445, 0
      %v470 = vsel %vm447, %v446, 0
      %vm472 = vcmask 1041408
      %v474 = vsel %vm472, %v422, 0
      %476 = vmatprep.subr.bf16.mxu0 0
      %477 = vmatpush1.bf16.msra.mxu0 %v474
      %478 = vmatprep.subr.bf16.mxu0 0
      %479 = vmatpush1.bf16.msra.mxu0 0
      %480 = vmatprep.subr.bf16.mxu0 0
      %481 = vmatpush1.bf16.msra.mxu0 0
      %482 = vmatprep.subr.bf16.mxu0 0
      %483 = vmatpush1.bf16.msra.mxu0 0
      %484 = vmatprep.subr.bf16.mxu0 0
      %485 = vmatpush1.bf16.msra.mxu0 0
      %486 = vmatprep.subr.bf16.mxu0 0
      %487 = vmatpush1.bf16.msra.mxu0 0
      %488 = vmatprep.subr.bf16.mxu0 0
      %489 = vmatpush1.bf16.msra.mxu0 0
      %490 = vmatprep.subr.bf16.mxu0 0
      %491 = vmatpush1.bf16.msra.mxu0 0
      %492 = vmatprep.subr.bf16.mxu0 0
      %493 = vmatpush1.bf16.msra.mxu0 0
      %494 = vmatprep.subr.bf16.mxu0 0
      %495 = vmatpush1.bf16.msra.mxu0 0
      %496 = vmatprep.subr.bf16.mxu0 0
      %497 = vmatpush1.bf16.msra.mxu0 0
      %498 = vmatprep.subr.bf16.mxu0 0
      %499 = vmatpush1.bf16.msra.mxu0 0
      %500 = vmatprep.subr.bf16.mxu0 0
      %501 = vmatpush1.bf16.msra.mxu0 0
      %502 = vmatprep.subr.bf16.mxu0 0
      %503 = vmatpush1.bf16.msra.mxu0 0
      %504 = vmatprep.subr.bf16.mxu0 0
      %505 = vmatpush1.bf16.msra.mxu0 0
      %506 = vmatprep.subr.bf16.mxu0 0
      %507 = vmatpush1.bf16.msra.mxu0 0
      %508 = vmatprep.mubr.bf16.mxu0 0
      %509 = vmatmul.mubr.bf16.gmra.mrb[0].mxu0 %v449
      %v510 = vpop.f32.mrb[0].mxu0
      %v511 = vadd.f32 0.0, %v510
      %v512 = vpop.f32.mrb[0].mxu0
      %v513 = vpop.f32.mrb[0].mxu0
      %v514 = vadd.f32 0.0, %v513
      %v515 = vpop.f32.mrb[0].mxu0
      %516 = vmatprep.mubr.bf16.mxu0 0
      %517 = vmatmul.mubr.bf16.gmra.mrb[0].mxu0 %v452
      %v518 = vpop.f32.mrb[0].mxu0
      %v519 = vadd.f32 0.0, %v518
      %v520 = vpop.f32.mrb[0].mxu0
      %v521 = vpop.f32.mrb[0].mxu0
      %v522 = vadd.f32 0.0, %v521
      %v523 = vpop.f32.mrb[0].mxu0
      %524 = vmatprep.mubr.bf16.mxu0 0
      %525 = vmatmul.mubr.bf16.gmra.mrb[0].mxu0 %v455
      %v526 = vpop.f32.mrb[0].mxu0
      %v527 = vadd.f32 0.0, %v526
      %v528 = vpop.f32.mrb[0].mxu0
      %v529 = vpop.f32.mrb[0].mxu0
      %v530 = vadd.f32 0.0, %v529
      %v531 = vpop.f32.mrb[0].mxu0
      %532 = vmatprep.mubr.bf16.mxu0 0
      %533 = vmatmul.mubr.bf16.gmra.mrb[0].mxu0 %v458
      %v534 = vpop.f32.mrb[0].mxu0
      %v535 = vadd.f32 0.0, %v534
      %v536 = vpop.f32.mrb[0].mxu0
      %v537 = vpop.f32.mrb[0].mxu0
      %v538 = vadd.f32 0.0, %v537
      %v539 = vpop.f32.mrb[0].mxu0
      %540 = vmatprep.mubr.bf16.mxu0 0
      %541 = vmatmul.mubr.bf16.gmra.mrb[0].mxu0 %v461
      %v542 = vpop.f32.mrb[0].mxu0
      %v543 = vadd.f32 0.0, %v542
      %v544 = vpop.f32.mrb[0].mxu0
      %v545 = vpop.f32.mrb[0].mxu0
      %v546 = vadd.f32 0.0, %v545
      %v547 = vpop.f32.mrb[0].mxu0
      %548 = vmatprep.mubr.bf16.mxu0 0
      %549 = vmatmul.mubr.bf16.gmra.mrb[0].mxu0 %v464
      %v550 = vpop.f32.mrb[0].mxu0
      %v551 = vadd.f32 0.0, %v550
      %v552 = vpop.f32.mrb[0].mxu0
      %v553 = vpop.f32.mrb[0].mxu0
      %v554 = vadd.f32 0.0, %v553
      %v555 = vpop.f32.mrb[0].mxu0
      %556 = vmatprep.mubr.bf16.mxu0 0
      %557 = vmatmul.mubr.bf16.gmra.mrb[0].mxu0 %v467
      %v558 = vpop.f32.mrb[0].mxu0
      %v559 = vadd.f32 0.0, %v558
      %v560 = vpop.f32.mrb[0].mxu0
      %v561 = vpop.f32.mrb[0].mxu0
      %v562 = vadd.f32 0.0, %v561
      %v563 = vpop.f32.mrb[0].mxu0
      %564 = vmatprep.mubr.bf16.mxu0 0
      %565 = vmatmul.mubr.bf16.gmra.mrb[0].mxu0 %v470
      %v566 = vpop.f32.mrb[0].mxu0
      %v567 = vadd.f32 0.0, %v566
      %v568 = vpop.f32.mrb[0].mxu0
      %v569 = vpop.f32.mrb[0].mxu0
      %v570 = vadd.f32 0.0, %v569
      %v571 = vpop.f32.mrb[0].mxu0
      %572 = vdwg.mxu0
      %v589 = vunpack.c.l.b16 %v201
      %v590 = vunpack.c.l.b16 %v202
      %v591 = vunpack.c.l.b16 %v203
      %v592 = vunpack.c.l.b16 %v204
      %v593 = vunpack.c.l.b16 %v205
      %v594 = vunpack.c.l.b16 %v206
      %v595 = vunpack.c.l.b16 %v207
      %v596 = vunpack.c.l.b16 %v208
      %v597 = vunpack.c.l.b16 %v209
      %v598 = vunpack.c.l.b16 %v210
      %v599 = vunpack.c.l.b16 %v211
      %v600 = vunpack.c.l.b16 %v212
      %v601 = vunpack.c.l.b16 %v213
      %v602 = vunpack.c.l.b16 %v214
      %v603 = vunpack.c.l.b16 %v215
      %v604 = vunpack.c.l.b16 %v216
      %v605 = vpack.c.b16 %v590, %v589
      %v606 = vpack.c.b16 %v592, %v591
      %v607 = vpack.c.b16 %v594, %v593
      %v608 = vpack.c.b16 %v596, %v595
      %v609 = vpack.c.b16 %v598, %v597
      %v610 = vpack.c.b16 %v600, %v599
      %v611 = vpack.c.b16 %v602, %v601
      %v612 = vpack.c.b16 %v604, %v603
      %v614 = vsel %vm447, %v605, 0
      %v617 = vsel %vm447, %v606, 0
      %v620 = vsel %vm447, %v607, 0
      %v623 = vsel %vm447, %v608, 0
      %v626 = vsel %vm447, %v609, 0
      %v629 = vsel %vm447, %v610, 0
      %v632 = vsel %vm447, %v611, 0
      %v635 = vsel %vm447, %v612, 0
      %v638 = vsel %vm472, %v217, 0
      %640 = vmatprep.subr.bf16.mxu0 0
      %641 = vmatpush1.bf16.msra.mxu0 %v638
      %642 = vmatprep.subr.bf16.mxu0 0
      %643 = vmatpush1.bf16.msra.mxu0 0
      %644 = vmatprep.subr.bf16.mxu0 0
      %645 = vmatpush1.bf16.msra.mxu0 0
      %646 = vmatprep.subr.bf16.mxu0 0
      %647 = vmatpush1.bf16.msra.mxu0 0
      %648 = vmatprep.subr.bf16.mxu0 0
      %649 = vmatpush1.bf16.msra.mxu0 0
      %650 = vmatprep.subr.bf16.mxu0 0
      %651 = vmatpush1.bf16.msra.mxu0 0
      %652 = vmatprep.subr.bf16.mxu0 0
      %653 = vmatpush1.bf16.msra.mxu0 0
      %654 = vmatprep.subr.bf16.mxu0 0
      %655 = vmatpush1.bf16.msra.mxu0 0
      %656 = vmatprep.subr.bf16.mxu0 0
      %657 = vmatpush1.bf16.msra.mxu0 0
      %658 = vmatprep.subr.bf16.mxu0 0
      %659 = vmatpush1.bf16.msra.mxu0 0
      %660 = vmatprep.subr.bf16.mxu0 0
      %661 = vmatpush1.bf16.msra.mxu0 0
      %662 = vmatprep.subr.bf16.mxu0 0
      %663 = vmatpush1.bf16.msra.mxu0 0
      %664 = vmatprep.subr.bf16.mxu0 0
      %665 = vmatpush1.bf16.msra.mxu0 0
      %666 = vmatprep.subr.bf16.mxu0 0
      %667 = vmatpush1.bf16.msra.mxu0 0
      %668 = vmatprep.subr.bf16.mxu0 0
      %669 = vmatpush1.bf16.msra.mxu0 0
      %670 = vmatprep.subr.bf16.mxu0 0
      %671 = vmatpush1.bf16.msra.mxu0 0
      %672 = vmatprep.mubr.bf16.mxu0 0
      %673 = vmatmul.mubr.bf16.gmra.mrb[0].mxu0 %v614
      %v674 = vpop.f32.mrb[0].mxu0
      %v675 = vadd.f32 %v511, %v674
      %v676 = vpop.f32.mrb[0].mxu0
      %v677 = vpop.f32.mrb[0].mxu0
      %v678 = vadd.f32 %v514, %v677
      %v679 = vpop.f32.mrb[0].mxu0
      %680 = vmatprep.mubr.bf16.mxu0 0
      %681 = vmatmul.mubr.bf16.gmra.mrb[0].mxu0 %v617
      %v682 = vpop.f32.mrb[0].mxu0
      %v683 = vadd.f32 %v519, %v682
      %v684 = vpop.f32.mrb[0].mxu0
      %v685 = vpop.f32.mrb[0].mxu0
      %v686 = vadd.f32 %v522, %v685
      %v687 = vpop.f32.mrb[0].mxu0
      %688 = vmatprep.mubr.bf16.mxu0 0
      %689 = vmatmul.mubr.bf16.gmra.mrb[0].mxu0 %v620
      %v690 = vpop.f32.mrb[0].mxu0
      %v691 = vadd.f32 %v527, %v690
      %v692 = vpop.f32.mrb[0].mxu0
      %v693 = vpop.f32.mrb[0].mxu0
      %v694 = vadd.f32 %v530, %v693
      %v695 = vpop.f32.mrb[0].mxu0
      %696 = vmatprep.mubr.bf16.mxu0 0
      %697 = vmatmul.mubr.bf16.gmra.mrb[0].mxu0 %v623
      %v698 = vpop.f32.mrb[0].mxu0
      %v699 = vadd.f32 %v535, %v698
      %v700 = vpop.f32.mrb[0].mxu0
      %v701 = vpop.f32.mrb[0].mxu0
      %v702 = vadd.f32 %v538, %v701
      %v703 = vpop.f32.mrb[0].mxu0
      %704 = vmatprep.mubr.bf16.mxu0 0
      %705 = vmatmul.mubr.bf16.gmra.mrb[0].mxu0 %v626
      %v706 = vpop.f32.mrb[0].mxu0
      %v707 = vadd.f32 %v543, %v706
      %v708 = vpop.f32.mrb[0].mxu0
      %v709 = vpop.f32.mrb[0].mxu0
      %v710 = vadd.f32 %v546, %v709
      %v711 = vpop.f32.mrb[0].mxu0
      %712 = vmatprep.mubr.bf16.mxu0 0
      %713 = vmatmul.mubr.bf16.gmra.mrb[0].mxu0 %v629
      %v714 = vpop.f32.mrb[0].mxu0
      %v715 = vadd.f32 %v551, %v714
      %v716 = vpop.f32.mrb[0].mxu0
      %v717 = vpop.f32.mrb[0].mxu0
      %v718 = vadd.f32 %v554, %v717
      %v719 = vpop.f32.mrb[0].mxu0
      %720 = vmatprep.mubr.bf16.mxu0 0
      %721 = vmatmul.mubr.bf16.gmra.mrb[0].mxu0 %v632
      %v722 = vpop.f32.mrb[0].mxu0
      %v723 = vadd.f32 %v559, %v722
      %v724 = vpop.f32.mrb[0].mxu0
      %v725 = vpop.f32.mrb[0].mxu0
      %v726 = vadd.f32 %v562, %v725
      %v727 = vpop.f32.mrb[0].mxu0
      %728 = vmatprep.mubr.bf16.mxu0 0
      %729 = vmatmul.mubr.bf16.gmra.mrb[0].mxu0 %v635
      %v730 = vpop.f32.mrb[0].mxu0
      %v731 = vadd.f32 %v567, %v730
      %v732 = vpop.f32.mrb[0].mxu0
      %v733 = vpop.f32.mrb[0].mxu0
      %v734 = vadd.f32 %v570, %v733
      %v735 = vpop.f32.mrb[0].mxu0
      %736 = vdwg.mxu0
      %v737 = vld [vmem:[%s200] sm:$0xe]
      %v738 = vld [vmem:[%s200 + $0xc] sm:$0xe]
      %v739 = vld [vmem:[%s200 + $0x18] sm:$0xe]
      %v740 = vld [vmem:[%s200 + $0x24] sm:$0xe]
      %v741 = vld [vmem:[%s200 + $0x30] sm:$0xe]
      %v742 = vld [vmem:[%s200 + $0x3c] sm:$0xe]
      %v743 = vld [vmem:[%s200 + $0x48] sm:$0xe]
      %v744 = vld [vmem:[%s200 + $0x54] sm:$0xe]
      %vm761 = vcmask 1042432
      %vm762 = vcmask 1046532
      %vm763 = vmor %vm761, %vm762
      %v764 = vrot.slane %v737, 5
      %v765 = vrot.slane %v764, 4
      %v766 = vrot.slane %v202, 5
      %v767 = vsel %vm763, %v765, %v766
      %v768 = vrot.slane %v766, 4
      %v769 = vrot.slane %v218, 5
      %v770 = vsel %vm763, %v768, %v769
      %v771 = vrot.slane %v738, 5
      %v772 = vrot.slane %v771, 4
      %v773 = vrot.slane %v204, 5
      %v774 = vsel %vm763, %v772, %v773
      %v775 = vrot.slane %v773, 4
      %v776 = vrot.slane %v219, 5
      %v777 = vsel %vm763, %v775, %v776
      %v778 = vrot.slane %v739, 5
      %v779 = vrot.slane %v778, 4
      %v780 = vrot.slane %v206, 5
      %v781 = vsel %vm763, %v779, %v780
      %v782 = vrot.slane %v780, 4
      %v783 = vrot.slane %v220, 5
      %v784 = vsel %vm763, %v782, %v783
      %v785 = vrot.slane %v740, 5
      %v786 = vrot.slane %v785, 4
      %v787 = vrot.slane %v208, 5
      %v788 = vsel %vm763, %v786, %v787
      %v789 = vrot.slane %v787, 4
      %v790 = vrot.slane %v221, 5
      %v791 = vsel %vm763, %v789, %v790
      %v792 = vrot.slane %v741, 5
      %v793 = vrot.slane %v792, 4
      %v794 = vrot.slane %v210, 5
      %v795 = vsel %vm763, %v793, %v794
      %v796 = vrot.slane %v794, 4
      %v797 = vrot.slane %v222, 5
      %v798 = vsel %vm763, %v796, %v797
      %v799 = vrot.slane %v742, 5
      %v800 = vrot.slane %v799, 4
      %v801 = vrot.slane %v212, 5
      %v802 = vsel %vm763, %v800, %v801
      %v803 = vrot.slane %v801, 4
      %v804 = vrot.slane %v223, 5
      %v805 = vsel %vm763, %v803, %v804
      %v806 = vrot.slane %v743, 5
      %v807 = vrot.slane %v806, 4
      %v808 = vrot.slane %v214, 5
      %v809 = vsel %vm763, %v807, %v808
      %v810 = vrot.slane %v808, 4
      %v811 = vrot.slane %v224, 5
      %v812 = vsel %vm763, %v810, %v811
      %v813 = vrot.slane %v744, 5
      %v814 = vrot.slane %v813, 4
      %v815 = vrot.slane %v216, 5
      %v816 = vsel %vm763, %v814, %v815
      %v817 = vrot.slane %v815, 4
      %v818 = vrot.slane %v225, 5
      %v819 = vsel %vm763, %v817, %v818
      %s820 = scalar_lea.vmem %s1, 4
      %v821 = vld [vmem:[%s820] sm:$0x3]
      %v822 = vunpack.c.l.b16 %v767
      %v823 = vunpack.c.l.b16 %v770
      %v824 = vunpack.c.l.b16 %v774
      %v825 = vunpack.c.l.b16 %v777
      %v826 = vunpack.c.l.b16 %v781
      %v827 = vunpack.c.l.b16 %v784
      %v828 = vunpack.c.l.b16 %v788
      %v829 = vunpack.c.l.b16 %v791
      %v830 = vunpack.c.l.b16 %v795
      %v831 = vunpack.c.l.b16 %v798
      %v832 = vunpack.c.l.b16 %v802
      %v833 = vunpack.c.l.b16 %v805
      %v834 = vunpack.c.l.b16 %v809
      %v835 = vunpack.c.l.b16 %v812
      %v836 = vunpack.c.l.b16 %v816
      %v837 = vunpack.c.l.b16 %v819
      %v838 = vpack.c.b16 %v823, %v822
      %v839 = vpack.c.b16 %v825, %v824
      %v840 = vpack.c.b16 %v827, %v826
      %v841 = vpack.c.b16 %v829, %v828
      %v842 = vpack.c.b16 %v831, %v830
      %v843 = vpack.c.b16 %v833, %v832
      %v844 = vpack.c.b16 %v835, %v834
      %v845 = vpack.c.b16 %v837, %v836
      %v847 = vsel %vm447, %v838, 0
      %v850 = vsel %vm447, %v839, 0
      %v853 = vsel %vm447, %v840, 0
      %v856 = vsel %vm447, %v841, 0
      %v859 = vsel %vm447, %v842, 0
      %v862 = vsel %vm447, %v843, 0
      %v865 = vsel %vm447, %v844, 0
      %v868 = vsel %vm447, %v845, 0
      %v871 = vsel %vm472, %v821, 0
      %873 = vmatprep.subr.bf16.mxu0 0
      %874 = vmatpush1.bf16.msra.mxu0 %v871
      %875 = vmatprep.subr.bf16.mxu0 0
      %876 = vmatpush1.bf16.msra.mxu0 0
      %877 = vmatprep.subr.bf16.mxu0 0
      %878 = vmatpush1.bf16.msra.mxu0 0
      %879 = vmatprep.subr.bf16.mxu0 0
      %880 = vmatpush1.bf16.msra.mxu0 0
      %881 = vmatprep.subr.bf16.mxu0 0
      %882 = vmatpush1.bf16.msra.mxu0 0
      %883 = vmatprep.subr.bf16.mxu0 0
      %884 = vmatpush1.bf16.msra.mxu0 0
      %885 = vmatprep.subr.bf16.mxu0 0
      %886 = vmatpush1.bf16.msra.mxu0 0
      %887 = vmatprep.subr.bf16.mxu0 0
      %888 = vmatpush1.bf16.msra.mxu0 0
      %889 = vmatprep.subr.bf16.mxu0 0
      %890 = vmatpush1.bf16.msra.mxu0 0
      %891 = vmatprep.subr.bf16.mxu0 0
      %892 = vmatpush1.bf16.msra.mxu0 0
      %893 = vmatprep.subr.bf16.mxu0 0
      %894 = vmatpush1.bf16.msra.mxu0 0
      %895 = vmatprep.subr.bf16.mxu0 0
      %896 = vmatpush1.bf16.msra.mxu0 0
      %897 = vmatprep.subr.bf16.mxu0 0
      %898 = vmatpush1.bf16.msra.mxu0 0
      %899 = vmatprep.subr.bf16.mxu0 0
      %900 = vmatpush1.bf16.msra.mxu0 0
      %901 = vmatprep.subr.bf16.mxu0 0
      %902 = vmatpush1.bf16.msra.mxu0 0
      %903 = vmatprep.subr.bf16.mxu0 0
      %904 = vmatpush1.bf16.msra.mxu0 0
      %905 = vmatprep.mubr.bf16.mxu0 0
      %906 = vmatmul.mubr.bf16.gmra.mrb[0].mxu0 %v847
      %v907 = vpop.f32.mrb[0].mxu0
      %v908 = vadd.f32 0.0, %v907
      %v909 = vpop.f32.mrb[0].mxu0
      %v910 = vpop.f32.mrb[0].mxu0
      %v911 = vadd.f32 0.0, %v910
      %v912 = vpop.f32.mrb[0].mxu0
      %913 = vmatprep.mubr.bf16.mxu0 0
      %914 = vmatmul.mubr.bf16.gmra.mrb[0].mxu0 %v850
      %v915 = vpop.f32.mrb[0].mxu0
      %v916 = vadd.f32 0.0, %v915
      %v917 = vpop.f32.mrb[0].mxu0
      %v918 = vpop.f32.mrb[0].mxu0
      %v919 = vadd.f32 0.0, %v918
      %v920 = vpop.f32.mrb[0].mxu0
      %921 = vmatprep.mubr.bf16.mxu0 0
      %922 = vmatmul.mubr.bf16.gmra.mrb[0].mxu0 %v853
      %v923 = vpop.f32.mrb[0].mxu0
      %v924 = vadd.f32 0.0, %v923
      %v925 = vpop.f32.mrb[0].mxu0
      %v926 = vpop.f32.mrb[0].mxu0
      %v927 = vadd.f32 0.0, %v926
      %v928 = vpop.f32.mrb[0].mxu0
      %929 = vmatprep.mubr.bf16.mxu0 0
      %930 = vmatmul.mubr.bf16.gmra.mrb[0].mxu0 %v856
      %v931 = vpop.f32.mrb[0].mxu0
      %v932 = vadd.f32 0.0, %v931
      %v933 = vpop.f32.mrb[0].mxu0
      %v934 = vpop.f32.mrb[0].mxu0
      %v935 = vadd.f32 0.0, %v934
      %v936 = vpop.f32.mrb[0].mxu0
      %937 = vmatprep.mubr.bf16.mxu0 0
      %938 = vmatmul.mubr.bf16.gmra.mrb[0].mxu0 %v859
      %v939 = vpop.f32.mrb[0].mxu0
      %v940 = vadd.f32 0.0, %v939
      %v941 = vpop.f32.mrb[0].mxu0
      %v942 = vpop.f32.mrb[0].mxu0
      %v943 = vadd.f32 0.0, %v942
      %v944 = vpop.f32.mrb[0].mxu0
      %945 = vmatprep.mubr.bf16.mxu0 0
      %946 = vmatmul.mubr.bf16.gmra.mrb[0].mxu0 %v862
      %v947 = vpop.f32.mrb[0].mxu0
      %v948 = vadd.f32 0.0, %v947
      %v949 = vpop.f32.mrb[0].mxu0
      %v950 = vpop.f32.mrb[0].mxu0
      %v951 = vadd.f32 0.0, %v950
      %v952 = vpop.f32.mrb[0].mxu0
      %953 = vmatprep.mubr.bf16.mxu0 0
      %954 = vmatmul.mubr.bf16.gmra.mrb[0].mxu0 %v865
      %v955 = vpop.f32.mrb[0].mxu0
      %v956 = vadd.f32 0.0, %v955
      %v957 = vpop.f32.mrb[0].mxu0
      %v958 = vpop.f32.mrb[0].mxu0
      %v959 = vadd.f32 0.0, %v958
      %v960 = vpop.f32.mrb[0].mxu0
      %961 = vmatprep.mubr.bf16.mxu0 0
      %962 = vmatmul.mubr.bf16.gmra.mrb[0].mxu0 %v868
      %v963 = vpop.f32.mrb[0].mxu0
      %v964 = vadd.f32 0.0, %v963
      %v965 = vpop.f32.mrb[0].mxu0
      %v966 = vpop.f32.mrb[0].mxu0
      %v967 = vadd.f32 0.0, %v966
      %v968 = vpop.f32.mrb[0].mxu0
      %969 = vdwg.mxu0
      %v970 = vadd.f32 %v675, %v908
      %v971 = vadd.f32 %v678, %v911
      %v972 = vadd.f32 %v683, %v916
      %v973 = vadd.f32 %v686, %v919
      %v974 = vadd.f32 %v691, %v924
      %v975 = vadd.f32 %v694, %v927
      %v976 = vadd.f32 %v699, %v932
      %v977 = vadd.f32 %v702, %v935
      %v978 = vadd.f32 %v707, %v940
      %v979 = vadd.f32 %v710, %v943
      %v980 = vadd.f32 %v715, %v948
      %v981 = vadd.f32 %v718, %v951
      %v982 = vadd.f32 %v723, %v956
      %v983 = vadd.f32 %v726, %v959
      %v984 = vadd.f32 %v731, %v964
      %v985 = vadd.f32 %v734, %v967
      %s986 = sadd.s32 %s197, 1
      %s987 = smul.u32 %s986, 3
      %s988 = smul.addr %s987, 4
      %s989 = scalar_lea.vmem %s184, %s988
      %v990 = vld [vmem:[%s989] sm:$0xf]
      %v991 = vld [vmem:[%s989 + $0x4] sm:$0xf]
      %v992 = vld [vmem:[%s989 + $0xc] sm:$0xf]
      %v993 = vld [vmem:[%s989 + $0x10] sm:$0xf]
      %v994 = vld [vmem:[%s989 + $0x18] sm:$0xf]
      %v995 = vld [vmem:[%s989 + $0x1c] sm:$0xf]
      %v996 = vld [vmem:[%s989 + $0x24] sm:$0xf]
      %v997 = vld [vmem:[%s989 + $0x28] sm:$0xf]
      %v998 = vld [vmem:[%s989 + $0x30] sm:$0xf]
      %v999 = vld [vmem:[%s989 + $0x34] sm:$0xf]
      %v1000 = vld [vmem:[%s989 + $0x3c] sm:$0xf]
      %v1001 = vld [vmem:[%s989 + $0x40] sm:$0xf]
      %v1002 = vld [vmem:[%s989 + $0x48] sm:$0xf]
      %v1003 = vld [vmem:[%s989 + $0x4c] sm:$0xf]
      %v1004 = vld [vmem:[%s989 + $0x54] sm:$0xf]
      %v1005 = vld [vmem:[%s989 + $0x58] sm:$0xf]
      %s1006 = scalar_lea.vmem %s1, 6
      %v1007 = vld [vmem:[%s1006] sm:$0x3]
      %v1024 = vunpack.c.l.b16 %v990
      %v1025 = vunpack.c.l.b16 %v991
      %v1026 = vunpack.c.l.b16 %v992
      %v1027 = vunpack.c.l.b16 %v993
      %v1028 = vunpack.c.l.b16 %v994
      %v1029 = vunpack.c.l.b16 %v995
      %v1030 = vunpack.c.l.b16 %v996
      %v1031 = vunpack.c.l.b16 %v997
      %v1032 = vunpack.c.l.b16 %v998
      %v1033 = vunpack.c.l.b16 %v999
      %v1034 = vunpack.c.l.b16 %v1000
      %v1035 = vunpack.c.l.b16 %v1001
      %v1036 = vunpack.c.l.b16 %v1002
      %v1037 = vunpack.c.l.b16 %v1003
      %v1038 = vunpack.c.l.b16 %v1004
      %v1039 = vunpack.c.l.b16 %v1005
      %v1040 = vpack.c.b16 %v1025, %v1024
      %v1041 = vpack.c.b16 %v1027, %v1026
      %v1042 = vpack.c.b16 %v1029, %v1028
      %v1043 = vpack.c.b16 %v1031, %v1030
      %v1044 = vpack.c.b16 %v1033, %v1032
      %v1045 = vpack.c.b16 %v1035, %v1034
      %v1046 = vpack.c.b16 %v1037, %v1036
      %v1047 = vpack.c.b16 %v1039, %v1038
      %v1049 = vsel %vm447, %v1040, 0
      %v1052 = vsel %vm447, %v1041, 0
      %v1055 = vsel %vm447, %v1042, 0
      %v1058 = vsel %vm447, %v1043, 0
      %v1061 = vsel %vm447, %v1044, 0
      %v1064 = vsel %vm447, %v1045, 0
      %v1067 = vsel %vm447, %v1046, 0
      %v1070 = vsel %vm447, %v1047, 0
      %v1073 = vsel %vm472, %v1007, 0
      %1075 = vmatprep.subr.bf16.mxu0 0
      %1076 = vmatpush1.bf16.msra.mxu0 %v1073
      %1077 = vmatprep.subr.bf16.mxu0 0
      %1078 = vmatpush1.bf16.msra.mxu0 0
      %1079 = vmatprep.subr.bf16.mxu0 0
      %1080 = vmatpush1.bf16.msra.mxu0 0
      %1081 = vmatprep.subr.bf16.mxu0 0
      %1082 = vmatpush1.bf16.msra.mxu0 0
      %1083 = vmatprep.subr.bf16.mxu0 0
      %1084 = vmatpush1.bf16.msra.mxu0 0
      %1085 = vmatprep.subr.bf16.mxu0 0
      %1086 = vmatpush1.bf16.msra.mxu0 0
      %1087 = vmatprep.subr.bf16.mxu0 0
      %1088 = vmatpush1.bf16.msra.mxu0 0
      %1089 = vmatprep.subr.bf16.mxu0 0
      %1090 = vmatpush1.bf16.msra.mxu0 0
      %1091 = vmatprep.subr.bf16.mxu0 0
      %1092 = vmatpush1.bf16.msra.mxu0 0
      %1093 = vmatprep.subr.bf16.mxu0 0
      %1094 = vmatpush1.bf16.msra.mxu0 0
      %1095 = vmatprep.subr.bf16.mxu0 0
      %1096 = vmatpush1.bf16.msra.mxu0 0
      %1097 = vmatprep.subr.bf16.mxu0 0
      %1098 = vmatpush1.bf16.msra.mxu0 0
      %1099 = vmatprep.subr.bf16.mxu0 0
      %1100 = vmatpush1.bf16.msra.mxu0 0
      %1101 = vmatprep.subr.bf16.mxu0 0
      %1102 = vmatpush1.bf16.msra.mxu0 0
      %1103 = vmatprep.subr.bf16.mxu0 0
      %1104 = vmatpush1.bf16.msra.mxu0 0
      %1105 = vmatprep.subr.bf16.mxu0 0
      %1106 = vmatpush1.bf16.msra.mxu0 0
      %1107 = vmatprep.mubr.bf16.mxu0 0
      %1108 = vmatmul.mubr.bf16.gmra.mrb[0].mxu0 %v1049
      %v1109 = vpop.f32.mrb[0].mxu0
      %v1110 = vadd.f32 0.0, %v1109
      %v1111 = vpop.f32.mrb[0].mxu0
      %v1112 = vpop.f32.mrb[0].mxu0
      %v1113 = vadd.f32 0.0, %v1112
      %v1114 = vpop.f32.mrb[0].mxu0
      %1115 = vmatprep.mubr.bf16.mxu0 0
      %1116 = vmatmul.mubr.bf16.gmra.mrb[0].mxu0 %v1052
      %v1117 = vpop.f32.mrb[0].mxu0
      %v1118 = vadd.f32 0.0, %v1117
      %v1119 = vpop.f32.mrb[0].mxu0
      %v1120 = vpop.f32.mrb[0].mxu0
      %v1121 = vadd.f32 0.0, %v1120
      %v1122 = vpop.f32.mrb[0].mxu0
      %1123 = vmatprep.mubr.bf16.mxu0 0
      %1124 = vmatmul.mubr.bf16.gmra.mrb[0].mxu0 %v1055
      %v1125 = vpop.f32.mrb[0].mxu0
      %v1126 = vadd.f32 0.0, %v1125
      %v1127 = vpop.f32.mrb[0].mxu0
      %v1128 = vpop.f32.mrb[0].mxu0
      %v1129 = vadd.f32 0.0, %v1128
      %v1130 = vpop.f32.mrb[0].mxu0
      %1131 = vmatprep.mubr.bf16.mxu0 0
      %1132 = vmatmul.mubr.bf16.gmra.mrb[0].mxu0 %v1058
      %v1133 = vpop.f32.mrb[0].mxu0
      %v1134 = vadd.f32 0.0, %v1133
      %v1135 = vpop.f32.mrb[0].mxu0
      %v1136 = vpop.f32.mrb[0].mxu0
      %v1137 = vadd.f32 0.0, %v1136
      %v1138 = vpop.f32.mrb[0].mxu0
      %1139 = vmatprep.mubr.bf16.mxu0 0
      %1140 = vmatmul.mubr.bf16.gmra.mrb[0].mxu0 %v1061
      %v1141 = vpop.f32.mrb[0].mxu0
      %v1142 = vadd.f32 0.0, %v1141
      %v1143 = vpop.f32.mrb[0].mxu0
      %v1144 = vpop.f32.mrb[0].mxu0
      %v1145 = vadd.f32 0.0, %v1144
      %v1146 = vpop.f32.mrb[0].mxu0
      %1147 = vmatprep.mubr.bf16.mxu0 0
      %1148 = vmatmul.mubr.bf16.gmra.mrb[0].mxu0 %v1064
      %v1149 = vpop.f32.mrb[0].mxu0
      %v1150 = vadd.f32 0.0, %v1149
      %v1151 = vpop.f32.mrb[0].mxu0
      %v1152 = vpop.f32.mrb[0].mxu0
      %v1153 = vadd.f32 0.0, %v1152
      %v1154 = vpop.f32.mrb[0].mxu0
      %1155 = vmatprep.mubr.bf16.mxu0 0
      %1156 = vmatmul.mubr.bf16.gmra.mrb[0].mxu0 %v1067
      %v1157 = vpop.f32.mrb[0].mxu0
      %v1158 = vadd.f32 0.0, %v1157
      %v1159 = vpop.f32.mrb[0].mxu0
      %v1160 = vpop.f32.mrb[0].mxu0
      %v1161 = vadd.f32 0.0, %v1160
      %v1162 = vpop.f32.mrb[0].mxu0
      %1163 = vmatprep.mubr.bf16.mxu0 0
      %1164 = vmatmul.mubr.bf16.gmra.mrb[0].mxu0 %v1070
      %v1165 = vpop.f32.mrb[0].mxu0
      %v1166 = vadd.f32 0.0, %v1165
      %v1167 = vpop.f32.mrb[0].mxu0
      %v1168 = vpop.f32.mrb[0].mxu0
      %v1169 = vadd.f32 0.0, %v1168
      %v1170 = vpop.f32.mrb[0].mxu0
      %1171 = vdwg.mxu0
      %v1172 = vadd.f32 %v970, %v1110
      %v1173 = vadd.f32 %v971, %v1113
      %v1174 = vadd.f32 %v972, %v1118
      %v1175 = vadd.f32 %v973, %v1121
      %v1176 = vadd.f32 %v974, %v1126
      %v1177 = vadd.f32 %v975, %v1129
      %v1178 = vadd.f32 %v976, %v1134
      %v1179 = vadd.f32 %v977, %v1137
      %v1180 = vadd.f32 %v978, %v1142
      %v1181 = vadd.f32 %v979, %v1145
      %v1182 = vadd.f32 %v980, %v1150
      %v1183 = vadd.f32 %v981, %v1153
      %v1184 = vadd.f32 %v982, %v1158
      %v1185 = vadd.f32 %v983, %v1161
      %v1186 = vadd.f32 %v984, %v1166
      %v1187 = vadd.f32 %v985, %v1169
      %v1188 = vld [vmem:[%s989] sm:$0xf]
      %v1189 = vld [vmem:[%s989 + $0x4] sm:$0xf]
      %v1190 = vld [vmem:[%s989 + $0x8] sm:$0x1]
      %v1191 = vld [vmem:[%s989 + $0xc] sm:$0xf]
      %v1192 = vld [vmem:[%s989 + $0x10] sm:$0xf]
      %v1193 = vld [vmem:[%s989 + $0x14] sm:$0x1]
      %v1194 = vld [vmem:[%s989 + $0x18] sm:$0xf]
      %v1195 = vld [vmem:[%s989 + $0x1c] sm:$0xf]
      %v1196 = vld [vmem:[%s989 + $0x20] sm:$0x1]
      %v1197 = vld [vmem:[%s989 + $0x24] sm:$0xf]
      %v1198 = vld [vmem:[%s989 + $0x28] sm:$0xf]
      %v1199 = vld [vmem:[%s989 + $0x2c] sm:$0x1]
      %v1200 = vld [vmem:[%s989 + $0x30] sm:$0xf]
      %v1201 = vld [vmem:[%s989 + $0x34] sm:$0xf]
      %v1202 = vld [vmem:[%s989 + $0x38] sm:$0x1]
      %v1203 = vld [vmem:[%s989 + $0x3c] sm:$0xf]
      %v1204 = vld [vmem:[%s989 + $0x40] sm:$0xf]
      %v1205 = vld [vmem:[%s989 + $0x44] sm:$0x1]
      %v1206 = vld [vmem:[%s989 + $0x48] sm:$0xf]
      %v1207 = vld [vmem:[%s989 + $0x4c] sm:$0xf]
      %v1208 = vld [vmem:[%s989 + $0x50] sm:$0x1]
      %v1209 = vld [vmem:[%s989 + $0x54] sm:$0xf]
      %v1210 = vld [vmem:[%s989 + $0x58] sm:$0xf]
      %v1211 = vld [vmem:[%s989 + $0x5c] sm:$0x1]
      %v1213 = vshrl.u32 %v1188, 16
      %v1215 = vrot.slane %v1213, 4
      %v1216 = vshll.u32 %v1188, 16
      %v1218 = vrot.slane %v1216, 5
      %v1219 = vor.u32 %v1215, %v1218
      %v1220 = vrot.slane %v1219, 4
      %v1222 = vshll.u32 %v1189, 16
      %v1224 = vrot.slane %v1222, 5
      %v1225 = vsel %vm228, %v1220, %v1224
      %v1226 = vshrl.u32 %v1189, 16
      %v1228 = vrot.slane %v1226, 4
      %v1229 = vor.u32 %v1228, %v1224
      %v1230 = vrot.slane %v1229, 4
      %v1232 = vshll.u32 %v1190, 16
      %v1234 = vrot.slane %v1232, 5
      %v1235 = vsel %vm228, %v1230, %v1234
      %v1237 = vshrl.u32 %v1191, 16
      %v1239 = vrot.slane %v1237, 4
      %v1240 = vshll.u32 %v1191, 16
      %v1242 = vrot.slane %v1240, 5
      %v1243 = vor.u32 %v1239, %v1242
      %v1244 = vrot.slane %v1243, 4
      %v1246 = vshll.u32 %v1192, 16
      %v1248 = vrot.slane %v1246, 5
      %v1249 = vsel %vm228, %v1244, %v1248
      %v1250 = vshrl.u32 %v1192, 16
      %v1252 = vrot.slane %v1250, 4
      %v1253 = vor.u32 %v1252, %v1248
      %v1254 = vrot.slane %v1253, 4
      %v1256 = vshll.u32 %v1193, 16
      %v1258 = vrot.slane %v1256, 5
      %v1259 = vsel %vm228, %v1254, %v1258
      %v1261 = vshrl.u32 %v1194, 16
      %v1263 = vrot.slane %v1261, 4
      %v1264 = vshll.u32 %v1194, 16
      %v1266 = vrot.slane %v1264, 5
      %v1267 = vor.u32 %v1263, %v1266
      %v1268 = vrot.slane %v1267, 4
      %v1270 = vshll.u32 %v1195, 16
      %v1272 = vrot.slane %v1270, 5
      %v1273 = vsel %vm228, %v1268, %v1272
      %v1274 = vshrl.u32 %v1195, 16
      %v1276 = vrot.slane %v1274, 4
      %v1277 = vor.u32 %v1276, %v1272
      %v1278 = vrot.slane %v1277, 4
      %v1280 = vshll.u32 %v1196, 16
      %v1282 = vrot.slane %v1280, 5
      %v1283 = vsel %vm228, %v1278, %v1282
      %v1285 = vshrl.u32 %v1197, 16
      %v1287 = vrot.slane %v1285, 4
      %v1288 = vshll.u32 %v1197, 16
      %v1290 = vrot.slane %v1288, 5
      %v1291 = vor.u32 %v1287, %v1290
      %v1292 = vrot.slane %v1291, 4
      %v1294 = vshll.u32 %v1198, 16
      %v1296 = vrot.slane %v1294, 5
      %v1297 = vsel %vm228, %v1292, %v1296
      %v1298 = vshrl.u32 %v1198, 16
      %v1300 = vrot.slane %v1298, 4
      %v1301 = vor.u32 %v1300, %v1296
      %v1302 = vrot.slane %v1301, 4
      %v1304 = vshll.u32 %v1199, 16
      %v1306 = vrot.slane %v1304, 5
      %v1307 = vsel %vm228, %v1302, %v1306
      %v1309 = vshrl.u32 %v1200, 16
      %v1311 = vrot.slane %v1309, 4
      %v1312 = vshll.u32 %v1200, 16
      %v1314 = vrot.slane %v1312, 5
      %v1315 = vor.u32 %v1311, %v1314
      %v1316 = vrot.slane %v1315, 4
      %v1318 = vshll.u32 %v1201, 16
      %v1320 = vrot.slane %v1318, 5
      %v1321 = vsel %vm228, %v1316, %v1320
      %v1322 = vshrl.u32 %v1201, 16
      %v1324 = vrot.slane %v1322, 4
      %v1325 = vor.u32 %v1324, %v1320
      %v1326 = vrot.slane %v1325, 4
      %v1328 = vshll.u32 %v1202, 16
      %v1330 = vrot.slane %v1328, 5
      %v1331 = vsel %vm228, %v1326, %v1330
      %v1333 = vshrl.u32 %v1203, 16
      %v1335 = vrot.slane %v1333, 4
      %v1336 = vshll.u32 %v1203, 16
      %v1338 = vrot.slane %v1336, 5
      %v1339 = vor.u32 %v1335, %v1338
      %v1340 = vrot.slane %v1339, 4
      %v1342 = vshll.u32 %v1204, 16
      %v1344 = vrot.slane %v1342, 5
      %v1345 = vsel %vm228, %v1340, %v1344
      %v1346 = vshrl.u32 %v1204, 16
      %v1348 = vrot.slane %v1346, 4
      %v1349 = vor.u32 %v1348, %v1344
      %v1350 = vrot.slane %v1349, 4
      %v1352 = vshll.u32 %v1205, 16
      %v1354 = vrot.slane %v1352, 5
      %v1355 = vsel %vm228, %v1350, %v1354
      %v1357 = vshrl.u32 %v1206, 16
      %v1359 = vrot.slane %v1357, 4
      %v1360 = vshll.u32 %v1206, 16
      %v1362 = vrot.slane %v1360, 5
      %v1363 = vor.u32 %v1359, %v1362
      %v1364 = vrot.slane %v1363, 4
      %v1366 = vshll.u32 %v1207, 16
      %v1368 = vrot.slane %v1366, 5
      %v1369 = vsel %vm228, %v1364, %v1368
      %v1370 = vshrl.u32 %v1207, 16
      %v1372 = vrot.slane %v1370, 4
      %v1373 = vor.u32 %v1372, %v1368
      %v1374 = vrot.slane %v1373, 4
      %v1376 = vshll.u32 %v1208, 16
      %v1378 = vrot.slane %v1376, 5
      %v1379 = vsel %vm228, %v1374, %v1378
      %v1381 = vshrl.u32 %v1209, 16
      %v1383 = vrot.slane %v1381, 4
      %v1384 = vshll.u32 %v1209, 16
      %v1386 = vrot.slane %v1384, 5
      %v1387 = vor.u32 %v1383, %v1386
      %v1388 = vrot.slane %v1387, 4
      %v1390 = vshll.u32 %v1210, 16
      %v1392 = vrot.slane %v1390, 5
      %v1393 = vsel %vm228, %v1388, %v1392
      %v1394 = vshrl.u32 %v1210, 16
      %v1396 = vrot.slane %v1394, 4
      %v1397 = vor.u32 %v1396, %v1392
      %v1398 = vrot.slane %v1397, 4
      %v1400 = vshll.u32 %v1211, 16
      %v1402 = vrot.slane %v1400, 5
      %v1403 = vsel %vm228, %v1398, %v1402
      %s1404 = scalar_lea.vmem %s1, 8
      %v1405 = vld [vmem:[%s1404] sm:$0x3]
      %v1406 = vunpack.c.l.b16 %v1225
      %v1407 = vunpack.c.l.b16 %v1235
      %v1408 = vunpack.c.l.b16 %v1249
      %v1409 = vunpack.c.l.b16 %v1259
      %v1410 = vunpack.c.l.b16 %v1273
      %v1411 = vunpack.c.l.b16 %v1283
      %v1412 = vunpack.c.l.b16 %v1297
      %v1413 = vunpack.c.l.b16 %v1307
      %v1414 = vunpack.c.l.b16 %v1321
      %v1415 = vunpack.c.l.b16 %v1331
      %v1416 = vunpack.c.l.b16 %v1345
      %v1417 = vunpack.c.l.b16 %v1355
      %v1418 = vunpack.c.l.b16 %v1369
      %v1419 = vunpack.c.l.b16 %v1379
      %v1420 = vunpack.c.l.b16 %v1393
      %v1421 = vunpack.c.l.b16 %v1403
      %v1422 = vpack.c.b16 %v1407, %v1406
      %v1423 = vpack.c.b16 %v1409, %v1408
      %v1424 = vpack.c.b16 %v1411, %v1410
      %v1425 = vpack.c.b16 %v1413, %v1412
      %v1426 = vpack.c.b16 %v1415, %v1414
      %v1427 = vpack.c.b16 %v1417, %v1416
      %v1428 = vpack.c.b16 %v1419, %v1418
      %v1429 = vpack.c.b16 %v1421, %v1420
      %v1431 = vsel %vm447, %v1422, 0
      %v1434 = vsel %vm447, %v1423, 0
      %v1437 = vsel %vm447, %v1424, 0
      %v1440 = vsel %vm447, %v1425, 0
      %v1443 = vsel %vm447, %v1426, 0
      %v1446 = vsel %vm447, %v1427, 0
      %v1449 = vsel %vm447, %v1428, 0
      %v1452 = vsel %vm447, %v1429, 0
      %v1455 = vsel %vm472, %v1405, 0
      %1457 = vmatprep.subr.bf16.mxu0 0
      %1458 = vmatpush1.bf16.msra.mxu0 %v1455
      %1459 = vmatprep.subr.bf16.mxu0 0
      %1460 = vmatpush1.bf16.msra.mxu0 0
      %1461 = vmatprep.subr.bf16.mxu0 0
      %1462 = vmatpush1.bf16.msra.mxu0 0
      %1463 = vmatprep.subr.bf16.mxu0 0
      %1464 = vmatpush1.bf16.msra.mxu0 0
      %1465 = vmatprep.subr.bf16.mxu0 0
      %1466 = vmatpush1.bf16.msra.mxu0 0
      %1467 = vmatprep.subr.bf16.mxu0 0
      %1468 = vmatpush1.bf16.msra.mxu0 0
      %1469 = vmatprep.subr.bf16.mxu0 0
      %1470 = vmatpush1.bf16.msra.mxu0 0
      %1471 = vmatprep.subr.bf16.mxu0 0
      %1472 = vmatpush1.bf16.msra.mxu0 0
      %1473 = vmatprep.subr.bf16.mxu0 0
      %1474 = vmatpush1.bf16.msra.mxu0 0
      %1475 = vmatprep.subr.bf16.mxu0 0
      %1476 = vmatpush1.bf16.msra.mxu0 0
      %1477 = vmatprep.subr.bf16.mxu0 0
      %1478 = vmatpush1.bf16.msra.mxu0 0
      %1479 = vmatprep.subr.bf16.mxu0 0
      %1480 = vmatpush1.bf16.msra.mxu0 0
      %1481 = vmatprep.subr.bf16.mxu0 0
      %1482 = vmatpush1.bf16.msra.mxu0 0
      %1483 = vmatprep.subr.bf16.mxu0 0
      %1484 = vmatpush1.bf16.msra.mxu0 0
      %1485 = vmatprep.subr.bf16.mxu0 0
      %1486 = vmatpush1.bf16.msra.mxu0 0
      %1487 = vmatprep.subr.bf16.mxu0 0
      %1488 = vmatpush1.bf16.msra.mxu0 0
      %1489 = vmatprep.mubr.bf16.mxu0 0
      %1490 = vmatmul.mubr.bf16.gmra.mrb[0].mxu0 %v1431
      %v1491 = vpop.f32.mrb[0].mxu0
      %v1492 = vadd.f32 0.0, %v1491
      %v1493 = vpop.f32.mrb[0].mxu0
      %v1494 = vpop.f32.mrb[0].mxu0
      %v1495 = vadd.f32 0.0, %v1494
      %v1496 = vpop.f32.mrb[0].mxu0
      %1497 = vmatprep.mubr.bf16.mxu0 0
      %1498 = vmatmul.mubr.bf16.gmra.mrb[0].mxu0 %v1434
      %v1499 = vpop.f32.mrb[0].mxu0
      %v1500 = vadd.f32 0.0, %v1499
      %v1501 = vpop.f32.mrb[0].mxu0
      %v1502 = vpop.f32.mrb[0].mxu0
      %v1503 = vadd.f32 0.0, %v1502
      %v1504 = vpop.f32.mrb[0].mxu0
      %1505 = vmatprep.mubr.bf16.mxu0 0
      %1506 = vmatmul.mubr.bf16.gmra.mrb[0].mxu0 %v1437
      %v1507 = vpop.f32.mrb[0].mxu0
      %v1508 = vadd.f32 0.0, %v1507
      %v1509 = vpop.f32.mrb[0].mxu0
      %v1510 = vpop.f32.mrb[0].mxu0
      %v1511 = vadd.f32 0.0, %v1510
      %v1512 = vpop.f32.mrb[0].mxu0
      %1513 = vmatprep.mubr.bf16.mxu0 0
      %1514 = vmatmul.mubr.bf16.gmra.mrb[0].mxu0 %v1440
      %v1515 = vpop.f32.mrb[0].mxu0
      %v1516 = vadd.f32 0.0, %v1515
      %v1517 = vpop.f32.mrb[0].mxu0
      %v1518 = vpop.f32.mrb[0].mxu0
      %v1519 = vadd.f32 0.0, %v1518
      %v1520 = vpop.f32.mrb[0].mxu0
      %1521 = vmatprep.mubr.bf16.mxu0 0
      %1522 = vmatmul.mubr.bf16.gmra.mrb[0].mxu0 %v1443
      %v1523 = vpop.f32.mrb[0].mxu0
      %v1524 = vadd.f32 0.0, %v1523
      %v1525 = vpop.f32.mrb[0].mxu0
      %v1526 = vpop.f32.mrb[0].mxu0
      %v1527 = vadd.f32 0.0, %v1526
      %v1528 = vpop.f32.mrb[0].mxu0
      %1529 = vmatprep.mubr.bf16.mxu0 0
      %1530 = vmatmul.mubr.bf16.gmra.mrb[0].mxu0 %v1446
      %v1531 = vpop.f32.mrb[0].mxu0
      %v1532 = vadd.f32 0.0, %v1531
      %v1533 = vpop.f32.mrb[0].mxu0
      %v1534 = vpop.f32.mrb[0].mxu0
      %v1535 = vadd.f32 0.0, %v1534
      %v1536 = vpop.f32.mrb[0].mxu0
      %1537 = vmatprep.mubr.bf16.mxu0 0
      %1538 = vmatmul.mubr.bf16.gmra.mrb[0].mxu0 %v1449
      %v1539 = vpop.f32.mrb[0].mxu0
      %v1540 = vadd.f32 0.0, %v1539
      %v1541 = vpop.f32.mrb[0].mxu0
      %v1542 = vpop.f32.mrb[0].mxu0
      %v1543 = vadd.f32 0.0, %v1542
      %v1544 = vpop.f32.mrb[0].mxu0
      %1545 = vmatprep.mubr.bf16.mxu0 0
      %1546 = vmatmul.mubr.bf16.gmra.mrb[0].mxu0 %v1452
      %v1547 = vpop.f32.mrb[0].mxu0
      %v1548 = vadd.f32 0.0, %v1547
      %v1549 = vpop.f32.mrb[0].mxu0
      %v1550 = vpop.f32.mrb[0].mxu0
      %v1551 = vadd.f32 0.0, %v1550
      %v1552 = vpop.f32.mrb[0].mxu0
      %1553 = vdwg.mxu0
      %v1554 = vadd.f32 %v1172, %v1492
      %v1555 = vadd.f32 %v1173, %v1495
      %v1556 = vadd.f32 %v1174, %v1500
      %v1557 = vadd.f32 %v1175, %v1503
      %v1558 = vadd.f32 %v1176, %v1508
      %v1559 = vadd.f32 %v1177, %v1511
      %v1560 = vadd.f32 %v1178, %v1516
      %v1561 = vadd.f32 %v1179, %v1519
      %v1562 = vadd.f32 %v1180, %v1524
      %v1563 = vadd.f32 %v1181, %v1527
      %v1564 = vadd.f32 %v1182, %v1532
      %v1565 = vadd.f32 %v1183, %v1535
      %v1566 = vadd.f32 %v1184, %v1540
      %v1567 = vadd.f32 %v1185, %v1543
      %v1568 = vadd.f32 %v1186, %v1548
      %v1569 = vadd.f32 %v1187, %v1551
      %v1570 = vld [vmem:[%s989] sm:$0xe]
      %v1571 = vld [vmem:[%s989 + $0xc] sm:$0xe]
      %v1572 = vld [vmem:[%s989 + $0x18] sm:$0xe]
      %v1573 = vld [vmem:[%s989 + $0x24] sm:$0xe]
      %v1574 = vld [vmem:[%s989 + $0x30] sm:$0xe]
      %v1575 = vld [vmem:[%s989 + $0x3c] sm:$0xe]
      %v1576 = vld [vmem:[%s989 + $0x48] sm:$0xe]
      %v1577 = vld [vmem:[%s989 + $0x54] sm:$0xe]
      %v1602 = vrot.slane %v1570, 5
      %v1603 = vrot.slane %v1602, 4
      %v1604 = vrot.slane %v1189, 5
      %v1605 = vsel %vm763, %v1603, %v1604
      %v1606 = vrot.slane %v1604, 4
      %v1607 = vrot.slane %v1190, 5
      %v1608 = vsel %vm763, %v1606, %v1607
      %v1609 = vrot.slane %v1571, 5
      %v1610 = vrot.slane %v1609, 4
      %v1611 = vrot.slane %v1192, 5
      %v1612 = vsel %vm763, %v1610, %v1611
      %v1613 = vrot.slane %v1611, 4
      %v1614 = vrot.slane %v1193, 5
      %v1615 = vsel %vm763, %v1613, %v1614
      %v1616 = vrot.slane %v1572, 5
      %v1617 = vrot.slane %v1616, 4
      %v1618 = vrot.slane %v1195, 5
      %v1619 = vsel %vm763, %v1617, %v1618
      %v1620 = vrot.slane %v1618, 4
      %v1621 = vrot.slane %v1196, 5
      %v1622 = vsel %vm763, %v1620, %v1621
      %v1623 = vrot.slane %v1573, 5
      %v1624 = vrot.slane %v1623, 4
      %v1625 = vrot.slane %v1198, 5
      %v1626 = vsel %vm763, %v1624, %v1625
      %v1627 = vrot.slane %v1625, 4
      %v1628 = vrot.slane %v1199, 5
      %v1629 = vsel %vm763, %v1627, %v1628
      %v1630 = vrot.slane %v1574, 5
      %v1631 = vrot.slane %v1630, 4
      %v1632 = vrot.slane %v1201, 5
      %v1633 = vsel %vm763, %v1631, %v1632
      %v1634 = vrot.slane %v1632, 4
      %v1635 = vrot.slane %v1202, 5
      %v1636 = vsel %vm763, %v1634, %v1635
      %v1637 = vrot.slane %v1575, 5
      %v1638 = vrot.slane %v1637, 4
      %v1639 = vrot.slane %v1204, 5
      %v1640 = vsel %vm763, %v1638, %v1639
      %v1641 = vrot.slane %v1639, 4
      %v1642 = vrot.slane %v1205, 5
      %v1643 = vsel %vm763, %v1641, %v1642
      %v1644 = vrot.slane %v1576, 5
      %v1645 = vrot.slane %v1644, 4
      %v1646 = vrot.slane %v1207, 5
      %v1647 = vsel %vm763, %v1645, %v1646
      %v1648 = vrot.slane %v1646, 4
      %v1649 = vrot.slane %v1208, 5
      %v1650 = vsel %vm763, %v1648, %v1649
      %v1651 = vrot.slane %v1577, 5
      %v1652 = vrot.slane %v1651, 4
      %v1653 = vrot.slane %v1210, 5
      %v1654 = vsel %vm763, %v1652, %v1653
      %v1655 = vrot.slane %v1653, 4
      %v1656 = vrot.slane %v1211, 5
      %v1657 = vsel %vm763, %v1655, %v1656
      %s1658 = scalar_lea.vmem %s1, 10
      %v1659 = vld [vmem:[%s1658] sm:$0x3]
      %v1660 = vunpack.c.l.b16 %v1605
      %v1661 = vunpack.c.l.b16 %v1608
      %v1662 = vunpack.c.l.b16 %v1612
      %v1663 = vunpack.c.l.b16 %v1615
      %v1664 = vunpack.c.l.b16 %v1619
      %v1665 = vunpack.c.l.b16 %v1622
      %v1666 = vunpack.c.l.b16 %v1626
      %v1667 = vunpack.c.l.b16 %v1629
      %v1668 = vunpack.c.l.b16 %v1633
      %v1669 = vunpack.c.l.b16 %v1636
      %v1670 = vunpack.c.l.b16 %v1640
      %v1671 = vunpack.c.l.b16 %v1643
      %v1672 = vunpack.c.l.b16 %v1647
      %v1673 = vunpack.c.l.b16 %v1650
      %v1674 = vunpack.c.l.b16 %v1654
      %v1675 = vunpack.c.l.b16 %v1657
      %v1676 = vpack.c.b16 %v1661, %v1660
      %v1677 = vpack.c.b16 %v1663, %v1662
      %v1678 = vpack.c.b16 %v1665, %v1664
      %v1679 = vpack.c.b16 %v1667, %v1666
      %v1680 = vpack.c.b16 %v1669, %v1668
      %v1681 = vpack.c.b16 %v1671, %v1670
      %v1682 = vpack.c.b16 %v1673, %v1672
      %v1683 = vpack.c.b16 %v1675, %v1674
      %v1685 = vsel %vm447, %v1676, 0
      %v1688 = vsel %vm447, %v1677, 0
      %v1691 = vsel %vm447, %v1678, 0
      %v1694 = vsel %vm447, %v1679, 0
      %v1697 = vsel %vm447, %v1680, 0
      %v1700 = vsel %vm447, %v1681, 0
      %v1703 = vsel %vm447, %v1682, 0
      %v1706 = vsel %vm447, %v1683, 0
      %v1709 = vsel %vm472, %v1659, 0
      %1711 = vmatprep.subr.bf16.mxu0 0
      %1712 = vmatpush1.bf16.msra.mxu0 %v1709
      %1713 = vmatprep.subr.bf16.mxu0 0
      %1714 = vmatpush1.bf16.msra.mxu0 0
      %1715 = vmatprep.subr.bf16.mxu0 0
      %1716 = vmatpush1.bf16.msra.mxu0 0
      %1717 = vmatprep.subr.bf16.mxu0 0
      %1718 = vmatpush1.bf16.msra.mxu0 0
      %1719 = vmatprep.subr.bf16.mxu0 0
      %1720 = vmatpush1.bf16.msra.mxu0 0
      %1721 = vmatprep.subr.bf16.mxu0 0
      %1722 = vmatpush1.bf16.msra.mxu0 0
      %1723 = vmatprep.subr.bf16.mxu0 0
      %1724 = vmatpush1.bf16.msra.mxu0 0
      %1725 = vmatprep.subr.bf16.mxu0 0
      %1726 = vmatpush1.bf16.msra.mxu0 0
      %1727 = vmatprep.subr.bf16.mxu0 0
      %1728 = vmatpush1.bf16.msra.mxu0 0
      %1729 = vmatprep.subr.bf16.mxu0 0
      %1730 = vmatpush1.bf16.msra.mxu0 0
      %1731 = vmatprep.subr.bf16.mxu0 0
      %1732 = vmatpush1.bf16.msra.mxu0 0
      %1733 = vmatprep.subr.bf16.mxu0 0
      %1734 = vmatpush1.bf16.msra.mxu0 0
      %1735 = vmatprep.subr.bf16.mxu0 0
      %1736 = vmatpush1.bf16.msra.mxu0 0
      %1737 = vmatprep.subr.bf16.mxu0 0
      %1738 = vmatpush1.bf16.msra.mxu0 0
      %1739 = vmatprep.subr.bf16.mxu0 0
      %1740 = vmatpush1.bf16.msra.mxu0 0
      %1741 = vmatprep.subr.bf16.mxu0 0
      %1742 = vmatpush1.bf16.msra.mxu0 0
      %1743 = vmatprep.mubr.bf16.mxu0 0
      %1744 = vmatmul.mubr.bf16.gmra.mrb[0].mxu0 %v1685
      %v1745 = vpop.f32.mrb[0].mxu0
      %v1746 = vadd.f32 0.0, %v1745
      %v1747 = vpop.f32.mrb[0].mxu0
      %v1748 = vpop.f32.mrb[0].mxu0
      %v1749 = vadd.f32 0.0, %v1748
      %v1750 = vpop.f32.mrb[0].mxu0
      %1751 = vmatprep.mubr.bf16.mxu0 0
      %1752 = vmatmul.mubr.bf16.gmra.mrb[0].mxu0 %v1688
      %v1753 = vpop.f32.mrb[0].mxu0
      %v1754 = vadd.f32 0.0, %v1753
      %v1755 = vpop.f32.mrb[0].mxu0
      %v1756 = vpop.f32.mrb[0].mxu0
      %v1757 = vadd.f32 0.0, %v1756
      %v1758 = vpop.f32.mrb[0].mxu0
      %1759 = vmatprep.mubr.bf16.mxu0 0
      %1760 = vmatmul.mubr.bf16.gmra.mrb[0].mxu0 %v1691
      %v1761 = vpop.f32.mrb[0].mxu0
      %v1762 = vadd.f32 0.0, %v1761
      %v1763 = vpop.f32.mrb[0].mxu0
      %v1764 = vpop.f32.mrb[0].mxu0
      %v1765 = vadd.f32 0.0, %v1764
      %v1766 = vpop.f32.mrb[0].mxu0
      %1767 = vmatprep.mubr.bf16.mxu0 0
      %1768 = vmatmul.mubr.bf16.gmra.mrb[0].mxu0 %v1694
      %v1769 = vpop.f32.mrb[0].mxu0
      %v1770 = vadd.f32 0.0, %v1769
      %v1771 = vpop.f32.mrb[0].mxu0
      %v1772 = vpop.f32.mrb[0].mxu0
      %v1773 = vadd.f32 0.0, %v1772
      %v1774 = vpop.f32.mrb[0].mxu0
      %1775 = vmatprep.mubr.bf16.mxu0 0
      %1776 = vmatmul.mubr.bf16.gmra.mrb[0].mxu0 %v1697
      %v1777 = vpop.f32.mrb[0].mxu0
      %v1778 = vadd.f32 0.0, %v1777
      %v1779 = vpop.f32.mrb[0].mxu0
      %v1780 = vpop.f32.mrb[0].mxu0
      %v1781 = vadd.f32 0.0, %v1780
      %v1782 = vpop.f32.mrb[0].mxu0
      %1783 = vmatprep.mubr.bf16.mxu0 0
      %1784 = vmatmul.mubr.bf16.gmra.mrb[0].mxu0 %v1700
      %v1785 = vpop.f32.mrb[0].mxu0
      %v1786 = vadd.f32 0.0, %v1785
      %v1787 = vpop.f32.mrb[0].mxu0
      %v1788 = vpop.f32.mrb[0].mxu0
      %v1789 = vadd.f32 0.0, %v1788
      %v1790 = vpop.f32.mrb[0].mxu0
      %1791 = vmatprep.mubr.bf16.mxu0 0
      %1792 = vmatmul.mubr.bf16.gmra.mrb[0].mxu0 %v1703
      %v1793 = vpop.f32.mrb[0].mxu0
      %v1794 = vadd.f32 0.0, %v1793
      %v1795 = vpop.f32.mrb[0].mxu0
      %v1796 = vpop.f32.mrb[0].mxu0
      %v1797 = vadd.f32 0.0, %v1796
      %v1798 = vpop.f32.mrb[0].mxu0
      %1799 = vmatprep.mubr.bf16.mxu0 0
      %1800 = vmatmul.mubr.bf16.gmra.mrb[0].mxu0 %v1706
      %v1801 = vpop.f32.mrb[0].mxu0
      %v1802 = vadd.f32 0.0, %v1801
      %v1803 = vpop.f32.mrb[0].mxu0
      %v1804 = vpop.f32.mrb[0].mxu0
      %v1805 = vadd.f32 0.0, %v1804
      %v1806 = vpop.f32.mrb[0].mxu0
      %1807 = vdwg.mxu0
      %v1808 = vadd.f32 %v1554, %v1746
      %v1809 = vadd.f32 %v1555, %v1749
      %v1810 = vadd.f32 %v1556, %v1754
      %v1811 = vadd.f32 %v1557, %v1757
      %v1812 = vadd.f32 %v1558, %v1762
      %v1813 = vadd.f32 %v1559, %v1765
      %v1814 = vadd.f32 %v1560, %v1770
      %v1815 = vadd.f32 %v1561, %v1773
      %v1816 = vadd.f32 %v1562, %v1778
      %v1817 = vadd.f32 %v1563, %v1781
      %v1818 = vadd.f32 %v1564, %v1786
      %v1819 = vadd.f32 %v1565, %v1789
      %v1820 = vadd.f32 %v1566, %v1794
      %v1821 = vadd.f32 %v1567, %v1797
      %v1822 = vadd.f32 %v1568, %v1802
      %v1823 = vadd.f32 %v1569, %v1805
      %s1824 = sadd.s32 %s197, 2
      %s1825 = smul.u32 %s1824, 3
      %s1826 = smul.addr %s1825, 4
      %s1827 = scalar_lea.vmem %s184, %s1826
      %v1828 = vld [vmem:[%s1827] sm:$0xf]
      %v1829 = vld [vmem:[%s1827 + $0x4] sm:$0xf]
      %v1830 = vld [vmem:[%s1827 + $0xc] sm:$0xf]
      %v1831 = vld [vmem:[%s1827 + $0x10] sm:$0xf]
      %v1832 = vld [vmem:[%s1827 + $0x18] sm:$0xf]
      %v1833 = vld [vmem:[%s1827 + $0x1c] sm:$0xf]
      %v1834 = vld [vmem:[%s1827 + $0x24] sm:$0xf]
      %v1835 = vld [vmem:[%s1827 + $0x28] sm:$0xf]
      %v1836 = vld [vmem:[%s1827 + $0x30] sm:$0xf]
      %v1837 = vld [vmem:[%s1827 + $0x34] sm:$0xf]
      %v1838 = vld [vmem:[%s1827 + $0x3c] sm:$0xf]
      %v1839 = vld [vmem:[%s1827 + $0x40] sm:$0xf]
      %v1840 = vld [vmem:[%s1827 + $0x48] sm:$0xf]
      %v1841 = vld [vmem:[%s1827 + $0x4c] sm:$0xf]
      %v1842 = vld [vmem:[%s1827 + $0x54] sm:$0xf]
      %v1843 = vld [vmem:[%s1827 + $0x58] sm:$0xf]
      %s1844 = scalar_lea.vmem %s1, 12
      %v1845 = vld [vmem:[%s1844] sm:$0x3]
      %v1862 = vunpack.c.l.b16 %v1828
      %v1863 = vunpack.c.l.b16 %v1829
      %v1864 = vunpack.c.l.b16 %v1830
      %v1865 = vunpack.c.l.b16 %v1831
      %v1866 = vunpack.c.l.b16 %v1832
      %v1867 = vunpack.c.l.b16 %v1833
      %v1868 = vunpack.c.l.b16 %v1834
      %v1869 = vunpack.c.l.b16 %v1835
      %v1870 = vunpack.c.l.b16 %v1836
      %v1871 = vunpack.c.l.b16 %v1837
      %v1872 = vunpack.c.l.b16 %v1838
      %v1873 = vunpack.c.l.b16 %v1839
      %v1874 = vunpack.c.l.b16 %v1840
      %v1875 = vunpack.c.l.b16 %v1841
      %v1876 = vunpack.c.l.b16 %v1842
      %v1877 = vunpack.c.l.b16 %v1843
      %v1878 = vpack.c.b16 %v1863, %v1862
      %v1879 = vpack.c.b16 %v1865, %v1864
      %v1880 = vpack.c.b16 %v1867, %v1866
      %v1881 = vpack.c.b16 %v1869, %v1868
      %v1882 = vpack.c.b16 %v1871, %v1870
      %v1883 = vpack.c.b16 %v1873, %v1872
      %v1884 = vpack.c.b16 %v1875, %v1874
      %v1885 = vpack.c.b16 %v1877, %v1876
      %v1887 = vsel %vm447, %v1878, 0
      %v1890 = vsel %vm447, %v1879, 0
      %v1893 = vsel %vm447, %v1880, 0
      %v1896 = vsel %vm447, %v1881, 0
      %v1899 = vsel %vm447, %v1882, 0
      %v1902 = vsel %vm447, %v1883, 0
      %v1905 = vsel %vm447, %v1884, 0
      %v1908 = vsel %vm447, %v1885, 0
      %v1911 = vsel %vm472, %v1845, 0
      %1913 = vmatprep.subr.bf16.mxu0 0
      %1914 = vmatpush1.bf16.msra.mxu0 %v1911
      %1915 = vmatprep.subr.bf16.mxu0 0
      %1916 = vmatpush1.bf16.msra.mxu0 0
      %1917 = vmatprep.subr.bf16.mxu0 0
      %1918 = vmatpush1.bf16.msra.mxu0 0
      %1919 = vmatprep.subr.bf16.mxu0 0
      %1920 = vmatpush1.bf16.msra.mxu0 0
      %1921 = vmatprep.subr.bf16.mxu0 0
      %1922 = vmatpush1.bf16.msra.mxu0 0
      %1923 = vmatprep.subr.bf16.mxu0 0
      %1924 = vmatpush1.bf16.msra.mxu0 0
      %1925 = vmatprep.subr.bf16.mxu0 0
      %1926 = vmatpush1.bf16.msra.mxu0 0
      %1927 = vmatprep.subr.bf16.mxu0 0
      %1928 = vmatpush1.bf16.msra.mxu0 0
      %1929 = vmatprep.subr.bf16.mxu0 0
      %1930 = vmatpush1.bf16.msra.mxu0 0
      %1931 = vmatprep.subr.bf16.mxu0 0
      %1932 = vmatpush1.bf16.msra.mxu0 0
      %1933 = vmatprep.subr.bf16.mxu0 0
      %1934 = vmatpush1.bf16.msra.mxu0 0
      %1935 = vmatprep.subr.bf16.mxu0 0
      %1936 = vmatpush1.bf16.msra.mxu0 0
      %1937 = vmatprep.subr.bf16.mxu0 0
      %1938 = vmatpush1.bf16.msra.mxu0 0
      %1939 = vmatprep.subr.bf16.mxu0 0
      %1940 = vmatpush1.bf16.msra.mxu0 0
      %1941 = vmatprep.subr.bf16.mxu0 0
      %1942 = vmatpush1.bf16.msra.mxu0 0
      %1943 = vmatprep.subr.bf16.mxu0 0
      %1944 = vmatpush1.bf16.msra.mxu0 0
      %1945 = vmatprep.mubr.bf16.mxu0 0
      %1946 = vmatmul.mubr.bf16.gmra.mrb[0].mxu0 %v1887
      %v1947 = vpop.f32.mrb[0].mxu0
      %v1948 = vadd.f32 0.0, %v1947
      %v1949 = vpop.f32.mrb[0].mxu0
      %v1950 = vpop.f32.mrb[0].mxu0
      %v1951 = vadd.f32 0.0, %v1950
      %v1952 = vpop.f32.mrb[0].mxu0
      %1953 = vmatprep.mubr.bf16.mxu0 0
      %1954 = vmatmul.mubr.bf16.gmra.mrb[0].mxu0 %v1890
      %v1955 = vpop.f32.mrb[0].mxu0
      %v1956 = vadd.f32 0.0, %v1955
      %v1957 = vpop.f32.mrb[0].mxu0
      %v1958 = vpop.f32.mrb[0].mxu0
      %v1959 = vadd.f32 0.0, %v1958
      %v1960 = vpop.f32.mrb[0].mxu0
      %1961 = vmatprep.mubr.bf16.mxu0 0
      %1962 = vmatmul.mubr.bf16.gmra.mrb[0].mxu0 %v1893
      %v1963 = vpop.f32.mrb[0].mxu0
      %v1964 = vadd.f32 0.0, %v1963
      %v1965 = vpop.f32.mrb[0].mxu0
      %v1966 = vpop.f32.mrb[0].mxu0
      %v1967 = vadd.f32 0.0, %v1966
      %v1968 = vpop.f32.mrb[0].mxu0
      %1969 = vmatprep.mubr.bf16.mxu0 0
      %1970 = vmatmul.mubr.bf16.gmra.mrb[0].mxu0 %v1896
      %v1971 = vpop.f32.mrb[0].mxu0
      %v1972 = vadd.f32 0.0, %v1971
      %v1973 = vpop.f32.mrb[0].mxu0
      %v1974 = vpop.f32.mrb[0].mxu0
      %v1975 = vadd.f32 0.0, %v1974
      %v1976 = vpop.f32.mrb[0].mxu0
      %1977 = vmatprep.mubr.bf16.mxu0 0
      %1978 = vmatmul.mubr.bf16.gmra.mrb[0].mxu0 %v1899
      %v1979 = vpop.f32.mrb[0].mxu0
      %v1980 = vadd.f32 0.0, %v1979
      %v1981 = vpop.f32.mrb[0].mxu0
      %v1982 = vpop.f32.mrb[0].mxu0
      %v1983 = vadd.f32 0.0, %v1982
      %v1984 = vpop.f32.mrb[0].mxu0
      %1985 = vmatprep.mubr.bf16.mxu0 0
      %1986 = vmatmul.mubr.bf16.gmra.mrb[0].mxu0 %v1902
      %v1987 = vpop.f32.mrb[0].mxu0
      %v1988 = vadd.f32 0.0, %v1987
      %v1989 = vpop.f32.mrb[0].mxu0
      %v1990 = vpop.f32.mrb[0].mxu0
      %v1991 = vadd.f32 0.0, %v1990
      %v1992 = vpop.f32.mrb[0].mxu0
      %1993 = vmatprep.mubr.bf16.mxu0 0
      %1994 = vmatmul.mubr.bf16.gmra.mrb[0].mxu0 %v1905
      %v1995 = vpop.f32.mrb[0].mxu0
      %v1996 = vadd.f32 0.0, %v1995
      %v1997 = vpop.f32.mrb[0].mxu0
      %v1998 = vpop.f32.mrb[0].mxu0
      %v1999 = vadd.f32 0.0, %v1998
      %v2000 = vpop.f32.mrb[0].mxu0
      %2001 = vmatprep.mubr.bf16.mxu0 0
      %2002 = vmatmul.mubr.bf16.gmra.mrb[0].mxu0 %v1908
      %v2003 = vpop.f32.mrb[0].mxu0
      %v2004 = vadd.f32 0.0, %v2003
      %v2005 = vpop.f32.mrb[0].mxu0
      %v2006 = vpop.f32.mrb[0].mxu0
      %v2007 = vadd.f32 0.0, %v2006
      %v2008 = vpop.f32.mrb[0].mxu0
      %2009 = vdwg.mxu0
      %v2010 = vadd.f32 %v1808, %v1948
      %v2011 = vadd.f32 %v1809, %v1951
      %v2012 = vadd.f32 %v1810, %v1956
      %v2013 = vadd.f32 %v1811, %v1959
      %v2014 = vadd.f32 %v1812, %v1964
      %v2015 = vadd.f32 %v1813, %v1967
      %v2016 = vadd.f32 %v1814, %v1972
      %v2017 = vadd.f32 %v1815, %v1975
      %v2018 = vadd.f32 %v1816, %v1980
      %v2019 = vadd.f32 %v1817, %v1983
      %v2020 = vadd.f32 %v1818, %v1988
      %v2021 = vadd.f32 %v1819, %v1991
      %v2022 = vadd.f32 %v1820, %v1996
      %v2023 = vadd.f32 %v1821, %v1999
      %v2024 = vadd.f32 %v1822, %v2004
      %v2025 = vadd.f32 %v1823, %v2007
      %v2026 = vld [vmem:[%s1827] sm:$0xf]
      %v2027 = vld [vmem:[%s1827 + $0x4] sm:$0xf]
      %v2028 = vld [vmem:[%s1827 + $0x8] sm:$0x1]
      %v2029 = vld [vmem:[%s1827 + $0xc] sm:$0xf]
      %v2030 = vld [vmem:[%s1827 + $0x10] sm:$0xf]
      %v2031 = vld [vmem:[%s1827 + $0x14] sm:$0x1]
      %v2032 = vld [vmem:[%s1827 + $0x18] sm:$0xf]
      %v2033 = vld [vmem:[%s1827 + $0x1c] sm:$0xf]
      %v2034 = vld [vmem:[%s1827 + $0x20] sm:$0x1]
      %v2035 = vld [vmem:[%s1827 + $0x24] sm:$0xf]
      %v2036 = vld [vmem:[%s1827 + $0x28] sm:$0xf]
      %v2037 = vld [vmem:[%s1827 + $0x2c] sm:$0x1]
      %v2038 = vld [vmem:[%s1827 + $0x30] sm:$0xf]
      %v2039 = vld [vmem:[%s1827 + $0x34] sm:$0xf]
      %v2040 = vld [vmem:[%s1827 + $0x38] sm:$0x1]
      %v2041 = vld [vmem:[%s1827 + $0x3c] sm:$0xf]
      %v2042 = vld [vmem:[%s1827 + $0x40] sm:$0xf]
      %v2043 = vld [vmem:[%s1827 + $0x44] sm:$0x1]
      %v2044 = vld [vmem:[%s1827 + $0x48] sm:$0xf]
      %v2045 = vld [vmem:[%s1827 + $0x4c] sm:$0xf]
      %v2046 = vld [vmem:[%s1827 + $0x50] sm:$0x1]
      %v2047 = vld [vmem:[%s1827 + $0x54] sm:$0xf]
      %v2048 = vld [vmem:[%s1827 + $0x58] sm:$0xf]
      %v2049 = vld [vmem:[%s1827 + $0x5c] sm:$0x1]
      %v2051 = vshrl.u32 %v2026, 16
      %v2053 = vrot.slane %v2051, 4
      %v2054 = vshll.u32 %v2026, 16
      %v2056 = vrot.slane %v2054, 5
      %v2057 = vor.u32 %v2053, %v2056
      %v2058 = vrot.slane %v2057, 4
      %v2060 = vshll.u32 %v2027, 16
      %v2062 = vrot.slane %v2060, 5
      %v2063 = vsel %vm228, %v2058, %v2062
      %v2064 = vshrl.u32 %v2027, 16
      %v2066 = vrot.slane %v2064, 4
      %v2067 = vor.u32 %v2066, %v2062
      %v2068 = vrot.slane %v2067, 4
      %v2070 = vshll.u32 %v2028, 16
      %v2072 = vrot.slane %v2070, 5
      %v2073 = vsel %vm228, %v2068, %v2072
      %v2075 = vshrl.u32 %v2029, 16
      %v2077 = vrot.slane %v2075, 4
      %v2078 = vshll.u32 %v2029, 16
      %v2080 = vrot.slane %v2078, 5
      %v2081 = vor.u32 %v2077, %v2080
      %v2082 = vrot.slane %v2081, 4
      %v2084 = vshll.u32 %v2030, 16
      %v2086 = vrot.slane %v2084, 5
      %v2087 = vsel %vm228, %v2082, %v2086
      %v2088 = vshrl.u32 %v2030, 16
      %v2090 = vrot.slane %v2088, 4
      %v2091 = vor.u32 %v2090, %v2086
      %v2092 = vrot.slane %v2091, 4
      %v2094 = vshll.u32 %v2031, 16
      %v2096 = vrot.slane %v2094, 5
      %v2097 = vsel %vm228, %v2092, %v2096
      %v2099 = vshrl.u32 %v2032, 16
      %v2101 = vrot.slane %v2099, 4
      %v2102 = vshll.u32 %v2032, 16
      %v2104 = vrot.slane %v2102, 5
      %v2105 = vor.u32 %v2101, %v2104
      %v2106 = vrot.slane %v2105, 4
      %v2108 = vshll.u32 %v2033, 16
      %v2110 = vrot.slane %v2108, 5
      %v2111 = vsel %vm228, %v2106, %v2110
      %v2112 = vshrl.u32 %v2033, 16
      %v2114 = vrot.slane %v2112, 4
      %v2115 = vor.u32 %v2114, %v2110
      %v2116 = vrot.slane %v2115, 4
      %v2118 = vshll.u32 %v2034, 16
      %v2120 = vrot.slane %v2118, 5
      %v2121 = vsel %vm228, %v2116, %v2120
      %v2123 = vshrl.u32 %v2035, 16
      %v2125 = vrot.slane %v2123, 4
      %v2126 = vshll.u32 %v2035, 16
      %v2128 = vrot.slane %v2126, 5
      %v2129 = vor.u32 %v2125, %v2128
      %v2130 = vrot.slane %v2129, 4
      %v2132 = vshll.u32 %v2036, 16
      %v2134 = vrot.slane %v2132, 5
      %v2135 = vsel %vm228, %v2130, %v2134
      %v2136 = vshrl.u32 %v2036, 16
      %v2138 = vrot.slane %v2136, 4
      %v2139 = vor.u32 %v2138, %v2134
      %v2140 = vrot.slane %v2139, 4
      %v2142 = vshll.u32 %v2037, 16
      %v2144 = vrot.slane %v2142, 5
      %v2145 = vsel %vm228, %v2140, %v2144
      %v2147 = vshrl.u32 %v2038, 16
      %v2149 = vrot.slane %v2147, 4
      %v2150 = vshll.u32 %v2038, 16
      %v2152 = vrot.slane %v2150, 5
      %v2153 = vor.u32 %v2149, %v2152
      %v2154 = vrot.slane %v2153, 4
      %v2156 = vshll.u32 %v2039, 16
      %v2158 = vrot.slane %v2156, 5
      %v2159 = vsel %vm228, %v2154, %v2158
      %v2160 = vshrl.u32 %v2039, 16
      %v2162 = vrot.slane %v2160, 4
      %v2163 = vor.u32 %v2162, %v2158
      %v2164 = vrot.slane %v2163, 4
      %v2166 = vshll.u32 %v2040, 16
      %v2168 = vrot.slane %v2166, 5
      %v2169 = vsel %vm228, %v2164, %v2168
      %v2171 = vshrl.u32 %v2041, 16
      %v2173 = vrot.slane %v2171, 4
      %v2174 = vshll.u32 %v2041, 16
      %v2176 = vrot.slane %v2174, 5
      %v2177 = vor.u32 %v2173, %v2176
      %v2178 = vrot.slane %v2177, 4
      %v2180 = vshll.u32 %v2042, 16
      %v2182 = vrot.slane %v2180, 5
      %v2183 = vsel %vm228, %v2178, %v2182
      %v2184 = vshrl.u32 %v2042, 16
      %v2186 = vrot.slane %v2184, 4
      %v2187 = vor.u32 %v2186, %v2182
      %v2188 = vrot.slane %v2187, 4
      %v2190 = vshll.u32 %v2043, 16
      %v2192 = vrot.slane %v2190, 5
      %v2193 = vsel %vm228, %v2188, %v2192
      %v2195 = vshrl.u32 %v2044, 16
      %v2197 = vrot.slane %v2195, 4
      %v2198 = vshll.u32 %v2044, 16
      %v2200 = vrot.slane %v2198, 5
      %v2201 = vor.u32 %v2197, %v2200
      %v2202 = vrot.slane %v2201, 4
      %v2204 = vshll.u32 %v2045, 16
      %v2206 = vrot.slane %v2204, 5
      %v2207 = vsel %vm228, %v2202, %v2206
      %v2208 = vshrl.u32 %v2045, 16
      %v2210 = vrot.slane %v2208, 4
      %v2211 = vor.u32 %v2210, %v2206
      %v2212 = vrot.slane %v2211, 4
      %v2214 = vshll.u32 %v2046, 16
      %v2216 = vrot.slane %v2214, 5
      %v2217 = vsel %vm228, %v2212, %v2216
      %v2219 = vshrl.u32 %v2047, 16
      %v2221 = vrot.slane %v2219, 4
      %v2222 = vshll.u32 %v2047, 16
      %v2224 = vrot.slane %v2222, 5
      %v2225 = vor.u32 %v2221, %v2224
      %v2226 = vrot.slane %v2225, 4
      %v2228 = vshll.u32 %v2048, 16
      %v2230 = vrot.slane %v2228, 5
      %v2231 = vsel %vm228, %v2226, %v2230
      %v2232 = vshrl.u32 %v2048, 16
      %v2234 = vrot.slane %v2232, 4
      %v2235 = vor.u32 %v2234, %v2230
      %v2236 = vrot.slane %v2235, 4
      %v2238 = vshll.u32 %v2049, 16
      %v2240 = vrot.slane %v2238, 5
      %v2241 = vsel %vm228, %v2236, %v2240
      %s2242 = scalar_lea.vmem %s1, 14
      %v2243 = vld [vmem:[%s2242] sm:$0x3]
      %v2244 = vunpack.c.l.b16 %v2063
      %v2245 = vunpack.c.l.b16 %v2073
      %v2246 = vunpack.c.l.b16 %v2087
      %v2247 = vunpack.c.l.b16 %v2097
      %v2248 = vunpack.c.l.b16 %v2111
      %v2249 = vunpack.c.l.b16 %v2121
      %v2250 = vunpack.c.l.b16 %v2135
      %v2251 = vunpack.c.l.b16 %v2145
      %v2252 = vunpack.c.l.b16 %v2159
      %v2253 = vunpack.c.l.b16 %v2169
      %v2254 = vunpack.c.l.b16 %v2183
      %v2255 = vunpack.c.l.b16 %v2193
      %v2256 = vunpack.c.l.b16 %v2207
      %v2257 = vunpack.c.l.b16 %v2217
      %v2258 = vunpack.c.l.b16 %v2231
      %v2259 = vunpack.c.l.b16 %v2241
      %v2260 = vpack.c.b16 %v2245, %v2244
      %v2261 = vpack.c.b16 %v2247, %v2246
      %v2262 = vpack.c.b16 %v2249, %v2248
      %v2263 = vpack.c.b16 %v2251, %v2250
      %v2264 = vpack.c.b16 %v2253, %v2252
      %v2265 = vpack.c.b16 %v2255, %v2254
      %v2266 = vpack.c.b16 %v2257, %v2256
      %v2267 = vpack.c.b16 %v2259, %v2258
      %v2269 = vsel %vm447, %v2260, 0
      %v2272 = vsel %vm447, %v2261, 0
      %v2275 = vsel %vm447, %v2262, 0
      %v2278 = vsel %vm447, %v2263, 0
      %v2281 = vsel %vm447, %v2264, 0
      %v2284 = vsel %vm447, %v2265, 0
      %v2287 = vsel %vm447, %v2266, 0
      %v2290 = vsel %vm447, %v2267, 0
      %v2293 = vsel %vm472, %v2243, 0
      %2295 = vmatprep.subr.bf16.mxu0 0
      %2296 = vmatpush1.bf16.msra.mxu0 %v2293
      %2297 = vmatprep.subr.bf16.mxu0 0
      %2298 = vmatpush1.bf16.msra.mxu0 0
      %2299 = vmatprep.subr.bf16.mxu0 0
      %2300 = vmatpush1.bf16.msra.mxu0 0
      %2301 = vmatprep.subr.bf16.mxu0 0
      %2302 = vmatpush1.bf16.msra.mxu0 0
      %2303 = vmatprep.subr.bf16.mxu0 0
      %2304 = vmatpush1.bf16.msra.mxu0 0
      %2305 = vmatprep.subr.bf16.mxu0 0
      %2306 = vmatpush1.bf16.msra.mxu0 0
      %2307 = vmatprep.subr.bf16.mxu0 0
      %2308 = vmatpush1.bf16.msra.mxu0 0
      %2309 = vmatprep.subr.bf16.mxu0 0
      %2310 = vmatpush1.bf16.msra.mxu0 0
      %2311 = vmatprep.subr.bf16.mxu0 0
      %2312 = vmatpush1.bf16.msra.mxu0 0
      %2313 = vmatprep.subr.bf16.mxu0 0
      %2314 = vmatpush1.bf16.msra.mxu0 0
      %2315 = vmatprep.subr.bf16.mxu0 0
      %2316 = vmatpush1.bf16.msra.mxu0 0
      %2317 = vmatprep.subr.bf16.mxu0 0
      %2318 = vmatpush1.bf16.msra.mxu0 0
      %2319 = vmatprep.subr.bf16.mxu0 0
      %2320 = vmatpush1.bf16.msra.mxu0 0
      %2321 = vmatprep.subr.bf16.mxu0 0
      %2322 = vmatpush1.bf16.msra.mxu0 0
      %2323 = vmatprep.subr.bf16.mxu0 0
      %2324 = vmatpush1.bf16.msra.mxu0 0
      %2325 = vmatprep.subr.bf16.mxu0 0
      %2326 = vmatpush1.bf16.msra.mxu0 0
      %2327 = vmatprep.mubr.bf16.mxu0 0
      %2328 = vmatmul.mubr.bf16.gmra.mrb[0].mxu0 %v2269
      %v2329 = vpop.f32.mrb[0].mxu0
      %v2330 = vadd.f32 0.0, %v2329
      %v2331 = vpop.f32.mrb[0].mxu0
      %v2332 = vpop.f32.mrb[0].mxu0
      %v2333 = vadd.f32 0.0, %v2332
      %v2334 = vpop.f32.mrb[0].mxu0
      %2335 = vmatprep.mubr.bf16.mxu0 0
      %2336 = vmatmul.mubr.bf16.gmra.mrb[0].mxu0 %v2272
      %v2337 = vpop.f32.mrb[0].mxu0
      %v2338 = vadd.f32 0.0, %v2337
      %v2339 = vpop.f32.mrb[0].mxu0
      %v2340 = vpop.f32.mrb[0].mxu0
      %v2341 = vadd.f32 0.0, %v2340
      %v2342 = vpop.f32.mrb[0].mxu0
      %2343 = vmatprep.mubr.bf16.mxu0 0
      %2344 = vmatmul.mubr.bf16.gmra.mrb[0].mxu0 %v2275
      %v2345 = vpop.f32.mrb[0].mxu0
      %v2346 = vadd.f32 0.0, %v2345
      %v2347 = vpop.f32.mrb[0].mxu0
      %v2348 = vpop.f32.mrb[0].mxu0
      %v2349 = vadd.f32 0.0, %v2348
      %v2350 = vpop.f32.mrb[0].mxu0
      %2351 = vmatprep.mubr.bf16.mxu0 0
      %2352 = vmatmul.mubr.bf16.gmra.mrb[0].mxu0 %v2278
      %v2353 = vpop.f32.mrb[0].mxu0
      %v2354 = vadd.f32 0.0, %v2353
      %v2355 = vpop.f32.mrb[0].mxu0
      %v2356 = vpop.f32.mrb[0].mxu0
      %v2357 = vadd.f32 0.0, %v2356
      %v2358 = vpop.f32.mrb[0].mxu0
      %2359 = vmatprep.mubr.bf16.mxu0 0
      %2360 = vmatmul.mubr.bf16.gmra.mrb[0].mxu0 %v2281
      %v2361 = vpop.f32.mrb[0].mxu0
      %v2362 = vadd.f32 0.0, %v2361
      %v2363 = vpop.f32.mrb[0].mxu0
      %v2364 = vpop.f32.mrb[0].mxu0
      %v2365 = vadd.f32 0.0, %v2364
      %v2366 = vpop.f32.mrb[0].mxu0
      %2367 = vmatprep.mubr.bf16.mxu0 0
      %2368 = vmatmul.mubr.bf16.gmra.mrb[0].mxu0 %v2284
      %v2369 = vpop.f32.mrb[0].mxu0
      %v2370 = vadd.f32 0.0, %v2369
      %v2371 = vpop.f32.mrb[0].mxu0
      %v2372 = vpop.f32.mrb[0].mxu0
      %v2373 = vadd.f32 0.0, %v2372
      %v2374 = vpop.f32.mrb[0].mxu0
      %2375 = vmatprep.mubr.bf16.mxu0 0
      %2376 = vmatmul.mubr.bf16.gmra.mrb[0].mxu0 %v2287
      %v2377 = vpop.f32.mrb[0].mxu0
      %v2378 = vadd.f32 0.0, %v2377
      %v2379 = vpop.f32.mrb[0].mxu0
      %v2380 = vpop.f32.mrb[0].mxu0
      %v2381 = vadd.f32 0.0, %v2380
      %v2382 = vpop.f32.mrb[0].mxu0
      %2383 = vmatprep.mubr.bf16.mxu0 0
      %2384 = vmatmul.mubr.bf16.gmra.mrb[0].mxu0 %v2290
      %v2385 = vpop.f32.mrb[0].mxu0
      %v2386 = vadd.f32 0.0, %v2385
      %v2387 = vpop.f32.mrb[0].mxu0
      %v2388 = vpop.f32.mrb[0].mxu0
      %v2389 = vadd.f32 0.0, %v2388
      %v2390 = vpop.f32.mrb[0].mxu0
      %2391 = vdwg.mxu0
      %v2392 = vadd.f32 %v2010, %v2330
      %v2393 = vadd.f32 %v2011, %v2333
      %v2394 = vadd.f32 %v2012, %v2338
      %v2395 = vadd.f32 %v2013, %v2341
      %v2396 = vadd.f32 %v2014, %v2346
      %v2397 = vadd.f32 %v2015, %v2349
      %v2398 = vadd.f32 %v2016, %v2354
      %v2399 = vadd.f32 %v2017, %v2357
      %v2400 = vadd.f32 %v2018, %v2362
      %v2401 = vadd.f32 %v2019, %v2365
      %v2402 = vadd.f32 %v2020, %v2370
      %v2403 = vadd.f32 %v2021, %v2373
      %v2404 = vadd.f32 %v2022, %v2378
      %v2405 = vadd.f32 %v2023, %v2381
      %v2406 = vadd.f32 %v2024, %v2386
      %v2407 = vadd.f32 %v2025, %v2389
      %v2408 = vld [vmem:[%s1827] sm:$0xe]
      %v2409 = vld [vmem:[%s1827 + $0xc] sm:$0xe]
      %v2410 = vld [vmem:[%s1827 + $0x18] sm:$0xe]
      %v2411 = vld [vmem:[%s1827 + $0x24] sm:$0xe]
      %v2412 = vld [vmem:[%s1827 + $0x30] sm:$0xe]
      %v2413 = vld [vmem:[%s1827 + $0x3c] sm:$0xe]
      %v2414 = vld [vmem:[%s1827 + $0x48] sm:$0xe]
      %v2415 = vld [vmem:[%s1827 + $0x54] sm:$0xe]
      %v2440 = vrot.slane %v2408, 5
      %v2441 = vrot.slane %v2440, 4
      %v2442 = vrot.slane %v2027, 5
      %v2443 = vsel %vm763, %v2441, %v2442
      %v2444 = vrot.slane %v2442, 4
      %v2445 = vrot.slane %v2028, 5
      %v2446 = vsel %vm763, %v2444, %v2445
      %v2447 = vrot.slane %v2409, 5
      %v2448 = vrot.slane %v2447, 4
      %v2449 = vrot.slane %v2030, 5
      %v2450 = vsel %vm763, %v2448, %v2449
      %v2451 = vrot.slane %v2449, 4
      %v2452 = vrot.slane %v2031, 5
      %v2453 = vsel %vm763, %v2451, %v2452
      %v2454 = vrot.slane %v2410, 5
      %v2455 = vrot.slane %v2454, 4
      %v2456 = vrot.slane %v2033, 5
      %v2457 = vsel %vm763, %v2455, %v2456
      %v2458 = vrot.slane %v2456, 4
      %v2459 = vrot.slane %v2034, 5
      %v2460 = vsel %vm763, %v2458, %v2459
      %v2461 = vrot.slane %v2411, 5
      %v2462 = vrot.slane %v2461, 4
      %v2463 = vrot.slane %v2036, 5
      %v2464 = vsel %vm763, %v2462, %v2463
      %v2465 = vrot.slane %v2463, 4
      %v2466 = vrot.slane %v2037, 5
      %v2467 = vsel %vm763, %v2465, %v2466
      %v2468 = vrot.slane %v2412, 5
      %v2469 = vrot.slane %v2468, 4
      %v2470 = vrot.slane %v2039, 5
      %v2471 = vsel %vm763, %v2469, %v2470
      %v2472 = vrot.slane %v2470, 4
      %v2473 = vrot.slane %v2040, 5
      %v2474 = vsel %vm763, %v2472, %v2473
      %v2475 = vrot.slane %v2413, 5
      %v2476 = vrot.slane %v2475, 4
      %v2477 = vrot.slane %v2042, 5
      %v2478 = vsel %vm763, %v2476, %v2477
      %v2479 = vrot.slane %v2477, 4
      %v2480 = vrot.slane %v2043, 5
      %v2481 = vsel %vm763, %v2479, %v2480
      %v2482 = vrot.slane %v2414, 5
      %v2483 = vrot.slane %v2482, 4
      %v2484 = vrot.slane %v2045, 5
      %v2485 = vsel %vm763, %v2483, %v2484
      %v2486 = vrot.slane %v2484, 4
      %v2487 = vrot.slane %v2046, 5
      %v2488 = vsel %vm763, %v2486, %v2487
      %v2489 = vrot.slane %v2415, 5
      %v2490 = vrot.slane %v2489, 4
      %v2491 = vrot.slane %v2048, 5
      %v2492 = vsel %vm763, %v2490, %v2491
      %v2493 = vrot.slane %v2491, 4
      %v2494 = vrot.slane %v2049, 5
      %v2495 = vsel %vm763, %v2493, %v2494
      %s2496 = scalar_lea.vmem %s1, 16
      %v2497 = vld [vmem:[%s2496] sm:$0x3]
      %v2498 = vunpack.c.l.b16 %v2443
      %v2499 = vunpack.c.l.b16 %v2446
      %v2500 = vunpack.c.l.b16 %v2450
      %v2501 = vunpack.c.l.b16 %v2453
      %v2502 = vunpack.c.l.b16 %v2457
      %v2503 = vunpack.c.l.b16 %v2460
      %v2504 = vunpack.c.l.b16 %v2464
      %v2505 = vunpack.c.l.b16 %v2467
      %v2506 = vunpack.c.l.b16 %v2471
      %v2507 = vunpack.c.l.b16 %v2474
      %v2508 = vunpack.c.l.b16 %v2478
      %v2509 = vunpack.c.l.b16 %v2481
      %v2510 = vunpack.c.l.b16 %v2485
      %v2511 = vunpack.c.l.b16 %v2488
      %v2512 = vunpack.c.l.b16 %v2492
      %v2513 = vunpack.c.l.b16 %v2495
      %v2514 = vpack.c.b16 %v2499, %v2498
      %v2515 = vpack.c.b16 %v2501, %v2500
      %v2516 = vpack.c.b16 %v2503, %v2502
      %v2517 = vpack.c.b16 %v2505, %v2504
      %v2518 = vpack.c.b16 %v2507, %v2506
      %v2519 = vpack.c.b16 %v2509, %v2508
      %v2520 = vpack.c.b16 %v2511, %v2510
      %v2521 = vpack.c.b16 %v2513, %v2512
      %v2523 = vsel %vm447, %v2514, 0
      %v2526 = vsel %vm447, %v2515, 0
      %v2529 = vsel %vm447, %v2516, 0
      %v2532 = vsel %vm447, %v2517, 0
      %v2535 = vsel %vm447, %v2518, 0
      %v2538 = vsel %vm447, %v2519, 0
      %v2541 = vsel %vm447, %v2520, 0
      %v2544 = vsel %vm447, %v2521, 0
      %v2547 = vsel %vm472, %v2497, 0
      %2549 = vmatprep.subr.bf16.mxu0 0
      %2550 = vmatpush1.bf16.msra.mxu0 %v2547
      %2551 = vmatprep.subr.bf16.mxu0 0
      %2552 = vmatpush1.bf16.msra.mxu0 0
      %2553 = vmatprep.subr.bf16.mxu0 0
      %2554 = vmatpush1.bf16.msra.mxu0 0
      %2555 = vmatprep.subr.bf16.mxu0 0
      %2556 = vmatpush1.bf16.msra.mxu0 0
      %2557 = vmatprep.subr.bf16.mxu0 0
      %2558 = vmatpush1.bf16.msra.mxu0 0
      %2559 = vmatprep.subr.bf16.mxu0 0
      %2560 = vmatpush1.bf16.msra.mxu0 0
      %2561 = vmatprep.subr.bf16.mxu0 0
      %2562 = vmatpush1.bf16.msra.mxu0 0
      %2563 = vmatprep.subr.bf16.mxu0 0
      %2564 = vmatpush1.bf16.msra.mxu0 0
      %2565 = vmatprep.subr.bf16.mxu0 0
      %2566 = vmatpush1.bf16.msra.mxu0 0
      %2567 = vmatprep.subr.bf16.mxu0 0
      %2568 = vmatpush1.bf16.msra.mxu0 0
      %2569 = vmatprep.subr.bf16.mxu0 0
      %2570 = vmatpush1.bf16.msra.mxu0 0
      %2571 = vmatprep.subr.bf16.mxu0 0
      %2572 = vmatpush1.bf16.msra.mxu0 0
      %2573 = vmatprep.subr.bf16.mxu0 0
      %2574 = vmatpush1.bf16.msra.mxu0 0
      %2575 = vmatprep.subr.bf16.mxu0 0
      %2576 = vmatpush1.bf16.msra.mxu0 0
      %2577 = vmatprep.subr.bf16.mxu0 0
      %2578 = vmatpush1.bf16.msra.mxu0 0
      %2579 = vmatprep.subr.bf16.mxu0 0
      %2580 = vmatpush1.bf16.msra.mxu0 0
      %2581 = vmatprep.mubr.bf16.mxu0 0
      %2582 = vmatmul.mubr.bf16.gmra.mrb[0].mxu0 %v2523
      %v2583 = vpop.f32.mrb[0].mxu0
      %v2584 = vadd.f32 0.0, %v2583
      %v2585 = vpop.f32.mrb[0].mxu0
      %v2586 = vpop.f32.mrb[0].mxu0
      %v2587 = vadd.f32 0.0, %v2586
      %v2588 = vpop.f32.mrb[0].mxu0
      %2589 = vmatprep.mubr.bf16.mxu0 0
      %2590 = vmatmul.mubr.bf16.gmra.mrb[0].mxu0 %v2526
      %v2591 = vpop.f32.mrb[0].mxu0
      %v2592 = vadd.f32 0.0, %v2591
      %v2593 = vpop.f32.mrb[0].mxu0
      %v2594 = vpop.f32.mrb[0].mxu0
      %v2595 = vadd.f32 0.0, %v2594
      %v2596 = vpop.f32.mrb[0].mxu0
      %2597 = vmatprep.mubr.bf16.mxu0 0
      %2598 = vmatmul.mubr.bf16.gmra.mrb[0].mxu0 %v2529
      %v2599 = vpop.f32.mrb[0].mxu0
      %v2600 = vadd.f32 0.0, %v2599
      %v2601 = vpop.f32.mrb[0].mxu0
      %v2602 = vpop.f32.mrb[0].mxu0
      %v2603 = vadd.f32 0.0, %v2602
      %v2604 = vpop.f32.mrb[0].mxu0
      %2605 = vmatprep.mubr.bf16.mxu0 0
      %2606 = vmatmul.mubr.bf16.gmra.mrb[0].mxu0 %v2532
      %v2607 = vpop.f32.mrb[0].mxu0
      %v2608 = vadd.f32 0.0, %v2607
      %v2609 = vpop.f32.mrb[0].mxu0
      %v2610 = vpop.f32.mrb[0].mxu0
      %v2611 = vadd.f32 0.0, %v2610
      %v2612 = vpop.f32.mrb[0].mxu0
      %2613 = vmatprep.mubr.bf16.mxu0 0
      %2614 = vmatmul.mubr.bf16.gmra.mrb[0].mxu0 %v2535
      %v2615 = vpop.f32.mrb[0].mxu0
      %v2616 = vadd.f32 0.0, %v2615
      %v2617 = vpop.f32.mrb[0].mxu0
      %v2618 = vpop.f32.mrb[0].mxu0
      %v2619 = vadd.f32 0.0, %v2618
      %v2620 = vpop.f32.mrb[0].mxu0
      %2621 = vmatprep.mubr.bf16.mxu0 0
      %2622 = vmatmul.mubr.bf16.gmra.mrb[0].mxu0 %v2538
      %v2623 = vpop.f32.mrb[0].mxu0
      %v2624 = vadd.f32 0.0, %v2623
      %v2625 = vpop.f32.mrb[0].mxu0
      %v2626 = vpop.f32.mrb[0].mxu0
      %v2627 = vadd.f32 0.0, %v2626
      %v2628 = vpop.f32.mrb[0].mxu0
      %2629 = vmatprep.mubr.bf16.mxu0 0
      %2630 = vmatmul.mubr.bf16.gmra.mrb[0].mxu0 %v2541
      %v2631 = vpop.f32.mrb[0].mxu0
      %v2632 = vadd.f32 0.0, %v2631
      %v2633 = vpop.f32.mrb[0].mxu0
      %v2634 = vpop.f32.mrb[0].mxu0
      %v2635 = vadd.f32 0.0, %v2634
      %v2636 = vpop.f32.mrb[0].mxu0
      %2637 = vmatprep.mubr.bf16.mxu0 0
      %2638 = vmatmul.mubr.bf16.gmra.mrb[0].mxu0 %v2544
      %v2639 = vpop.f32.mrb[0].mxu0
      %v2640 = vadd.f32 0.0, %v2639
      %v2641 = vpop.f32.mrb[0].mxu0
      %v2642 = vpop.f32.mrb[0].mxu0
      %v2643 = vadd.f32 0.0, %v2642
      %v2644 = vpop.f32.mrb[0].mxu0
      %2645 = vdwg.mxu0
      %v2646 = vadd.f32 %v2392, %v2584
      %v2647 = vadd.f32 %v2393, %v2587
      %v2648 = vadd.f32 %v2394, %v2592
      %v2649 = vadd.f32 %v2395, %v2595
      %v2650 = vadd.f32 %v2396, %v2600
      %v2651 = vadd.f32 %v2397, %v2603
      %v2652 = vadd.f32 %v2398, %v2608
      %v2653 = vadd.f32 %v2399, %v2611
      %v2654 = vadd.f32 %v2400, %v2616
      %v2655 = vadd.f32 %v2401, %v2619
      %v2656 = vadd.f32 %v2402, %v2624
      %v2657 = vadd.f32 %v2403, %v2627
      %v2658 = vadd.f32 %v2404, %v2632
      %v2659 = vadd.f32 %v2405, %v2635
      %v2660 = vadd.f32 %v2406, %v2640
      %v2661 = vadd.f32 %v2407, %v2643
      %v2662 = vld [vmem:[%s2] sm:$0x1]
      %v2664 = vlaneseq
      %v2665 = vshrl.u32 %v2664, 7
      %v2666 = vsub.s32 0, %v2665
      %v2667 = vrot.slane %v2662, %v2666
      %v2669 = vadd.f32 %v2646, %v2667
      %v2670 = vadd.f32 %v2647, %v2667
      %v2671 = vadd.f32 %v2648, %v2667
      %v2672 = vadd.f32 %v2649, %v2667
      %v2673 = vadd.f32 %v2650, %v2667
      %v2674 = vadd.f32 %v2651, %v2667
      %v2675 = vadd.f32 %v2652, %v2667
      %v2676 = vadd.f32 %v2653, %v2667
      %v2677 = vadd.f32 %v2654, %v2667
      %v2678 = vadd.f32 %v2655, %v2667
      %v2679 = vadd.f32 %v2656, %v2667
      %v2680 = vadd.f32 %v2657, %v2667
      %v2681 = vadd.f32 %v2658, %v2667
      %v2682 = vadd.f32 %v2659, %v2667
      %v2683 = vadd.f32 %v2660, %v2667
      %v2684 = vadd.f32 %v2661, %v2667
      %v2685 = vmax.f32 %v2669, 0.0
      %v2686 = vmax.f32 %v2670, 0.0
      %v2687 = vmax.f32 %v2671, 0.0
      %v2688 = vmax.f32 %v2672, 0.0
      %v2689 = vmax.f32 %v2673, 0.0
      %v2690 = vmax.f32 %v2674, 0.0
      %v2691 = vmax.f32 %v2675, 0.0
      %v2692 = vmax.f32 %v2676, 0.0
      %v2693 = vmax.f32 %v2677, 0.0
      %v2694 = vmax.f32 %v2678, 0.0
      %v2695 = vmax.f32 %v2679, 0.0
      %v2696 = vmax.f32 %v2680, 0.0
      %v2697 = vmax.f32 %v2681, 0.0
      %v2698 = vmax.f32 %v2682, 0.0
      %v2699 = vmax.f32 %v2683, 0.0
      %v2700 = vmax.f32 %v2684, 0.0
      %v2701 = vpack.c.bf16 %v2686, %v2685
      %v2702 = vpack.c.bf16 %v2688, %v2687
      %v2703 = vpack.c.bf16 %v2690, %v2689
      %v2704 = vpack.c.bf16 %v2692, %v2691
      %v2705 = vpack.c.bf16 %v2694, %v2693
      %v2706 = vpack.c.bf16 %v2696, %v2695
      %v2707 = vpack.c.bf16 %v2698, %v2697
      %v2708 = vpack.c.bf16 %v2700, %v2699
      %v2717 = vunpack.c.l.b16 %v2701
      %v2718 = vunpack.c.h.b16 %v2701
      %v2719 = vunpack.c.l.b16 %v2702
      %v2720 = vunpack.c.h.b16 %v2702
      %v2721 = vunpack.c.l.b16 %v2703
      %v2722 = vunpack.c.h.b16 %v2703
      %v2723 = vunpack.c.l.b16 %v2704
      %v2724 = vunpack.c.h.b16 %v2704
      %v2725 = vunpack.c.l.b16 %v2705
      %v2726 = vunpack.c.h.b16 %v2705
      %v2727 = vunpack.c.l.b16 %v2706
      %v2728 = vunpack.c.h.b16 %v2706
      %v2729 = vunpack.c.l.b16 %v2707
      %v2730 = vunpack.c.h.b16 %v2707
      %v2731 = vunpack.c.l.b16 %v2708
      %v2732 = vunpack.c.h.b16 %v2708
      %v2733 = vpack.c.b16 %v2717, %v2717
      %v2734 = vpack.c.b16 %v2718, %v2718
      %v2735 = vpack.c.b16 %v2719, %v2719
      %v2736 = vpack.c.b16 %v2720, %v2720
      %v2737 = vpack.c.b16 %v2721, %v2721
      %v2738 = vpack.c.b16 %v2722, %v2722
      %v2739 = vpack.c.b16 %v2723, %v2723
      %v2740 = vpack.c.b16 %v2724, %v2724
      %v2741 = vpack.c.b16 %v2725, %v2725
      %v2742 = vpack.c.b16 %v2726, %v2726
      %v2743 = vpack.c.b16 %v2727, %v2727
      %v2744 = vpack.c.b16 %v2728, %v2728
      %v2745 = vpack.c.b16 %v2729, %v2729
      %v2746 = vpack.c.b16 %v2730, %v2730
      %v2747 = vpack.c.b16 %v2731, %v2731
      %v2748 = vpack.c.b16 %v2732, %v2732
      %2765 = vst [vmem:[%s194] sm:$0xf] %v2733
      %2766 = vst [vmem:[%s194 + $0x4] sm:$0xf] %v2734
      %2767 = vst [vmem:[%s194 + $0x8] sm:$0xf] %v2735
      %2768 = vst [vmem:[%s194 + $0xc] sm:$0xf] %v2736
      %2769 = vst [vmem:[%s194 + $0x10] sm:$0xf] %v2737
      %2770 = vst [vmem:[%s194 + $0x14] sm:$0xf] %v2738
      %2771 = vst [vmem:[%s194 + $0x18] sm:$0xf] %v2739
      %2772 = vst [vmem:[%s194 + $0x1c] sm:$0xf] %v2740
      %2773 = vst [vmem:[%s194 + $0x20] sm:$0xf] %v2741
      %2774 = vst [vmem:[%s194 + $0x24] sm:$0xf] %v2742
      %2775 = vst [vmem:[%s194 + $0x28] sm:$0xf] %v2743
      %2776 = vst [vmem:[%s194 + $0x2c] sm:$0xf] %v2744
      %2777 = vst [vmem:[%s194 + $0x30] sm:$0xf] %v2745
      %2778 = vst [vmem:[%s194 + $0x34] sm:$0xf] %v2746
      %2779 = vst [vmem:[%s194 + $0x38] sm:$0xf] %v2747
      %2780 = vst [vmem:[%s194 + $0x3c] sm:$0xf] %v2748
      %s2781 = smul.u32 8, %s19
      %p2782 = scmp.lt.s32.totalorder %s18, 1
      %s2783 = scalar_select %p2782, %s18, 1
      %p2784 = scmp.lt.s32.totalorder %s2781, 15
      %s2785 = scalar_select %p2784, %s2781, 15
      %s2786 = smul.addr %s2785, 2
      %s2787 = smul.addr %s2783, 32
      %s2788 = sadd.s32 %s2786, %s2787
      %s2789 = smul.addr %s2788, 4
      %s2790 = scalar_lea.vmem %s3, %s2789
      // Predicated region
      $region33: #{res_block_forward.2} parent=31 // pred_check
        %p2791 = pneg %p114
      $region34: #{res_block_forward.2} parent=31 // pred_check_branch
        %2793 = sbr.rel (%p2791) target = $region36
      $region35: #{res_block_forward.2} parent=31 // pred_region
        %s2794 = smul.u32 8, %s19
      $region36: #{res_block_forward.2} parent=31 // pred_fallthru
        _
    $region32: #{res_block_forward.2} parent=5 // pred_fallthru
      _
    %p2795 = scmp.le.s32.totalorder 2, %s9
    // Predicated region
    $region37: #{res_block_forward.2} parent=5 // pred_check
      %p2796 = pneg %p2795
    $region38: #{res_block_forward.2} parent=5 // pred_check_branch
      %2798 = sbr.rel (%p2796) target = $region40
    $region39: #{res_block_forward.2} parent=5 // pred_region
      %s2799 = ssub.s32 %s9, 2
      // Predicated region
      $region41: #{res_block_forward.2} parent=39 // pred_check
        %p2800 = pneg %p120
      $region42: #{res_block_forward.2} parent=39 // pred_check_branch
        %2802 = sbr.rel (%p2800) target = $region44
      $region43: #{res_block_forward.2} parent=39 // pred_region
        %s2803 = smul.u32 8, %s21
        %p2804 = scmp.lt.s32.totalorder %s20, 1
        %s2805 = scalar_select %p2804, %s20, 1
        %p2806 = scmp.lt.s32.totalorder %s2803, 15
        %s2807 = scalar_select %p2806, %s2803, 15
        %s2808 = smul.addr %s2807, 2
        %s2809 = smul.addr %s2805, 32
        %s2810 = sadd.s32 %s2808, %s2809
        %s2811 = smul.addr %s2810, 4
        %s2812 = scalar_lea.vmem %s3, %s2811
      $region44: #{res_block_forward.2} parent=39 // pred_fallthru
        _
    $region40: #{res_block_forward.2} parent=5 // pred_fallthru
      _
  $region6: #{res_block_forward.2} parent=0 // loop_footer
    %s13 = sadd.s32 1, %s9
  $region7: #{res_block_forward.2} parent=0 // loop_footer_branch
    %8 = sbr.rel target = $region3
  $region8: #{res_block_forward.2} parent=0 // loop_exit
    _

// kernel: res_block_forward.3
$region0: #{res_block_forward.3}
  #allocation0 [shape = 'u32[]', space=smem, size = 0x4, offset = 0x4, fixed_abs, tag = 'smem constant byte address 0x4 - core index']
  #allocation1 [shape = 'u32[144,128]{1,0:T(1,128)}', space=vmem, size = 0x12000, scoped, tag = 'internal scratch']
  %s0 = inlined_call_operand.vmem [shape: bf16[2,4,9,9,128], index: 0, kind: input, shape index: {}]
  %s1 = inlined_call_operand.vmem [shape: bf16[9,128,128], index: 1, kind: input, shape index: {}]
  %s2 = inlined_call_operand.vmem [shape: f32[1,128], index: 2, kind: input, shape index: {}]
  %s3 = inlined_call_operand.vmem [shape: bf16[2,8,8,4], index: 3, kind: input, shape index: {}]
  %s4 = inlined_call_operand.vmem [shape: bf16[4,128], index: 4, kind: input, shape index: {}]
  %s5 = inlined_call_operand.vmem [shape: bf16[2,8,8,128], index: 5, kind: output, shape index: {}]
  %s6 = sld [smem:[#allocation0]]
  $region53: #{res_block_forward.3} parent=0
    _
  %s8 = ssub.s32 1, %s6
  %s9 = scalar_select 0, %s8, %s6
  loop: start=0, step=1, limit=6
  $region2: #{res_block_forward.3} parent=0 // loop_pre_header
    _
  $region3: #{res_block_forward.3} parent=0 // loop_header
    %s11 = sphi 0, %s15
    %p12 = scmp.ge.s32.totalorder %s11, 6
    %s18 = sphi 0, %s30
    %s19 = sphi 0, %s26
    %s20 = sphi 0, %s18
    %s21 = sphi 0, %s19
    %s22 = sphi 0, %s20
    %s23 = sphi 0, %s21
    %s33 = sphi 0, %s35
    %s36 = sphi 0, %s33
    %s37 = sphi 0, %s36
    %s53 = sphi 0, %s37
    %s57 = sphi 0, %s57
    %s59 = sphi 0, %s57
    %s60 = sphi 0, %s59
    %s74 = sphi 0, %s60
    %s78 = sphi 0, %s78
    %s80 = sphi 0, %s78
    %s81 = sphi 0, %s80
    %s95 = sphi 0, %s81
    %s103 = sphi 0, %s105
    %s106 = sphi 0, %s103
    %s107 = sphi 0, %s106
    %s123 = sphi 0, %s107
    %s127 = sphi 0, %s127
    %s129 = sphi 0, %s127
    %s130 = sphi 0, %s129
    %s144 = sphi 0, %s130
    %s152 = sphi 0, %s154
    %s155 = sphi 0, %s152
    %s156 = sphi 0, %s155
    %s172 = sphi 0, %s156
  $region4: #{res_block_forward.3} parent=0 // loop_header_branch
    %14 = sbr.rel (%p12) target = $region8
  $region5: #{res_block_forward.3} parent=0 // loop_body
    %s16 = ssub.s32 %s11, 1
    %s17 = ssub.s32 %s11, 2
    %s24 = sadd.s32 1, %s19
    %p25 = scmp.ge.s32.totalorder %s24, 2
    %s26 = scalar_select %p25, 0, %s24
    %s27 = sadd.s32 1, %s18
    %s28 = scalar_select %p25, %s27, %s18
    %p29 = scmp.ge.s32.totalorder %s28, 2
    %s30 = scalar_select %p29, 0, %s28
    %s31 = ssub.s32 %s18, %s30
    %p32 = scmp.eq.s32.totalorder %s31, 0
    %s34 = sadd.s32 %s33, 1
    %s35 = scalar_select %p32, %s33, %s34
    %p38 = pneg %p32
    %p39 = scmp.eq.s32.totalorder %s11, 3
    %p40 = por %p38, %p39
    %p41 = scmp.ne.s32.totalorder %s33, %s36
    %p42 = scmp.eq.s32.totalorder %s11, 0
    %p43 = por %p41, %p42
    %p44 = scmp.ne.s32.totalorder %s33, %s36
    %p45 = scmp.eq.s32.totalorder %s16, 3
    %p46 = por %p44, %p45
    %p47 = scmp.ne.s32.totalorder %s36, %s37
    %p48 = scmp.eq.s32.totalorder %s16, 0
    %p49 = por %p47, %p48
    %p50 = scmp.ne.s32.totalorder %s36, %s37
    %p51 = scmp.eq.s32.totalorder %s17, 3
    %p52 = por %p50, %p51
    %p54 = scmp.ne.s32.totalorder %s37, %s53
    %p55 = scmp.eq.s32.totalorder %s17, 0
    %p56 = por %p54, %p55
    %s58 = sadd.s32 %s57, 1
    %p61 = scmp.eq.s32.totalorder %s11, 3
    %p62 = scmp.ne.s32.totalorder %s57, %s59
    %p63 = scmp.eq.s32.totalorder %s11, 0
    %p64 = por %p62, %p63
    %p65 = scmp.ne.s32.totalorder %s57, %s59
    %p66 = scmp.eq.s32.totalorder %s16, 3
    %p67 = por %p65, %p66
    %p68 = scmp.ne.s32.totalorder %s59, %s60
    %p69 = scmp.eq.s32.totalorder %s16, 0
    %p70 = por %p68, %p69
    %p71 = scmp.ne.s32.totalorder %s59, %s60
    %p72 = scmp.eq.s32.totalorder %s17, 3
    %p73 = por %p71, %p72
    %p75 = scmp.ne.s32.totalorder %s60, %s74
    %p76 = scmp.eq.s32.totalorder %s17, 0
    %p77 = por %p75, %p76
    %s79 = sadd.s32 %s78, 1
    %p82 = scmp.eq.s32.totalorder %s11, 3
    %p83 = scmp.ne.s32.totalorder %s78, %s80
    %p84 = scmp.eq.s32.totalorder %s11, 0
    %p85 = por %p83, %p84
    %p86 = scmp.ne.s32.totalorder %s78, %s80
    %p87 = scmp.eq.s32.totalorder %s16, 3
    %p88 = por %p86, %p87
    %p89 = scmp.ne.s32.totalorder %s80, %s81
    %p90 = scmp.eq.s32.totalorder %s16, 0
    %p91 = por %p89, %p90
    %p92 = scmp.ne.s32.totalorder %s80, %s81
    %p93 = scmp.eq.s32.totalorder %s17, 3
    %p94 = por %p92, %p93
    %p96 = scmp.ne.s32.totalorder %s81, %s95
    %p97 = scmp.eq.s32.totalorder %s17, 0
    %p98 = por %p96, %p97
    %s99 = ssub.s32 %s18, %s30
    %s100 = ssub.s32 %s19, %s26
    %s101 = sor.u32 %s99, %s100
    %p102 = scmp.eq.s32.totalorder %s101, 0
    %s104 = sadd.s32 %s103, 1
    %s105 = scalar_select %p102, %s103, %s104
    %p108 = pneg %p102
    %p109 = scmp.eq.s32.totalorder %s11, 3
    %p110 = por %p108, %p109
    %p111 = scmp.ne.s32.totalorder %s103, %s106
    %p112 = scmp.eq.s32.totalorder %s11, 0
    %p113 = por %p111, %p112
    %p114 = scmp.ne.s32.totalorder %s103, %s106
    %p115 = scmp.eq.s32.totalorder %s16, 3
    %p116 = por %p114, %p115
    %p117 = scmp.ne.s32.totalorder %s106, %s107
    %p118 = scmp.eq.s32.totalorder %s16, 0
    %p119 = por %p117, %p118
    %p120 = scmp.ne.s32.totalorder %s106, %s107
    %p121 = scmp.eq.s32.totalorder %s17, 3
    %p122 = por %p120, %p121
    %p124 = scmp.ne.s32.totalorder %s107, %s123
    %p125 = scmp.eq.s32.totalorder %s17, 0
    %p126 = por %p124, %p125
    %s128 = sadd.s32 %s127, 1
    %p131 = scmp.eq.s32.totalorder %s11, 3
    %p132 = scmp.ne.s32.totalorder %s127, %s129
    %p133 = scmp.eq.s32.totalorder %s11, 0
    %p134 = por %p132, %p133
    %p135 = scmp.ne.s32.totalorder %s127, %s129
    %p136 = scmp.eq.s32.totalorder %s16, 3
    %p137 = por %p135, %p136
    %p138 = scmp.ne.s32.totalorder %s129, %s130
    %p139 = scmp.eq.s32.totalorder %s16, 0
    %p140 = por %p138, %p139
    %p141 = scmp.ne.s32.totalorder %s129, %s130
    %p142 = scmp.eq.s32.totalorder %s17, 3
    %p143 = por %p141, %p142
    %p145 = scmp.ne.s32.totalorder %s130, %s144
    %p146 = scmp.eq.s32.totalorder %s17, 0
    %p147 = por %p145, %p146
    %s148 = ssub.s32 %s18, %s30
    %s149 = ssub.s32 %s19, %s26
    %s150 = sor.u32 %s148, %s149
    %p151 = scmp.eq.s32.totalorder %s150, 0
    %s153 = sadd.s32 %s152, 1
    %s154 = scalar_select %p151, %s152, %s153
    %p157 = pneg %p151
    %p158 = scmp.eq.s32.totalorder %s11, 3
    %p159 = por %p157, %p158
    %p160 = scmp.ne.s32.totalorder %s152, %s155
    %p161 = scmp.eq.s32.totalorder %s11, 0
    %p162 = por %p160, %p161
    %p163 = scmp.ne.s32.totalorder %s152, %s155
    %p164 = scmp.eq.s32.totalorder %s16, 3
    %p165 = por %p163, %p164
    %p166 = scmp.ne.s32.totalorder %s155, %s156
    %p167 = scmp.eq.s32.totalorder %s16, 0
    %p168 = por %p166, %p167
    %p169 = scmp.ne.s32.totalorder %s155, %s156
    %p170 = scmp.eq.s32.totalorder %s17, 3
    %p171 = por %p169, %p170
    %p173 = scmp.ne.s32.totalorder %s156, %s172
    %p174 = scmp.eq.s32.totalorder %s17, 0
    %p175 = por %p173, %p174
    %p176 = scmp.le.s32.totalorder 1, %s11
    %p177 = scmp.lt.s32.totalorder %s11, 5
    %p178 = pnand %p176, %p177
    %p179 = pneg %p178
    // Predicated region
    $region9: #{res_block_forward.3} parent=5 // pred_check
      _
    $region10: #{res_block_forward.3} parent=5 // pred_check_branch
      %181 = sbr.rel (%p178) target = $region12
    $region11: #{res_block_forward.3} parent=5 // pred_region
      %s182 = ssub.s32 %s11, 1
      // Predicated region
      $region13: #{res_block_forward.3} parent=11 // pred_check
        %p183 = pneg %p70
      $region14: #{res_block_forward.3} parent=11 // pred_check_branch
        %185 = sbr.rel (%p183) target = $region16
      $region15: #{res_block_forward.3} parent=11 // pred_region
        _
      $region16: #{res_block_forward.3} parent=11 // pred_fallthru
        _
      // Predicated region
      $region17: #{res_block_forward.3} parent=11 // pred_check
        %p186 = pneg %p91
      $region18: #{res_block_forward.3} parent=11 // pred_check_branch
        %188 = sbr.rel (%p186) target = $region20
      $region19: #{res_block_forward.3} parent=11 // pred_region
        _
      $region20: #{res_block_forward.3} parent=11 // pred_fallthru
        _
      // Predicated region
      $region21: #{res_block_forward.3} parent=11 // pred_check
        %p189 = pneg %p140
      $region22: #{res_block_forward.3} parent=11 // pred_check_branch
        %191 = sbr.rel (%p189) target = $region24
      $region23: #{res_block_forward.3} parent=11 // pred_region
        _
      $region24: #{res_block_forward.3} parent=11 // pred_fallthru
        _
    $region12: #{res_block_forward.3} parent=5 // pred_fallthru
      _
    %p192 = scmp.lt.s32.totalorder %s11, 4
    // Predicated region
    $region25: #{res_block_forward.3} parent=5 // pred_check
      %p193 = pneg %p192
    $region26: #{res_block_forward.3} parent=5 // pred_check_branch
      %195 = sbr.rel (%p193) target = $region28
    $region27: #{res_block_forward.3} parent=5 // pred_region
      // Predicated region
      $region29: #{res_block_forward.3} parent=27 // pred_check
        %p196 = pneg %p43
      $region30: #{res_block_forward.3} parent=27 // pred_check_branch
        %198 = sbr.rel (%p196) target = $region32
      $region31: #{res_block_forward.3} parent=27 // pred_region
        %p199 = scmp.lt.s32.totalorder %s18, 1
        %s200 = scalar_select %p199, %s18, 1
        %s201 = smul.addr %s200, 72
        %s202 = smul.addr %s201, 4
        %s203 = scalar_lea.vmem %s0, %s202
      $region32: #{res_block_forward.3} parent=27 // pred_fallthru
        _
      // Predicated region
      $region33: #{res_block_forward.3} parent=27 // pred_check
        %p204 = pneg %p113
      $region34: #{res_block_forward.3} parent=27 // pred_check_branch
        %206 = sbr.rel (%p204) target = $region36
      $region35: #{res_block_forward.3} parent=27 // pred_region
        %s207 = smul.u32 4, %s19
        %p208 = scmp.lt.s32.totalorder %s18, 1
        %s209 = scalar_select %p208, %s18, 1
        %p210 = scmp.lt.s32.totalorder %s207, 7
        %s211 = scalar_select %p210, %s207, 7
        %s212 = smul.addr %s209, 8
        %s213 = sadd.s32 %s211, %s212
        %s214 = smul.addr %s213, 4
        %s215 = scalar_lea.vmem %s3, %s214
        %s216 = smul.u32 4, %s19
      $region36: #{res_block_forward.3} parent=27 // pred_fallthru
        _
    $region28: #{res_block_forward.3} parent=5 // pred_fallthru
      _
    %p217 = scmp.le.s32.totalorder 1, %s11
    %p218 = scmp.lt.s32.totalorder %s11, 5
    %p219 = pnand %p217, %p218
    %p220 = pneg %p219
    // Predicated region
    $region37: #{res_block_forward.3} parent=5 // pred_check
      _
    $region38: #{res_block_forward.3} parent=5 // pred_check_branch
      %222 = sbr.rel (%p219) target = $region40
    $region39: #{res_block_forward.3} parent=5 // pred_region
      %s223 = ssub.s32 %s11, 1
      %p224 = scmp.lt.s32.totalorder %s20, 1
      %s225 = scalar_select %p224, %s20, 1
      %s226 = smul.addr %s225, 72
      %s227 = smul.addr %s226, 4
      %s228 = scalar_lea.vmem %s0, %s227
      %p229 = pneg %p49
      %p230 = pneg %p46
      %p231 = pneg %p70
      %p232 = pneg %p67
      %p233 = pneg %p91
      %p234 = pneg %p88
      %s235 = smul.u32 4, %s21
      %p236 = scmp.lt.s32.totalorder %s20, 1
      %s237 = scalar_select %p236, %s20, 1
      %p238 = scmp.lt.s32.totalorder %s235, 7
      %s239 = scalar_select %p238, %s235, 7
      %s240 = smul.addr %s237, 8
      %s241 = sadd.s32 %s239, %s240
      %s242 = smul.addr %s241, 4
      %s243 = scalar_lea.vmem %s3, %s242
      %p244 = pneg %p119
      %p245 = pneg %p116
      %p246 = pneg %p140
      %p247 = pneg %p137
      %p248 = pneg %p168
      %p249 = pneg %p165
      %s250 = smul.u32 4, %s21
      %p251 = scmp.lt.s32.totalorder %s20, 1
      %s252 = scalar_select %p251, %s20, 1
      %p253 = scmp.lt.s32.totalorder %s250, 7
      %s254 = scalar_select %p253, %s250, 7
      %s255 = smul.addr %s252, 8
      %s256 = sadd.s32 %s254, %s255
      %s257 = smul.addr %s256, 4
      %s258 = scalar_lea.vmem %s5, %s257
      %p259 = scmp.lt.s32.totalorder %s20, 1
      %s260 = scalar_select %p259, %s20, 1
      %s261 = smul.addr %s260, 72
      %s262 = smul.addr %s261, 4
      %s263 = scalar_lea.vmem %s0, %s262
      %s264 = smul.u32 4, %s21
      %p265 = scmp.lt.s32.totalorder %s20, 1
      %s266 = scalar_select %p265, %s20, 1
      %p267 = scmp.lt.s32.totalorder %s264, 7
      %s268 = scalar_select %p267, %s264, 7
      %s269 = smul.addr %s266, 8
      %s270 = sadd.s32 %s268, %s269
      %s271 = smul.addr %s270, 4
      %s272 = scalar_lea.vmem %s3, %s271
      %s273 = smul.u32 4, %s21
      %s274 = smul.u32 4, %s21
      %p275 = scmp.lt.s32.totalorder %s20, 1
      %s276 = scalar_select %p275, %s20, 1
      %p277 = scmp.lt.s32.totalorder %s274, 7
      %s278 = scalar_select %p277, %s274, 7
      %s279 = smul.addr %s276, 8
      %s280 = sadd.s32 %s278, %s279
      %s281 = smul.addr %s280, 4
      %s282 = scalar_lea.vmem %s5, %s281
      %s283 = smul.u32 4, %s21
      %s285 = smul.u32 %s21, 4
      %s286 = smul.u32 %s285, 2
      %s287 = smul.addr %s286, 4
      %s288 = scalar_lea.vmem %s263, %s287
      %v289 = vld [vmem:[%s288] sm:$0xf]
      %v290 = vld [vmem:[%s288 + $0x8] sm:$0xf]
      %v291 = vld [vmem:[%s288 + $0x10] sm:$0xf]
      %v292 = vld [vmem:[%s288 + $0x18] sm:$0xf]
      %v293 = vld [vmem:[%s1] sm:$0xf]
      %v294 = vld [vmem:[%s1 + $0x4] sm:$0xf]
      %v295 = vld [vmem:[%s1 + $0x8] sm:$0xf]
      %v296 = vld [vmem:[%s1 + $0xc] sm:$0xf]
      %v297 = vld [vmem:[%s1 + $0x10] sm:$0xf]
      %v298 = vld [vmem:[%s1 + $0x14] sm:$0xf]
      %v299 = vld [vmem:[%s1 + $0x18] sm:$0xf]
      %v300 = vld [vmem:[%s1 + $0x1c] sm:$0xf]
      %v301 = vld [vmem:[%s1 + $0x20] sm:$0xf]
      %v302 = vld [vmem:[%s1 + $0x24] sm:$0xf]
      %v303 = vld [vmem:[%s1 + $0x28] sm:$0xf]
      %v304 = vld [vmem:[%s1 + $0x2c] sm:$0xf]
      %v305 = vld [vmem:[%s1 + $0x30] sm:$0xf]
      %v306 = vld [vmem:[%s1 + $0x34] sm:$0xf]
      %v307 = vld [vmem:[%s1 + $0x38] sm:$0xf]
      %v308 = vld [vmem:[%s1 + $0x3c] sm:$0xf]
      %s309 = sadd.s32 %s286, 18
      %s310 = smul.addr %s309, 4
      %s311 = scalar_lea.vmem %s263, %s310
      %v312 = vld [vmem:[%s311] sm:$0xf]
      %v313 = vld [vmem:[%s311 + $0x8] sm:$0xf]
      %v314 = vld [vmem:[%s311 + $0x10] sm:$0xf]
      %v315 = vld [vmem:[%s311 + $0x18] sm:$0xf]
      %s316 = scalar_lea.vmem %s1, 64
      %v317 = vld [vmem:[%s316] sm:$0xf]
      %v318 = vld [vmem:[%s316 + $0x4] sm:$0xf]
      %v319 = vld [vmem:[%s316 + $0x8] sm:$0xf]
      %v320 = vld [vmem:[%s316 + $0xc] sm:$0xf]
      %v321 = vld [vmem:[%s316 + $0x10] sm:$0xf]
      %v322 = vld [vmem:[%s316 + $0x14] sm:$0xf]
      %v323 = vld [vmem:[%s316 + $0x18] sm:$0xf]
      %v324 = vld [vmem:[%s316 + $0x1c] sm:$0xf]
      %v325 = vld [vmem:[%s316 + $0x20] sm:$0xf]
      %v326 = vld [vmem:[%s316 + $0x24] sm:$0xf]
      %v327 = vld [vmem:[%s316 + $0x28] sm:$0xf]
      %v328 = vld [vmem:[%s316 + $0x2c] sm:$0xf]
      %v329 = vld [vmem:[%s316 + $0x30] sm:$0xf]
      %v330 = vld [vmem:[%s316 + $0x34] sm:$0xf]
      %v331 = vld [vmem:[%s316 + $0x38] sm:$0xf]
      %v332 = vld [vmem:[%s316 + $0x3c] sm:$0xf]
      %v337 = vunpack.c.l.b16 %v312
      %v338 = vunpack.c.l.b16 %v313
      %v339 = vunpack.c.l.b16 %v314
      %v340 = vunpack.c.l.b16 %v315
      %v341 = vpack.c.b16 %v338, %v337
      %v342 = vpack.c.b16 %v340, %v339
      %v361 = vunpack.c.l.b16 %v317
      %v362 = vunpack.c.l.b16 %v318
      %v363 = vunpack.c.l.b16 %v319
      %v364 = vunpack.c.l.b16 %v320
      %v365 = vunpack.c.l.b16 %v321
      %v366 = vunpack.c.l.b16 %v322
      %v367 = vunpack.c.l.b16 %v323
      %v368 = vunpack.c.l.b16 %v324
      %v369 = vunpack.c.l.b16 %v325
      %v370 = vunpack.c.l.b16 %v326
      %v371 = vunpack.c.l.b16 %v327
      %v372 = vunpack.c.l.b16 %v328
      %v373 = vunpack.c.l.b16 %v329
      %v374 = vunpack.c.l.b16 %v330
      %v375 = vunpack.c.l.b16 %v331
      %v376 = vunpack.c.l.b16 %v332
      %v377 = vpack.c.b16 %v362, %v361
      %v378 = vpack.c.b16 %v364, %v363
      %v379 = vpack.c.b16 %v366, %v365
      %v380 = vpack.c.b16 %v368, %v367
      %v381 = vpack.c.b16 %v370, %v369
      %v382 = vpack.c.b16 %v372, %v371
      %v383 = vpack.c.b16 %v374, %v373
      %v384 = vpack.c.b16 %v376, %v375
      %393 = vmatprep.subr.bf16.mxu0 0
      %394 = vmatpush1.bf16.msra.mxu0 %v377
      %395 = vmatprep.subr.bf16.mxu0 0
      %396 = vmatpush1.bf16.msra.mxu0 %v378
      %397 = vmatprep.subr.bf16.mxu0 0
      %398 = vmatpush1.bf16.msra.mxu0 %v379
      %399 = vmatprep.subr.bf16.mxu0 0
      %400 = vmatpush1.bf16.msra.mxu0 %v380
      %401 = vmatprep.subr.bf16.mxu0 0
      %402 = vmatpush1.bf16.msra.mxu0 %v381
      %403 = vmatprep.subr.bf16.mxu0 0
      %404 = vmatpush1.bf16.msra.mxu0 %v382
      %405 = vmatprep.subr.bf16.mxu0 0
      %406 = vmatpush1.bf16.msra.mxu0 %v383
      %407 = vmatprep.subr.bf16.mxu0 0
      %408 = vmatpush1.bf16.msra.mxu0 %v384
      %409 = vmatprep.subr.bf16.mxu0 0
      %410 = vmatpush1.bf16.msra.mxu0 0
      %411 = vmatprep.subr.bf16.mxu0 0
      %412 = vmatpush1.bf16.msra.mxu0 0
      %413 = vmatprep.subr.bf16.mxu0 0
      %414 = vmatpush1.bf16.msra.mxu0 0
      %415 = vmatprep.subr.bf16.mxu0 0
      %416 = vmatpush1.bf16.msra.mxu0 0
      %417 = vmatprep.subr.bf16.mxu0 0
      %418 = vmatpush1.bf16.msra.mxu0 0
      %419 = vmatprep.subr.bf16.mxu0 0
      %420 = vmatpush1.bf16.msra.mxu0 0
      %421 = vmatprep.subr.bf16.mxu0 0
      %422 = vmatpush1.bf16.msra.mxu0 0
      %423 = vmatprep.subr.bf16.mxu0 0
      %424 = vmatpush1.bf16.msra.mxu0 0
      %425 = vmatprep.mubr.bf16.mxu0 0
      %426 = vmatmul.mubr.bf16.gmra.mrb[0].mxu0 %v341
      %v427 = vpop.f32.mrb[0].mxu0
      %v428 = vadd.f32 0.0, %v427
      %v429 = vpop.f32.mrb[0].mxu0
      %v430 = vpop.f32.mrb[0].mxu0
      %v431 = vadd.f32 0.0, %v430
      %v432 = vpop.f32.mrb[0].mxu0
      %433 = vmatprep.mubr.bf16.mxu0 0
      %434 = vmatmul.mubr.bf16.gmra.mrb[0].mxu0 %v342
      %v435 = vpop.f32.mrb[0].mxu0
      %v436 = vadd.f32 0.0, %v435
      %v437 = vpop.f32.mrb[0].mxu0
      %v438 = vpop.f32.mrb[0].mxu0
      %v439 = vadd.f32 0.0, %v438
      %v440 = vpop.f32.mrb[0].mxu0
      %441 = vdwg.mxu0
      %v446 = vunpack.c.l.b16 %v289
      %v447 = vunpack.c.l.b16 %v290
      %v448 = vunpack.c.l.b16 %v291
      %v449 = vunpack.c.l.b16 %v292
      %v450 = vpack.c.b16 %v447, %v446
      %v451 = vpack.c.b16 %v449, %v448
      %v470 = vunpack.c.l.b16 %v293
      %v471 = vunpack.c.l.b16 %v294
      %v472 = vunpack.c.l.b16 %v295
      %v473 = vunpack.c.l.b16 %v296
      %v474 = vunpack.c.l.b16 %v297
      %v475 = vunpack.c.l.b16 %v298
      %v476 = vunpack.c.l.b16 %v299
      %v477 = vunpack.c.l.b16 %v300
      %v478 = vunpack.c.l.b16 %v301
      %v479 = vunpack.c.l.b16 %v302
      %v480 = vunpack.c.l.b16 %v303
      %v481 = vunpack.c.l.b16 %v304
      %v482 = vunpack.c.l.b16 %v305
      %v483 = vunpack.c.l.b16 %v306
      %v484 = vunpack.c.l.b16 %v307
      %v485 = vunpack.c.l.b16 %v308
      %v486 = vpack.c.b16 %v471, %v470
      %v487 = vpack.c.b16 %v473, %v472
      %v488 = vpack.c.b16 %v475, %v474
      %v489 = vpack.c.b16 %v477, %v476
      %v490 = vpack.c.b16 %v479, %v478
      %v491 = vpack.c.b16 %v481, %v480
      %v492 = vpack.c.b16 %v483, %v482
      %v493 = vpack.c.b16 %v485, %v484
      %502 = vmatprep.subr.bf16.mxu0 0
      %503 = vmatpush1.bf16.msra.mxu0 %v486
      %504 = vmatprep.subr.bf16.mxu0 0
      %505 = vmatpush1.bf16.msra.mxu0 %v487
      %506 = vmatprep.subr.bf16.mxu0 0
      %507 = vmatpush1.bf16.msra.mxu0 %v488
      %508 = vmatprep.subr.bf16.mxu0 0
      %509 = vmatpush1.bf16.msra.mxu0 %v489
      %510 = vmatprep.subr.bf16.mxu0 0
      %511 = vmatpush1.bf16.msra.mxu0 %v490
      %512 = vmatprep.subr.bf16.mxu0 0
      %513 = vmatpush1.bf16.msra.mxu0 %v491
      %514 = vmatprep.subr.bf16.mxu0 0
      %515 = vmatpush1.bf16.msra.mxu0 %v492
      %516 = vmatprep.subr.bf16.mxu0 0
      %517 = vmatpush1.bf16.msra.mxu0 %v493
      %518 = vmatprep.subr.bf16.mxu0 0
      %519 = vmatpush1.bf16.msra.mxu0 0
      %520 = vmatprep.subr.bf16.mxu0 0
      %521 = vmatpush1.bf16.msra.mxu0 0
      %522 = vmatprep.subr.bf16.mxu0 0
      %523 = vmatpush1.bf16.msra.mxu0 0
      %524 = vmatprep.subr.bf16.mxu0 0
      %525 = vmatpush1.bf16.msra.mxu0 0
      %526 = vmatprep.subr.bf16.mxu0 0
      %527 = vmatpush1.bf16.msra.mxu0 0
      %528 = vmatprep.subr.bf16.mxu0 0
      %529 = vmatpush1.bf16.msra.mxu0 0
      %530 = vmatprep.subr.bf16.mxu0 0
      %531 = vmatpush1.bf16.msra.mxu0 0
      %532 = vmatprep.subr.bf16.mxu0 0
      %533 = vmatpush1.bf16.msra.mxu0 0
      %534 = vmatprep.mubr.bf16.mxu0 0
      %535 = vmatmul.mubr.bf16.gmra.mrb[0].mxu0 %v450
      %v536 = vpop.f32.mrb[0].mxu0
      %v537 = vadd.f32 %v428, %v536
      %v538 = vpop.f32.mrb[0].mxu0
      %v539 = vpop.f32.mrb[0].mxu0
      %v540 = vadd.f32 %v431, %v539
      %v541 = vpop.f32.mrb[0].mxu0
      %542 = vmatprep.mubr.bf16.mxu0 0
      %543 = vmatmul.mubr.bf16.gmra.mrb[0].mxu0 %v451
      %v544 = vpop.f32.mrb[0].mxu0
      %v545 = vadd.f32 %v436, %v544
      %v546 = vpop.f32.mrb[0].mxu0
      %v547 = vpop.f32.mrb[0].mxu0
      %v548 = vadd.f32 %v439, %v547
      %v549 = vpop.f32.mrb[0].mxu0
      %550 = vdwg.mxu0
      %v551 = vld [vmem:[%s288] sm:$0xf]
      %v552 = vld [vmem:[%s288 + $0x4] sm:$0x1]
      %v553 = vld [vmem:[%s288 + $0x8] sm:$0xf]
      %v554 = vld [vmem:[%s288 + $0xc] sm:$0x1]
      %v555 = vld [vmem:[%s288 + $0x10] sm:$0xf]
      %v556 = vld [vmem:[%s288 + $0x14] sm:$0x1]
      %v557 = vld [vmem:[%s288 + $0x18] sm:$0xf]
      %v558 = vld [vmem:[%s288 + $0x1c] sm:$0x1]
      %vm559 = vsmask.f32 3328
      %vm560 = vsmask.f32 7440
      %vm561 = vmor %vm559, %vm560
      %v563 = vshrl.u32 %v551, 16
      %v565 = vrot.slane %v563, 4
      %v566 = vshll.u32 %v551, 16
      %v568 = vrot.slane %v566, 5
      %v569 = vor.u32 %v565, %v568
      %v570 = vrot.slane %v569, 4
      %v572 = vshll.u32 %v552, 16
      %v574 = vrot.slane %v572, 5
      %v575 = vsel %vm561, %v570, %v574
      %v577 = vshrl.u32 %v553, 16
      %v579 = vrot.slane %v577, 4
      %v580 = vshll.u32 %v553, 16
      %v582 = vrot.slane %v580, 5
      %v583 = vor.u32 %v579, %v582
      %v584 = vrot.slane %v583, 4
      %v586 = vshll.u32 %v554, 16
      %v588 = vrot.slane %v586, 5
      %v589 = vsel %vm561, %v584, %v588
      %v591 = vshrl.u32 %v555, 16
      %v593 = vrot.slane %v591, 4
      %v594 = vshll.u32 %v555, 16
      %v596 = vrot.slane %v594, 5
      %v597 = vor.u32 %v593, %v596
      %v598 = vrot.slane %v597, 4
      %v600 = vshll.u32 %v556, 16
      %v602 = vrot.slane %v600, 5
      %v603 = vsel %vm561, %v598, %v602
      %v605 = vshrl.u32 %v557, 16
      %v607 = vrot.slane %v605, 4
      %v608 = vshll.u32 %v557, 16
      %v610 = vrot.slane %v608, 5
      %v611 = vor.u32 %v607, %v610
      %v612 = vrot.slane %v611, 4
      %v614 = vshll.u32 %v558, 16
      %v616 = vrot.slane %v614, 5
      %v617 = vsel %vm561, %v612, %v616
      %s618 = scalar_lea.vmem %s1, 128
      %v619 = vld [vmem:[%s618] sm:$0xf]
      %v620 = vld [vmem:[%s618 + $0x4] sm:$0xf]
      %v621 = vld [vmem:[%s618 + $0x8] sm:$0xf]
      %v622 = vld [vmem:[%s618 + $0xc] sm:$0xf]
      %v623 = vld [vmem:[%s618 + $0x10] sm:$0xf]
      %v624 = vld [vmem:[%s618 + $0x14] sm:$0xf]
      %v625 = vld [vmem:[%s618 + $0x18] sm:$0xf]
      %v626 = vld [vmem:[%s618 + $0x1c] sm:$0xf]
      %v627 = vld [vmem:[%s618 + $0x20] sm:$0xf]
      %v628 = vld [vmem:[%s618 + $0x24] sm:$0xf]
      %v629 = vld [vmem:[%s618 + $0x28] sm:$0xf]
      %v630 = vld [vmem:[%s618 + $0x2c] sm:$0xf]
      %v631 = vld [vmem:[%s618 + $0x30] sm:$0xf]
      %v632 = vld [vmem:[%s618 + $0x34] sm:$0xf]
      %v633 = vld [vmem:[%s618 + $0x38] sm:$0xf]
      %v634 = vld [vmem:[%s618 + $0x3c] sm:$0xf]
      %v635 = vunpack.c.l.b16 %v575
      %v636 = vunpack.c.l.b16 %v589
      %v637 = vunpack.c.l.b16 %v603
      %v638 = vunpack.c.l.b16 %v617
      %v639 = vpack.c.b16 %v636, %v635
      %v640 = vpack.c.b16 %v638, %v637
      %v659 = vunpack.c.l.b16 %v619
      %v660 = vunpack.c.l.b16 %v620
      %v661 = vunpack.c.l.b16 %v621
      %v662 = vunpack.c.l.b16 %v622
      %v663 = vunpack.c.l.b16 %v623
      %v664 = vunpack.c.l.b16 %v624
      %v665 = vunpack.c.l.b16 %v625
      %v666 = vunpack.c.l.b16 %v626
      %v667 = vunpack.c.l.b16 %v627
      %v668 = vunpack.c.l.b16 %v628
      %v669 = vunpack.c.l.b16 %v629
      %v670 = vunpack.c.l.b16 %v630
      %v671 = vunpack.c.l.b16 %v631
      %v672 = vunpack.c.l.b16 %v632
      %v673 = vunpack.c.l.b16 %v633
      %v674 = vunpack.c.l.b16 %v634
      %v675 = vpack.c.b16 %v660, %v659
      %v676 = vpack.c.b16 %v662, %v661
      %v677 = vpack.c.b16 %v664, %v663
      %v678 = vpack.c.b16 %v666, %v665
      %v679 = vpack.c.b16 %v668, %v667
      %v680 = vpack.c.b16 %v670, %v669
      %v681 = vpack.c.b16 %v672, %v671
      %v682 = vpack.c.b16 %v674, %v673
      %691 = vmatprep.subr.bf16.mxu0 0
      %692 = vmatpush1.bf16.msra.mxu0 %v675
      %693 = vmatprep.subr.bf16.mxu0 0
      %694 = vmatpush1.bf16.msra.mxu0 %v676
      %695 = vmatprep.subr.bf16.mxu0 0
      %696 = vmatpush1.bf16.msra.mxu0 %v677
      %697 = vmatprep.subr.bf16.mxu0 0
      %698 = vmatpush1.bf16.msra.mxu0 %v678
      %699 = vmatprep.subr.bf16.mxu0 0
      %700 = vmatpush1.bf16.msra.mxu0 %v679
      %701 = vmatprep.subr.bf16.mxu0 0
      %702 = vmatpush1.bf16.msra.mxu0 %v680
      %703 = vmatprep.subr.bf16.mxu0 0
      %704 = vmatpush1.bf16.msra.mxu0 %v681
      %705 = vmatprep.subr.bf16.mxu0 0
      %706 = vmatpush1.bf16.msra.mxu0 %v682
      %707 = vmatprep.subr.bf16.mxu0 0
      %708 = vmatpush1.bf16.msra.mxu0 0
      %709 = vmatprep.subr.bf16.mxu0 0
      %710 = vmatpush1.bf16.msra.mxu0 0
      %711 = vmatprep.subr.bf16.mxu0 0
      %712 = vmatpush1.bf16.msra.mxu0 0
      %713 = vmatprep.subr.bf16.mxu0 0
      %714 = vmatpush1.bf16.msra.mxu0 0
      %715 = vmatprep.subr.bf16.mxu0 0
      %716 = vmatpush1.bf16.msra.mxu0 0
      %717 = vmatprep.subr.bf16.mxu0 0
      %718 = vmatpush1.bf16.msra.mxu0 0
      %719 = vmatprep.subr.bf16.mxu0 0
      %720 = vmatpush1.bf16.msra.mxu0 0
      %721 = vmatprep.subr.bf16.mxu0 0
      %722 = vmatpush1.bf16.msra.mxu0 0
      %723 = vmatprep.mubr.bf16.mxu0 0
      %724 = vmatmul.mubr.bf16.gmra.mrb[0].mxu0 %v639
      %v725 = vpop.f32.mrb[0].mxu0
      %v726 = vadd.f32 0.0, %v725
      %v727 = vpop.f32.mrb[0].mxu0
      %v728 = vpop.f32.mrb[0].mxu0
      %v729 = vadd.f32 0.0, %v728
      %v730 = vpop.f32.mrb[0].mxu0
      %731 = vmatprep.mubr.bf16.mxu0 0
      %732 = vmatmul.mubr.bf16.gmra.mrb[0].mxu0 %v640
      %v733 = vpop.f32.mrb[0].mxu0
      %v734 = vadd.f32 0.0, %v733
      %v735 = vpop.f32.mrb[0].mxu0
      %v736 = vpop.f32.mrb[0].mxu0
      %v737 = vadd.f32 0.0, %v736
      %v738 = vpop.f32.mrb[0].mxu0
      %739 = vdwg.mxu0
      %v740 = vadd.f32 %v537, %v726
      %v741 = vadd.f32 %v540, %v729
      %v742 = vadd.f32 %v545, %v734
      %v743 = vadd.f32 %v548, %v737
      %s744 = sadd.s32 %s286, 36
      %s745 = smul.addr %s744, 4
      %s746 = scalar_lea.vmem %s263, %s745
      %v747 = vld [vmem:[%s746] sm:$0xf]
      %v748 = vld [vmem:[%s746 + $0x8] sm:$0xf]
      %v749 = vld [vmem:[%s746 + $0x10] sm:$0xf]
      %v750 = vld [vmem:[%s746 + $0x18] sm:$0xf]
      %s751 = scalar_lea.vmem %s1, 192
      %v752 = vld [vmem:[%s751] sm:$0xf]
      %v753 = vld [vmem:[%s751 + $0x4] sm:$0xf]
      %v754 = vld [vmem:[%s751 + $0x8] sm:$0xf]
      %v755 = vld [vmem:[%s751 + $0xc] sm:$0xf]
      %v756 = vld [vmem:[%s751 + $0x10] sm:$0xf]
      %v757 = vld [vmem:[%s751 + $0x14] sm:$0xf]
      %v758 = vld [vmem:[%s751 + $0x18] sm:$0xf]
      %v759 = vld [vmem:[%s751 + $0x1c] sm:$0xf]
      %v760 = vld [vmem:[%s751 + $0x20] sm:$0xf]
      %v761 = vld [vmem:[%s751 + $0x24] sm:$0xf]
      %v762 = vld [vmem:[%s751 + $0x28] sm:$0xf]
      %v763 = vld [vmem:[%s751 + $0x2c] sm:$0xf]
      %v764 = vld [vmem:[%s751 + $0x30] sm:$0xf]
      %v765 = vld [vmem:[%s751 + $0x34] sm:$0xf]
      %v766 = vld [vmem:[%s751 + $0x38] sm:$0xf]
      %v767 = vld [vmem:[%s751 + $0x3c] sm:$0xf]
      %v772 = vunpack.c.l.b16 %v747
      %v773 = vunpack.c.l.b16 %v748
      %v774 = vunpack.c.l.b16 %v749
      %v775 = vunpack.c.l.b16 %v750
      %v776 = vpack.c.b16 %v773, %v772
      %v777 = vpack.c.b16 %v775, %v774
      %v796 = vunpack.c.l.b16 %v752
      %v797 = vunpack.c.l.b16 %v753
      %v798 = vunpack.c.l.b16 %v754
      %v799 = vunpack.c.l.b16 %v755
      %v800 = vunpack.c.l.b16 %v756
      %v801 = vunpack.c.l.b16 %v757
      %v802 = vunpack.c.l.b16 %v758
      %v803 = vunpack.c.l.b16 %v759
      %v804 = vunpack.c.l.b16 %v760
      %v805 = vunpack.c.l.b16 %v761
      %v806 = vunpack.c.l.b16 %v762
      %v807 = vunpack.c.l.b16 %v763
      %v808 = vunpack.c.l.b16 %v764
      %v809 = vunpack.c.l.b16 %v765
      %v810 = vunpack.c.l.b16 %v766
      %v811 = vunpack.c.l.b16 %v767
      %v812 = vpack.c.b16 %v797, %v796
      %v813 = vpack.c.b16 %v799, %v798
      %v814 = vpack.c.b16 %v801, %v800
      %v815 = vpack.c.b16 %v803, %v802
      %v816 = vpack.c.b16 %v805, %v804
      %v817 = vpack.c.b16 %v807, %v806
      %v818 = vpack.c.b16 %v809, %v808
      %v819 = vpack.c.b16 %v811, %v810
      %828 = vmatprep.subr.bf16.mxu0 0
      %829 = vmatpush1.bf16.msra.mxu0 %v812
      %830 = vmatprep.subr.bf16.mxu0 0
      %831 = vmatpush1.bf16.msra.mxu0 %v813
      %832 = vmatprep.subr.bf16.mxu0 0
      %833 = vmatpush1.bf16.msra.mxu0 %v814
      %834 = vmatprep.subr.bf16.mxu0 0
      %835 = vmatpush1.bf16.msra.mxu0 %v815
      %836 = vmatprep.subr.bf16.mxu0 0
      %837 = vmatpush1.bf16.msra.mxu0 %v816
      %838 = vmatprep.subr.bf16.mxu0 0
      %839 = vmatpush1.bf16.msra.mxu0 %v817
      %840 = vmatprep.subr.bf16.mxu0 0
      %841 = vmatpush1.bf16.msra.mxu0 %v818
      %842 = vmatprep.subr.bf16.mxu0 0
      %843 = vmatpush1.bf16.msra.mxu0 %v819
      %844 = vmatprep.subr.bf16.mxu0 0
      %845 = vmatpush1.bf16.msra.mxu0 0
      %846 = vmatprep.subr.bf16.mxu0 0
      %847 = vmatpush1.bf16.msra.mxu0 0
      %848 = vmatprep.subr.bf16.mxu0 0
      %849 = vmatpush1.bf16.msra.mxu0 0
      %850 = vmatprep.subr.bf16.mxu0 0
      %851 = vmatpush1.bf16.msra.mxu0 0
      %852 = vmatprep.subr.bf16.mxu0 0
      %853 = vmatpush1.bf16.msra.mxu0 0
      %854 = vmatprep.subr.bf16.mxu0 0
      %855 = vmatpush1.bf16.msra.mxu0 0
      %856 = vmatprep.subr.bf16.mxu0 0
      %857 = vmatpush1.bf16.msra.mxu0 0
      %858 = vmatprep.subr.bf16.mxu0 0
      %859 = vmatpush1.bf16.msra.mxu0 0
      %860 = vmatprep.mubr.bf16.mxu0 0
      %861 = vmatmul.mubr.bf16.gmra.mrb[0].mxu0 %v776
      %v862 = vpop.f32.mrb[0].mxu0
      %v863 = vadd.f32 0.0, %v862
      %v864 = vpop.f32.mrb[0].mxu0
      %v865 = vpop.f32.mrb[0].mxu0
      %v866 = vadd.f32 0.0, %v865
      %v867 = vpop.f32.mrb[0].mxu0
      %868 = vmatprep.mubr.bf16.mxu0 0
      %869 = vmatmul.mubr.bf16.gmra.mrb[0].mxu0 %v777
      %v870 = vpop.f32.mrb[0].mxu0
      %v871 = vadd.f32 0.0, %v870
      %v872 = vpop.f32.mrb[0].mxu0
      %v873 = vpop.f32.mrb[0].mxu0
      %v874 = vadd.f32 0.0, %v873
      %v875 = vpop.f32.mrb[0].mxu0
      %876 = vdwg.mxu0
      %v877 = vadd.f32 %v740, %v863
      %v878 = vadd.f32 %v741, %v866
      %v879 = vadd.f32 %v742, %v871
      %v880 = vadd.f32 %v743, %v874
      %s881 = sadd.s32 %s286, 54
      %s882 = smul.addr %s881, 4
      %s883 = scalar_lea.vmem %s263, %s882
      %v884 = vld [vmem:[%s883] sm:$0xf]
      %v885 = vld [vmem:[%s883 + $0x8] sm:$0xf]
      %v886 = vld [vmem:[%s883 + $0x10] sm:$0xf]
      %v887 = vld [vmem:[%s883 + $0x18] sm:$0xf]
      %s888 = scalar_lea.vmem %s1, 256
      %v889 = vld [vmem:[%s888] sm:$0xf]
      %v890 = vld [vmem:[%s888 + $0x4] sm:$0xf]
      %v891 = vld [vmem:[%s888 + $0x8] sm:$0xf]
      %v892 = vld [vmem:[%s888 + $0xc] sm:$0xf]
      %v893 = vld [vmem:[%s888 + $0x10] sm:$0xf]
      %v894 = vld [vmem:[%s888 + $0x14] sm:$0xf]
      %v895 = vld [vmem:[%s888 + $0x18] sm:$0xf]
      %v896 = vld [vmem:[%s888 + $0x1c] sm:$0xf]
      %v897 = vld [vmem:[%s888 + $0x20] sm:$0xf]
      %v898 = vld [vmem:[%s888 + $0x24] sm:$0xf]
      %v899 = vld [vmem:[%s888 + $0x28] sm:$0xf]
      %v900 = vld [vmem:[%s888 + $0x2c] sm:$0xf]
      %v901 = vld [vmem:[%s888 + $0x30] sm:$0xf]
      %v902 = vld [vmem:[%s888 + $0x34] sm:$0xf]
      %v903 = vld [vmem:[%s888 + $0x38] sm:$0xf]
      %v904 = vld [vmem:[%s888 + $0x3c] sm:$0xf]
      %v909 = vunpack.c.l.b16 %v884
      %v910 = vunpack.c.l.b16 %v885
      %v911 = vunpack.c.l.b16 %v886
      %v912 = vunpack.c.l.b16 %v887
      %v913 = vpack.c.b16 %v910, %v909
      %v914 = vpack.c.b16 %v912, %v911
      %v933 = vunpack.c.l.b16 %v889
      %v934 = vunpack.c.l.b16 %v890
      %v935 = vunpack.c.l.b16 %v891
      %v936 = vunpack.c.l.b16 %v892
      %v937 = vunpack.c.l.b16 %v893
      %v938 = vunpack.c.l.b16 %v894
      %v939 = vunpack.c.l.b16 %v895
      %v940 = vunpack.c.l.b16 %v896
      %v941 = vunpack.c.l.b16 %v897
      %v942 = vunpack.c.l.b16 %v898
      %v943 = vunpack.c.l.b16 %v899
      %v944 = vunpack.c.l.b16 %v900
      %v945 = vunpack.c.l.b16 %v901
      %v946 = vunpack.c.l.b16 %v902
      %v947 = vunpack.c.l.b16 %v903
      %v948 = vunpack.c.l.b16 %v904
      %v949 = vpack.c.b16 %v934, %v933
      %v950 = vpack.c.b16 %v936, %v935
      %v951 = vpack.c.b16 %v938, %v937
      %v952 = vpack.c.b16 %v940, %v939
      %v953 = vpack.c.b16 %v942, %v941
      %v954 = vpack.c.b16 %v944, %v943
      %v955 = vpack.c.b16 %v946, %v945
      %v956 = vpack.c.b16 %v948, %v947
      %965 = vmatprep.subr.bf16.mxu0 0
      %966 = vmatpush1.bf16.msra.mxu0 %v949
      %967 = vmatprep.subr.bf16.mxu0 0
      %968 = vmatpush1.bf16.msra.mxu0 %v950
      %969 = vmatprep.subr.bf16.mxu0 0
      %970 = vmatpush1.bf16.msra.mxu0 %v951
      %971 = vmatprep.subr.bf16.mxu0 0
      %972 = vmatpush1.bf16.msra.mxu0 %v952
      %973 = vmatprep.subr.bf16.mxu0 0
      %974 = vmatpush1.bf16.msra.mxu0 %v953
      %975 = vmatprep.subr.bf16.mxu0 0
      %976 = vmatpush1.bf16.msra.mxu0 %v954
      %977 = vmatprep.subr.bf16.mxu0 0
      %978 = vmatpush1.bf16.msra.mxu0 %v955
      %979 = vmatprep.subr.bf16.mxu0 0
      %980 = vmatpush1.bf16.msra.mxu0 %v956
      %981 = vmatprep.subr.bf16.mxu0 0
      %982 = vmatpush1.bf16.msra.mxu0 0
      %983 = vmatprep.subr.bf16.mxu0 0
      %984 = vmatpush1.bf16.msra.mxu0 0
      %985 = vmatprep.subr.bf16.mxu0 0
      %986 = vmatpush1.bf16.msra.mxu0 0
      %987 = vmatprep.subr.bf16.mxu0 0
      %988 = vmatpush1.bf16.msra.mxu0 0
      %989 = vmatprep.subr.bf16.mxu0 0
      %990 = vmatpush1.bf16.msra.mxu0 0
      %991 = vmatprep.subr.bf16.mxu0 0
      %992 = vmatpush1.bf16.msra.mxu0 0
      %993 = vmatprep.subr.bf16.mxu0 0
      %994 = vmatpush1.bf16.msra.mxu0 0
      %995 = vmatprep.subr.bf16.mxu0 0
      %996 = vmatpush1.bf16.msra.mxu0 0
      %997 = vmatprep.mubr.bf16.mxu0 0
      %998 = vmatmul.mubr.bf16.gmra.mrb[0].mxu0 %v913
      %v999 = vpop.f32.mrb[0].mxu0
      %v1000 = vadd.f32 0.0, %v999
      %v1001 = vpop.f32.mrb[0].mxu0
      %v1002 = vpop.f32.mrb[0].mxu0
      %v1003 = vadd.f32 0.0, %v1002
      %v1004 = vpop.f32.mrb[0].mxu0
      %1005 = vmatprep.mubr.bf16.mxu0 0
      %1006 = vmatmul.mubr.bf16.gmra.mrb[0].mxu0 %v914
      %v1007 = vpop.f32.mrb[0].mxu0
      %v1008 = vadd.f32 0.0, %v1007
      %v1009 = vpop.f32.mrb[0].mxu0
      %v1010 = vpop.f32.mrb[0].mxu0
      %v1011 = vadd.f32 0.0, %v1010
      %v1012 = vpop.f32.mrb[0].mxu0
      %1013 = vdwg.mxu0
      %v1014 = vadd.f32 %v877, %v1000
      %v1015 = vadd.f32 %v878, %v1003
      %v1016 = vadd.f32 %v879, %v1008
      %v1017 = vadd.f32 %v880, %v1011
      %v1018 = vld [vmem:[%s746] sm:$0xf]
      %v1019 = vld [vmem:[%s746 + $0x4] sm:$0x1]
      %v1020 = vld [vmem:[%s746 + $0x8] sm:$0xf]
      %v1021 = vld [vmem:[%s746 + $0xc] sm:$0x1]
      %v1022 = vld [vmem:[%s746 + $0x10] sm:$0xf]
      %v1023 = vld [vmem:[%s746 + $0x14] sm:$0x1]
      %v1024 = vld [vmem:[%s746 + $0x18] sm:$0xf]
      %v1025 = vld [vmem:[%s746 + $0x1c] sm:$0x1]
      %v1027 = vshrl.u32 %v1018, 16
      %v1029 = vrot.slane %v1027, 4
      %v1030 = vshll.u32 %v1018, 16
      %v1032 = vrot.slane %v1030, 5
      %v1033 = vor.u32 %v1029, %v1032
      %v1034 = vrot.slane %v1033, 4
      %v1036 = vshll.u32 %v1019, 16
      %v1038 = vrot.slane %v1036, 5
      %v1039 = vsel %vm561, %v1034, %v1038
      %v1041 = vshrl.u32 %v1020, 16
      %v1043 = vrot.slane %v1041, 4
      %v1044 = vshll.u32 %v1020, 16
      %v1046 = vrot.slane %v1044, 5
      %v1047 = vor.u32 %v1043, %v1046
      %v1048 = vrot.slane %v1047, 4
      %v1050 = vshll.u32 %v1021, 16
      %v1052 = vrot.slane %v1050, 5
      %v1053 = vsel %vm561, %v1048, %v1052
      %v1055 = vshrl.u32 %v1022, 16
      %v1057 = vrot.slane %v1055, 4
      %v1058 = vshll.u32 %v1022, 16
      %v1060 = vrot.slane %v1058, 5
      %v1061 = vor.u32 %v1057, %v1060
      %v1062 = vrot.slane %v1061, 4
      %v1064 = vshll.u32 %v1023, 16
      %v1066 = vrot.slane %v1064, 5
      %v1067 = vsel %vm561, %v1062, %v1066
      %v1069 = vshrl.u32 %v1024, 16
      %v1071 = vrot.slane %v1069, 4
      %v1072 = vshll.u32 %v1024, 16
      %v1074 = vrot.slane %v1072, 5
      %v1075 = vor.u32 %v1071, %v1074
      %v1076 = vrot.slane %v1075, 4
      %v1078 = vshll.u32 %v1025, 16
      %v1080 = vrot.slane %v1078, 5
      %v1081 = vsel %vm561, %v1076, %v1080
      %s1082 = scalar_lea.vmem %s1, 320
      %v1083 = vld [vmem:[%s1082] sm:$0xf]
      %v1084 = vld [vmem:[%s1082 + $0x4] sm:$0xf]
      %v1085 = vld [vmem:[%s1082 + $0x8] sm:$0xf]
      %v1086 = vld [vmem:[%s1082 + $0xc] sm:$0xf]
      %v1087 = vld [vmem:[%s1082 + $0x10] sm:$0xf]
      %v1088 = vld [vmem:[%s1082 + $0x14] sm:$0xf]
      %v1089 = vld [vmem:[%s1082 + $0x18] sm:$0xf]
      %v1090 = vld [vmem:[%s1082 + $0x1c] sm:$0xf]
      %v1091 = vld [vmem:[%s1082 + $0x20] sm:$0xf]
      %v1092 = vld [vmem:[%s1082 + $0x24] sm:$0xf]
      %v1093 = vld [vmem:[%s1082 + $0x28] sm:$0xf]
      %v1094 = vld [vmem:[%s1082 + $0x2c] sm:$0xf]
      %v1095 = vld [vmem:[%s1082 + $0x30] sm:$0xf]
      %v1096 = vld [vmem:[%s1082 + $0x34] sm:$0xf]
      %v1097 = vld [vmem:[%s1082 + $0x38] sm:$0xf]
      %v1098 = vld [vmem:[%s1082 + $0x3c] sm:$0xf]
      %v1099 = vunpack.c.l.b16 %v1039
      %v1100 = vunpack.c.l.b16 %v1053
      %v1101 = vunpack.c.l.b16 %v1067
      %v1102 = vunpack.c.l.b16 %v1081
      %v1103 = vpack.c.b16 %v1100, %v1099
      %v1104 = vpack.c.b16 %v1102, %v1101
      %v1123 = vunpack.c.l.b16 %v1083
      %v1124 = vunpack.c.l.b16 %v1084
      %v1125 = vunpack.c.l.b16 %v1085
      %v1126 = vunpack.c.l.b16 %v1086
      %v1127 = vunpack.c.l.b16 %v1087
      %v1128 = vunpack.c.l.b16 %v1088
      %v1129 = vunpack.c.l.b16 %v1089
      %v1130 = vunpack.c.l.b16 %v1090
      %v1131 = vunpack.c.l.b16 %v1091
      %v1132 = vunpack.c.l.b16 %v1092
      %v1133 = vunpack.c.l.b16 %v1093
      %v1134 = vunpack.c.l.b16 %v1094
      %v1135 = vunpack.c.l.b16 %v1095
      %v1136 = vunpack.c.l.b16 %v1096
      %v1137 = vunpack.c.l.b16 %v1097
      %v1138 = vunpack.c.l.b16 %v1098
      %v1139 = vpack.c.b16 %v1124, %v1123
      %v1140 = vpack.c.b16 %v1126, %v1125
      %v1141 = vpack.c.b16 %v1128, %v1127
      %v1142 = vpack.c.b16 %v1130, %v1129
      %v1143 = vpack.c.b16 %v1132, %v1131
      %v1144 = vpack.c.b16 %v1134, %v1133
      %v1145 = vpack.c.b16 %v1136, %v1135
      %v1146 = vpack.c.b16 %v1138, %v1137
      %1155 = vmatprep.subr.bf16.mxu0 0
      %1156 = vmatpush1.bf16.msra.mxu0 %v1139
      %1157 = vmatprep.subr.bf16.mxu0 0
      %1158 = vmatpush1.bf16.msra.mxu0 %v1140
      %1159 = vmatprep.subr.bf16.mxu0 0
      %1160 = vmatpush1.bf16.msra.mxu0 %v1141
      %1161 = vmatprep.subr.bf16.mxu0 0
      %1162 = vmatpush1.bf16.msra.mxu0 %v1142
      %1163 = vmatprep.subr.bf16.mxu0 0
      %1164 = vmatpush1.bf16.msra.mxu0 %v1143
      %1165 = vmatprep.subr.bf16.mxu0 0
      %1166 = vmatpush1.bf16.msra.mxu0 %v1144
      %1167 = vmatprep.subr.bf16.mxu0 0
      %1168 = vmatpush1.bf16.msra.mxu0 %v1145
      %1169 = vmatprep.subr.bf16.mxu0 0
      %1170 = vmatpush1.bf16.msra.mxu0 %v1146
      %1171 = vmatprep.subr.bf16.mxu0 0
      %1172 = vmatpush1.bf16.msra.mxu0 0
      %1173 = vmatprep.subr.bf16.mxu0 0
      %1174 = vmatpush1.bf16.msra.mxu0 0
      %1175 = vmatprep.subr.bf16.mxu0 0
      %1176 = vmatpush1.bf16.msra.mxu0 0
      %1177 = vmatprep.subr.bf16.mxu0 0
      %1178 = vmatpush1.bf16.msra.mxu0 0
      %1179 = vmatprep.subr.bf16.mxu0 0
      %1180 = vmatpush1.bf16.msra.mxu0 0
      %1181 = vmatprep.subr.bf16.mxu0 0
      %1182 = vmatpush1.bf16.msra.mxu0 0
      %1183 = vmatprep.subr.bf16.mxu0 0
      %1184 = vmatpush1.bf16.msra.mxu0 0
      %1185 = vmatprep.subr.bf16.mxu0 0
      %1186 = vmatpush1.bf16.msra.mxu0 0
      %1187 = vmatprep.mubr.bf16.mxu0 0
      %1188 = vmatmul.mubr.bf16.gmra.mrb[0].mxu0 %v1103
      %v1189 = vpop.f32.mrb[0].mxu0
      %v1190 = vadd.f32 0.0, %v1189
      %v1191 = vpop.f32.mrb[0].mxu0
      %v1192 = vpop.f32.mrb[0].mxu0
      %v1193 = vadd.f32 0.0, %v1192
      %v1194 = vpop.f32.mrb[0].mxu0
      %1195 = vmatprep.mubr.bf16.mxu0 0
      %1196 = vmatmul.mubr.bf16.gmra.mrb[0].mxu0 %v1104
      %v1197 = vpop.f32.mrb[0].mxu0
      %v1198 = vadd.f32 0.0, %v1197
      %v1199 = vpop.f32.mrb[0].mxu0
      %v1200 = vpop.f32.mrb[0].mxu0
      %v1201 = vadd.f32 0.0, %v1200
      %v1202 = vpop.f32.mrb[0].mxu0
      %1203 = vdwg.mxu0
      %v1204 = vadd.f32 %v1014, %v1190
      %v1205 = vadd.f32 %v1015, %v1193
      %v1206 = vadd.f32 %v1016, %v1198
      %v1207 = vadd.f32 %v1017, %v1201
      %s1208 = sadd.s32 %s285, 1
      %s1209 = smul.u32 %s1208, 2
      %s1210 = smul.addr %s1209, 4
      %s1211 = scalar_lea.vmem %s263, %s1210
      %v1212 = vld [vmem:[%s1211] sm:$0xf]
      %v1213 = vld [vmem:[%s1211 + $0x8] sm:$0xf]
      %v1214 = vld [vmem:[%s1211 + $0x10] sm:$0xf]
      %v1215 = vld [vmem:[%s1211 + $0x18] sm:$0xf]
      %s1216 = scalar_lea.vmem %s1, 384
      %v1217 = vld [vmem:[%s1216] sm:$0xf]
      %v1218 = vld [vmem:[%s1216 + $0x4] sm:$0xf]
      %v1219 = vld [vmem:[%s1216 + $0x8] sm:$0xf]
      %v1220 = vld [vmem:[%s1216 + $0xc] sm:$0xf]
      %v1221 = vld [vmem:[%s1216 + $0x10] sm:$0xf]
      %v1222 = vld [vmem:[%s1216 + $0x14] sm:$0xf]
      %v1223 = vld [vmem:[%s1216 + $0x18] sm:$0xf]
      %v1224 = vld [vmem:[%s1216 + $0x1c] sm:$0xf]
      %v1225 = vld [vmem:[%s1216 + $0x20] sm:$0xf]
      %v1226 = vld [vmem:[%s1216 + $0x24] sm:$0xf]
      %v1227 = vld [vmem:[%s1216 + $0x28] sm:$0xf]
      %v1228 = vld [vmem:[%s1216 + $0x2c] sm:$0xf]
      %v1229 = vld [vmem:[%s1216 + $0x30] sm:$0xf]
      %v1230 = vld [vmem:[%s1216 + $0x34] sm:$0xf]
      %v1231 = vld [vmem:[%s1216 + $0x38] sm:$0xf]
      %v1232 = vld [vmem:[%s1216 + $0x3c] sm:$0xf]
      %v1237 = vunpack.c.l.b16 %v1212
      %v1238 = vunpack.c.l.b16 %v1213
      %v1239 = vunpack.c.l.b16 %v1214
      %v1240 = vunpack.c.l.b16 %v1215
      %v1241 = vpack.c.b16 %v1238, %v1237
      %v1242 = vpack.c.b16 %v1240, %v1239
      %v1261 = vunpack.c.l.b16 %v1217
      %v1262 = vunpack.c.l.b16 %v1218
      %v1263 = vunpack.c.l.b16 %v1219
      %v1264 = vunpack.c.l.b16 %v1220
      %v1265 = vunpack.c.l.b16 %v1221
      %v1266 = vunpack.c.l.b16 %v1222
      %v1267 = vunpack.c.l.b16 %v1223
      %v1268 = vunpack.c.l.b16 %v1224
      %v1269 = vunpack.c.l.b16 %v1225
      %v1270 = vunpack.c.l.b16 %v1226
      %v1271 = vunpack.c.l.b16 %v1227
      %v1272 = vunpack.c.l.b16 %v1228
      %v1273 = vunpack.c.l.b16 %v1229
      %v1274 = vunpack.c.l.b16 %v1230
      %v1275 = vunpack.c.l.b16 %v1231
      %v1276 = vunpack.c.l.b16 %v1232
      %v1277 = vpack.c.b16 %v1262, %v1261
      %v1278 = vpack.c.b16 %v1264, %v1263
      %v1279 = vpack.c.b16 %v1266, %v1265
      %v1280 = vpack.c.b16 %v1268, %v1267
      %v1281 = vpack.c.b16 %v1270, %v1269
      %v1282 = vpack.c.b16 %v1272, %v1271
      %v1283 = vpack.c.b16 %v1274, %v1273
      %v1284 = vpack.c.b16 %v1276, %v1275
      %1293 = vmatprep.subr.bf16.mxu0 0
      %1294 = vmatpush1.bf16.msra.mxu0 %v1277
      %1295 = vmatprep.subr.bf16.mxu0 0
      %1296 = vmatpush1.bf16.msra.mxu0 %v1278
      %1297 = vmatprep.subr.bf16.mxu0 0
      %1298 = vmatpush1.bf16.msra.mxu0 %v1279
      %1299 = vmatprep.subr.bf16.mxu0 0
      %1300 = vmatpush1.bf16.msra.mxu0 %v1280
      %1301 = vmatprep.subr.bf16.mxu0 0
      %1302 = vmatpush1.bf16.msra.mxu0 %v1281
      %1303 = vmatprep.subr.bf16.mxu0 0
      %1304 = vmatpush1.bf16.msra.mxu0 %v1282
      %1305 = vmatprep.subr.bf16.mxu0 0
      %1306 = vmatpush1.bf16.msra.mxu0 %v1283
      %1307 = vmatprep.subr.bf16.mxu0 0
      %1308 = vmatpush1.bf16.msra.mxu0 %v1284
      %1309 = vmatprep.subr.bf16.mxu0 0
      %1310 = vmatpush1.bf16.msra.mxu0 0
      %1311 = vmatprep.subr.bf16.mxu0 0
      %1312 = vmatpush1.bf16.msra.mxu0 0
      %1313 = vmatprep.subr.bf16.mxu0 0
      %1314 = vmatpush1.bf16.msra.mxu0 0
      %1315 = vmatprep.subr.bf16.mxu0 0
      %1316 = vmatpush1.bf16.msra.mxu0 0
      %1317 = vmatprep.subr.bf16.mxu0 0
      %1318 = vmatpush1.bf16.msra.mxu0 0
      %1319 = vmatprep.subr.bf16.mxu0 0
      %1320 = vmatpush1.bf16.msra.mxu0 0
      %1321 = vmatprep.subr.bf16.mxu0 0
      %1322 = vmatpush1.bf16.msra.mxu0 0
      %1323 = vmatprep.subr.bf16.mxu0 0
      %1324 = vmatpush1.bf16.msra.mxu0 0
      %1325 = vmatprep.mubr.bf16.mxu0 0
      %1326 = vmatmul.mubr.bf16.gmra.mrb[0].mxu0 %v1241
      %v1327 = vpop.f32.mrb[0].mxu0
      %v1328 = vadd.f32 0.0, %v1327
      %v1329 = vpop.f32.mrb[0].mxu0
      %v1330 = vpop.f32.mrb[0].mxu0
      %v1331 = vadd.f32 0.0, %v1330
      %v1332 = vpop.f32.mrb[0].mxu0
      %1333 = vmatprep.mubr.bf16.mxu0 0
      %1334 = vmatmul.mubr.bf16.gmra.mrb[0].mxu0 %v1242
      %v1335 = vpop.f32.mrb[0].mxu0
      %v1336 = vadd.f32 0.0, %v1335
      %v1337 = vpop.f32.mrb[0].mxu0
      %v1338 = vpop.f32.mrb[0].mxu0
      %v1339 = vadd.f32 0.0, %v1338
      %v1340 = vpop.f32.mrb[0].mxu0
      %1341 = vdwg.mxu0
      %v1342 = vadd.f32 %v1204, %v1328
      %v1343 = vadd.f32 %v1205, %v1331
      %v1344 = vadd.f32 %v1206, %v1336
      %v1345 = vadd.f32 %v1207, %v1339
      %s1346 = sadd.s32 %s1209, 18
      %s1347 = smul.addr %s1346, 4
      %s1348 = scalar_lea.vmem %s263, %s1347
      %v1349 = vld [vmem:[%s1348] sm:$0xf]
      %v1350 = vld [vmem:[%s1348 + $0x8] sm:$0xf]
      %v1351 = vld [vmem:[%s1348 + $0x10] sm:$0xf]
      %v1352 = vld [vmem:[%s1348 + $0x18] sm:$0xf]
      %s1353 = scalar_lea.vmem %s1, 448
      %v1354 = vld [vmem:[%s1353] sm:$0xf]
      %v1355 = vld [vmem:[%s1353 + $0x4] sm:$0xf]
      %v1356 = vld [vmem:[%s1353 + $0x8] sm:$0xf]
      %v1357 = vld [vmem:[%s1353 + $0xc] sm:$0xf]
      %v1358 = vld [vmem:[%s1353 + $0x10] sm:$0xf]
      %v1359 = vld [vmem:[%s1353 + $0x14] sm:$0xf]
      %v1360 = vld [vmem:[%s1353 + $0x18] sm:$0xf]
      %v1361 = vld [vmem:[%s1353 + $0x1c] sm:$0xf]
      %v1362 = vld [vmem:[%s1353 + $0x20] sm:$0xf]
      %v1363 = vld [vmem:[%s1353 + $0x24] sm:$0xf]
      %v1364 = vld [vmem:[%s1353 + $0x28] sm:$0xf]
      %v1365 = vld [vmem:[%s1353 + $0x2c] sm:$0xf]
      %v1366 = vld [vmem:[%s1353 + $0x30] sm:$0xf]
      %v1367 = vld [vmem:[%s1353 + $0x34] sm:$0xf]
      %v1368 = vld [vmem:[%s1353 + $0x38] sm:$0xf]
      %v1369 = vld [vmem:[%s1353 + $0x3c] sm:$0xf]
      %v1374 = vunpack.c.l.b16 %v1349
      %v1375 = vunpack.c.l.b16 %v1350
      %v1376 = vunpack.c.l.b16 %v1351
      %v1377 = vunpack.c.l.b16 %v1352
      %v1378 = vpack.c.b16 %v1375, %v1374
      %v1379 = vpack.c.b16 %v1377, %v1376
      %v1398 = vunpack.c.l.b16 %v1354
      %v1399 = vunpack.c.l.b16 %v1355
      %v1400 = vunpack.c.l.b16 %v1356
      %v1401 = vunpack.c.l.b16 %v1357
      %v1402 = vunpack.c.l.b16 %v1358
      %v1403 = vunpack.c.l.b16 %v1359
      %v1404 = vunpack.c.l.b16 %v1360
      %v1405 = vunpack.c.l.b16 %v1361
      %v1406 = vunpack.c.l.b16 %v1362
      %v1407 = vunpack.c.l.b16 %v1363
      %v1408 = vunpack.c.l.b16 %v1364
      %v1409 = vunpack.c.l.b16 %v1365
      %v1410 = vunpack.c.l.b16 %v1366
      %v1411 = vunpack.c.l.b16 %v1367
      %v1412 = vunpack.c.l.b16 %v1368
      %v1413 = vunpack.c.l.b16 %v1369
      %v1414 = vpack.c.b16 %v1399, %v1398
      %v1415 = vpack.c.b16 %v1401, %v1400
      %v1416 = vpack.c.b16 %v1403, %v1402
      %v1417 = vpack.c.b16 %v1405, %v1404
      %v1418 = vpack.c.b16 %v1407, %v1406
      %v1419 = vpack.c.b16 %v1409, %v1408
      %v1420 = vpack.c.b16 %v1411, %v1410
      %v1421 = vpack.c.b16 %v1413, %v1412
      %1430 = vmatprep.subr.bf16.mxu0 0
      %1431 = vmatpush1.bf16.msra.mxu0 %v1414
      %1432 = vmatprep.subr.bf16.mxu0 0
      %1433 = vmatpush1.bf16.msra.mxu0 %v1415
      %1434 = vmatprep.subr.bf16.mxu0 0
      %1435 = vmatpush1.bf16.msra.mxu0 %v1416
      %1436 = vmatprep.subr.bf16.mxu0 0
      %1437 = vmatpush1.bf16.msra.mxu0 %v1417
      %1438 = vmatprep.subr.bf16.mxu0 0
      %1439 = vmatpush1.bf16.msra.mxu0 %v1418
      %1440 = vmatprep.subr.bf16.mxu0 0
      %1441 = vmatpush1.bf16.msra.mxu0 %v1419
      %1442 = vmatprep.subr.bf16.mxu0 0
      %1443 = vmatpush1.bf16.msra.mxu0 %v1420
      %1444 = vmatprep.subr.bf16.mxu0 0
      %1445 = vmatpush1.bf16.msra.mxu0 %v1421
      %1446 = vmatprep.subr.bf16.mxu0 0
      %1447 = vmatpush1.bf16.msra.mxu0 0
      %1448 = vmatprep.subr.bf16.mxu0 0
      %1449 = vmatpush1.bf16.msra.mxu0 0
      %1450 = vmatprep.subr.bf16.mxu0 0
      %1451 = vmatpush1.bf16.msra.mxu0 0
      %1452 = vmatprep.subr.bf16.mxu0 0
      %1453 = vmatpush1.bf16.msra.mxu0 0
      %1454 = vmatprep.subr.bf16.mxu0 0
      %1455 = vmatpush1.bf16.msra.mxu0 0
      %1456 = vmatprep.subr.bf16.mxu0 0
      %1457 = vmatpush1.bf16.msra.mxu0 0
      %1458 = vmatprep.subr.bf16.mxu0 0
      %1459 = vmatpush1.bf16.msra.mxu0 0
      %1460 = vmatprep.subr.bf16.mxu0 0
      %1461 = vmatpush1.bf16.msra.mxu0 0
      %1462 = vmatprep.mubr.bf16.mxu0 0
      %1463 = vmatmul.mubr.bf16.gmra.mrb[0].mxu0 %v1378
      %v1464 = vpop.f32.mrb[0].mxu0
      %v1465 = vadd.f32 0.0, %v1464
      %v1466 = vpop.f32.mrb[0].mxu0
      %v1467 = vpop.f32.mrb[0].mxu0
      %v1468 = vadd.f32 0.0, %v1467
      %v1469 = vpop.f32.mrb[0].mxu0
      %1470 = vmatprep.mubr.bf16.mxu0 0
      %1471 = vmatmul.mubr.bf16.gmra.mrb[0].mxu0 %v1379
      %v1472 = vpop.f32.mrb[0].mxu0
      %v1473 = vadd.f32 0.0, %v1472
      %v1474 = vpop.f32.mrb[0].mxu0
      %v1475 = vpop.f32.mrb[0].mxu0
      %v1476 = vadd.f32 0.0, %v1475
      %v1477 = vpop.f32.mrb[0].mxu0
      %1478 = vdwg.mxu0
      %v1479 = vadd.f32 %v1342, %v1465
      %v1480 = vadd.f32 %v1343, %v1468
      %v1481 = vadd.f32 %v1344, %v1473
      %v1482 = vadd.f32 %v1345, %v1476
      %v1483 = vld [vmem:[%s1211] sm:$0xf]
      %v1484 = vld [vmem:[%s1211 + $0x4] sm:$0x1]
      %v1485 = vld [vmem:[%s1211 + $0x8] sm:$0xf]
      %v1486 = vld [vmem:[%s1211 + $0xc] sm:$0x1]
      %v1487 = vld [vmem:[%s1211 + $0x10] sm:$0xf]
      %v1488 = vld [vmem:[%s1211 + $0x14] sm:$0x1]
      %v1489 = vld [vmem:[%s1211 + $0x18] sm:$0xf]
      %v1490 = vld [vmem:[%s1211 + $0x1c] sm:$0x1]
      %v1492 = vshrl.u32 %v1483, 16
      %v1494 = vrot.slane %v1492, 4
      %v1495 = vshll.u32 %v1483, 16
      %v1497 = vrot.slane %v1495, 5
      %v1498 = vor.u32 %v1494, %v1497
      %v1499 = vrot.slane %v1498, 4
      %v1501 = vshll.u32 %v1484, 16
      %v1503 = vrot.slane %v1501, 5
      %v1504 = vsel %vm561, %v1499, %v1503
      %v1506 = vshrl.u32 %v1485, 16
      %v1508 = vrot.slane %v1506, 4
      %v1509 = vshll.u32 %v1485, 16
      %v1511 = vrot.slane %v1509, 5
      %v1512 = vor.u32 %v1508, %v1511
      %v1513 = vrot.slane %v1512, 4
      %v1515 = vshll.u32 %v1486, 16
      %v1517 = vrot.slane %v1515, 5
      %v1518 = vsel %vm561, %v1513, %v1517
      %v1520 = vshrl.u32 %v1487, 16
      %v1522 = vrot.slane %v1520, 4
      %v1523 = vshll.u32 %v1487, 16
      %v1525 = vrot.slane %v1523, 5
      %v1526 = vor.u32 %v1522, %v1525
      %v1527 = vrot.slane %v1526, 4
      %v1529 = vshll.u32 %v1488, 16
      %v1531 = vrot.slane %v1529, 5
      %v1532 = vsel %vm561, %v1527, %v1531
      %v1534 = vshrl.u32 %v1489, 16
      %v1536 = vrot.slane %v1534, 4
      %v1537 = vshll.u32 %v1489, 16
      %v1539 = vrot.slane %v1537, 5
      %v1540 = vor.u32 %v1536, %v1539
      %v1541 = vrot.slane %v1540, 4
      %v1543 = vshll.u32 %v1490, 16
      %v1545 = vrot.slane %v1543, 5
      %v1546 = vsel %vm561, %v1541, %v1545
      %s1547 = scalar_lea.vmem %s1, 512
      %v1548 = vld [vmem:[%s1547] sm:$0xf]
      %v1549 = vld [vmem:[%s1547 + $0x4] sm:$0xf]
      %v1550 = vld [vmem:[%s1547 + $0x8] sm:$0xf]
      %v1551 = vld [vmem:[%s1547 + $0xc] sm:$0xf]
      %v1552 = vld [vmem:[%s1547 + $0x10] sm:$0xf]
      %v1553 = vld [vmem:[%s1547 + $0x14] sm:$0xf]
      %v1554 = vld [vmem:[%s1547 + $0x18] sm:$0xf]
      %v1555 = vld [vmem:[%s1547 + $0x1c] sm:$0xf]
      %v1556 = vld [vmem:[%s1547 + $0x20] sm:$0xf]
      %v1557 = vld [vmem:[%s1547 + $0x24] sm:$0xf]
      %v1558 = vld [vmem:[%s1547 + $0x28] sm:$0xf]
      %v1559 = vld [vmem:[%s1547 + $0x2c] sm:$0xf]
      %v1560 = vld [vmem:[%s1547 + $0x30] sm:$0xf]
      %v1561 = vld [vmem:[%s1547 + $0x34] sm:$0xf]
      %v1562 = vld [vmem:[%s1547 + $0x38] sm:$0xf]
      %v1563 = vld [vmem:[%s1547 + $0x3c] sm:$0xf]
      %v1564 = vunpack.c.l.b16 %v1504
      %v1565 = vunpack.c.l.b16 %v1518
      %v1566 = vunpack.c.l.b16 %v1532
      %v1567 = vunpack.c.l.b16 %v1546
      %v1568 = vpack.c.b16 %v1565, %v1564
      %v1569 = vpack.c.b16 %v1567, %v1566
      %v1588 = vunpack.c.l.b16 %v1548
      %v1589 = vunpack.c.l.b16 %v1549
      %v1590 = vunpack.c.l.b16 %v1550
      %v1591 = vunpack.c.l.b16 %v1551
      %v1592 = vunpack.c.l.b16 %v1552
      %v1593 = vunpack.c.l.b16 %v1553
      %v1594 = vunpack.c.l.b16 %v1554
      %v1595 = vunpack.c.l.b16 %v1555
      %v1596 = vunpack.c.l.b16 %v1556
      %v1597 = vunpack.c.l.b16 %v1557
      %v1598 = vunpack.c.l.b16 %v1558
      %v1599 = vunpack.c.l.b16 %v1559
      %v1600 = vunpack.c.l.b16 %v1560
      %v1601 = vunpack.c.l.b16 %v1561
      %v1602 = vunpack.c.l.b16 %v1562
      %v1603 = vunpack.c.l.b16 %v1563
      %v1604 = vpack.c.b16 %v1589, %v1588
      %v1605 = vpack.c.b16 %v1591, %v1590
      %v1606 = vpack.c.b16 %v1593, %v1592
      %v1607 = vpack.c.b16 %v1595, %v1594
      %v1608 = vpack.c.b16 %v1597, %v1596
      %v1609 = vpack.c.b16 %v1599, %v1598
      %v1610 = vpack.c.b16 %v1601, %v1600
      %v1611 = vpack.c.b16 %v1603, %v1602
      %1620 = vmatprep.subr.bf16.mxu0 0
      %1621 = vmatpush1.bf16.msra.mxu0 %v1604
      %1622 = vmatprep.subr.bf16.mxu0 0
      %1623 = vmatpush1.bf16.msra.mxu0 %v1605
      %1624 = vmatprep.subr.bf16.mxu0 0
      %1625 = vmatpush1.bf16.msra.mxu0 %v1606
      %1626 = vmatprep.subr.bf16.mxu0 0
      %1627 = vmatpush1.bf16.msra.mxu0 %v1607
      %1628 = vmatprep.subr.bf16.mxu0 0
      %1629 = vmatpush1.bf16.msra.mxu0 %v1608
      %1630 = vmatprep.subr.bf16.mxu0 0
      %1631 = vmatpush1.bf16.msra.mxu0 %v1609
      %1632 = vmatprep.subr.bf16.mxu0 0
      %1633 = vmatpush1.bf16.msra.mxu0 %v1610
      %1634 = vmatprep.subr.bf16.mxu0 0
      %1635 = vmatpush1.bf16.msra.mxu0 %v1611
      %1636 = vmatprep.subr.bf16.mxu0 0
      %1637 = vmatpush1.bf16.msra.mxu0 0
      %1638 = vmatprep.subr.bf16.mxu0 0
      %1639 = vmatpush1.bf16.msra.mxu0 0
      %1640 = vmatprep.subr.bf16.mxu0 0
      %1641 = vmatpush1.bf16.msra.mxu0 0
      %1642 = vmatprep.subr.bf16.mxu0 0
      %1643 = vmatpush1.bf16.msra.mxu0 0
      %1644 = vmatprep.subr.bf16.mxu0 0
      %1645 = vmatpush1.bf16.msra.mxu0 0
      %1646 = vmatprep.subr.bf16.mxu0 0
      %1647 = vmatpush1.bf16.msra.mxu0 0
      %1648 = vmatprep.subr.bf16.mxu0 0
      %1649 = vmatpush1.bf16.msra.mxu0 0
      %1650 = vmatprep.subr.bf16.mxu0 0
      %1651 = vmatpush1.bf16.msra.mxu0 0
      %1652 = vmatprep.mubr.bf16.mxu0 0
      %1653 = vmatmul.mubr.bf16.gmra.mrb[0].mxu0 %v1568
      %v1654 = vpop.f32.mrb[0].mxu0
      %v1655 = vadd.f32 0.0, %v1654
      %v1656 = vpop.f32.mrb[0].mxu0
      %v1657 = vpop.f32.mrb[0].mxu0
      %v1658 = vadd.f32 0.0, %v1657
      %v1659 = vpop.f32.mrb[0].mxu0
      %1660 = vmatprep.mubr.bf16.mxu0 0
      %1661 = vmatmul.mubr.bf16.gmra.mrb[0].mxu0 %v1569
      %v1662 = vpop.f32.mrb[0].mxu0
      %v1663 = vadd.f32 0.0, %v1662
      %v1664 = vpop.f32.mrb[0].mxu0
      %v1665 = vpop.f32.mrb[0].mxu0
      %v1666 = vadd.f32 0.0, %v1665
      %v1667 = vpop.f32.mrb[0].mxu0
      %1668 = vdwg.mxu0
      %v1669 = vadd.f32 %v1479, %v1655
      %v1670 = vadd.f32 %v1480, %v1658
      %v1671 = vadd.f32 %v1481, %v1663
      %v1672 = vadd.f32 %v1482, %v1666
      %v1673 = vld [vmem:[%s272] sm:$0xf]
      %v1674 = vld [vmem:[%s272 + $0x4] sm:$0xf]
      %v1675 = vld [vmem:[%s272 + $0x8] sm:$0xf]
      %v1676 = vld [vmem:[%s272 + $0xc] sm:$0xf]
      %v1677 = vld [vmem:[%s4] sm:$0x3]
      %v1682 = vunpack.c.l.b16 %v1673
      %v1683 = vunpack.c.l.b16 %v1674
      %v1684 = vunpack.c.l.b16 %v1675
      %v1685 = vunpack.c.l.b16 %v1676
      %v1686 = vpack.c.b16 %v1683, %v1682
      %v1687 = vpack.c.b16 %v1685, %v1684
      %vm1688 = vcmask 31744
      %v1690 = vsel %vm1688, %v1686, 0
      %v1693 = vsel %vm1688, %v1687, 0
      %vm1695 = vcmask 1041408
      %v1697 = vsel %vm1695, %v1677, 0
      %1699 = vmatprep.subr.bf16.mxu0 0
      %1700 = vmatpush1.bf16.msra.mxu0 %v1697
      %1701 = vmatprep.subr.bf16.mxu0 0
      %1702 = vmatpush1.bf16.msra.mxu0 0
      %1703 = vmatprep.subr.bf16.mxu0 0
      %1704 = vmatpush1.bf16.msra.mxu0 0
      %1705 = vmatprep.subr.bf16.mxu0 0
      %1706 = vmatpush1.bf16.msra.mxu0 0
      %1707 = vmatprep.subr.bf16.mxu0 0
      %1708 = vmatpush1.bf16.msra.mxu0 0
      %1709 = vmatprep.subr.bf16.mxu0 0
      %1710 = vmatpush1.bf16.msra.mxu0 0
      %1711 = vmatprep.subr.bf16.mxu0 0
      %1712 = vmatpush1.bf16.msra.mxu0 0
      %1713 = vmatprep.subr.bf16.mxu0 0
      %1714 = vmatpush1.bf16.msra.mxu0 0
      %1715 = vmatprep.subr.bf16.mxu0 0
      %1716 = vmatpush1.bf16.msra.mxu0 0
      %1717 = vmatprep.subr.bf16.mxu0 0
      %1718 = vmatpush1.bf16.msra.mxu0 0
      %1719 = vmatprep.subr.bf16.mxu0 0
      %1720 = vmatpush1.bf16.msra.mxu0 0
      %1721 = vmatprep.subr.bf16.mxu0 0
      %1722 = vmatpush1.bf16.msra.mxu0 0
      %1723 = vmatprep.subr.bf16.mxu0 0
      %1724 = vmatpush1.bf16.msra.mxu0 0
      %1725 = vmatprep.subr.bf16.mxu0 0
      %1726 = vmatpush1.bf16.msra.mxu0 0
      %1727 = vmatprep.subr.bf16.mxu0 0
      %1728 = vmatpush1.bf16.msra.mxu0 0
      %1729 = vmatprep.subr.bf16.mxu0 0
      %1730 = vmatpush1.bf16.msra.mxu0 0
      %1731 = vmatprep.mubr.bf16.mxu0 0
      %1732 = vmatmul.mubr.bf16.gmra.mrb[0].mxu0 %v1690
      %v1733 = vpop.f32.mrb[0].mxu0
      %v1734 = vadd.f32 0.0, %v1733
      %v1735 = vpop.f32.mrb[0].mxu0
      %v1736 = vpop.f32.mrb[0].mxu0
      %v1737 = vadd.f32 0.0, %v1736
      %v1738 = vpop.f32.mrb[0].mxu0
      %1739 = vmatprep.mubr.bf16.mxu0 0
      %1740 = vmatmul.mubr.bf16.gmra.mrb[0].mxu0 %v1693
      %v1741 = vpop.f32.mrb[0].mxu0
      %v1742 = vadd.f32 0.0, %v1741
      %v1743 = vpop.f32.mrb[0].mxu0
      %v1744 = vpop.f32.mrb[0].mxu0
      %v1745 = vadd.f32 0.0, %v1744
      %v1746 = vpop.f32.mrb[0].mxu0
      %1747 = vdwg.mxu0
      %v1748 = vadd.f32 %v1669, %v1734
      %v1749 = vadd.f32 %v1670, %v1737
      %v1750 = vadd.f32 %v1671, %v1742
      %v1751 = vadd.f32 %v1672, %v1745
      %v1752 = vld [vmem:[%s2] sm:$0x1]
      %v1754 = vlaneseq
      %v1755 = vshrl.u32 %v1754, 7
      %v1756 = vsub.s32 0, %v1755
      %v1757 = vrot.slane %v1752, %v1756
      %v1759 = vadd.f32 %v1748, %v1757
      %v1760 = vadd.f32 %v1749, %v1757
      %v1761 = vadd.f32 %v1750, %v1757
      %v1762 = vadd.f32 %v1751, %v1757
      %v1763 = vmax.f32 %v1759, 0.0
      %v1764 = vmax.f32 %v1760, 0.0
      %v1765 = vmax.f32 %v1761, 0.0
      %v1766 = vmax.f32 %v1762, 0.0
      %v1767 = vpack.c.bf16 %v1763, %v1763
      %v1768 = vpack.c.bf16 %v1764, %v1764
      %v1769 = vpack.c.bf16 %v1765, %v1765
      %v1770 = vpack.c.bf16 %v1766, %v1766
      %1771 = vst [vmem:[%s282] sm:$0xf] %v1767
      %1772 = vst [vmem:[%s282 + $0x4] sm:$0xf] %v1768
      %1773 = vst [vmem:[%s282 + $0x8] sm:$0xf] %v1769
      %1774 = vst [vmem:[%s282 + $0xc] sm:$0xf] %v1770
      %s1775 = smul.u32 4, %s21
      %p1776 = scmp.lt.s32.totalorder %s20, 1
      %s1777 = scalar_select %p1776, %s20, 1
      %p1778 = scmp.lt.s32.totalorder %s1775, 7
      %s1779 = scalar_select %p1778, %s1775, 7
      %s1780 = smul.addr %s1777, 8
      %s1781 = sadd.s32 %s1779, %s1780
      %s1782 = smul.addr %s1781, 4
      %s1783 = scalar_lea.vmem %s5, %s1782
      // Predicated region
      $region41: #{res_block_forward.3} parent=39 // pred_check
        %p1784 = pneg %p165
      $region42: #{res_block_forward.3} parent=39 // pred_check_branch
        %1786 = sbr.rel (%p1784) target = $region44
      $region43: #{res_block_forward.3} parent=39 // pred_region
        %s1787 = smul.u32 4, %s21
      $region44: #{res_block_forward.3} parent=39 // pred_fallthru
        _
    $region40: #{res_block_forward.3} parent=5 // pred_fallthru
      _
    %p1788 = scmp.le.s32.totalorder 2, %s11
    // Predicated region
    $region45: #{res_block_forward.3} parent=5 // pred_check
      %p1789 = pneg %p1788
    $region46: #{res_block_forward.3} parent=5 // pred_check_branch
      %1791 = sbr.rel (%p1789) target = $region48
    $region47: #{res_block_forward.3} parent=5 // pred_region
      %s1792 = ssub.s32 %s11, 2
      // Predicated region
      $region49: #{res_block_forward.3} parent=47 // pred_check
        %p1793 = pneg %p171
      $region50: #{res_block_forward.3} parent=47 // pred_check_branch
        %1795 = sbr.rel (%p1793) target = $region52
      $region51: #{res_block_forward.3} parent=47 // pred_region
        %s1796 = smul.u32 4, %s23
        %p1797 = scmp.lt.s32.totalorder %s22, 1
        %s1798 = scalar_select %p1797, %s22, 1
        %p1799 = scmp.lt.s32.totalorder %s1796, 7
        %s1800 = scalar_select %p1799, %s1796, 7
        %s1801 = smul.addr %s1798, 8
        %s1802 = sadd.s32 %s1800, %s1801
        %s1803 = smul.addr %s1802, 4
        %s1804 = scalar_lea.vmem %s5, %s1803
      $region52: #{res_block_forward.3} parent=47 // pred_fallthru
        _
    $region48: #{res_block_forward.3} parent=5 // pred_fallthru
      _
  $region6: #{res_block_forward.3} parent=0 // loop_footer
    %s15 = sadd.s32 1, %s11
  $region7: #{res_block_forward.3} parent=0 // loop_footer_branch
    %10 = sbr.rel target = $region3
  $region8: #{res_block_forward.3} parent=0 // loop_exit
    _

</llo_original>
